<compile_context>
chip_gen: v7x
topology: tpu7x:2x2x1
jax: 0.10.0
libtpu: 0.0.40
codegen_flags: <defaults>
</compile_context>

<pallas_src>
import functools

import numpy as np

import jax
import jax.numpy as jnp
from jax.experimental import pallas as pl
from jax.experimental.pallas import tpu as pltpu


# ----------------------------------------------------------------------------
# Pallas kernels
# ----------------------------------------------------------------------------
def _admm_pre_kernel(sk_ref, a1_ref, a2v_ref, a2h_ref, a3_ref, hskp_ref,
                     cty_ref, vmult_ref, rl_ref, rf_ref, cl_ref, cf_ref,
                     u1_ref, u2_ref, vkp_ref, wkp_ref, num_ref, adj_ref,
                     *, mu1, mu2, mu3, tau):
    """Element-wise / stencil work of one ADMM iteration before the FFT solve.

    Image refs are (bc_tile*S0, S1) stacks of padded images.  rl/rf are
    (rows,1) masks that zero the last / first row of every stacked image;
    cl/cf are (1,S1) masks for the last / first column.
    """
    x = sk_ref[...]
    a1 = a1_ref[...]
    a2v = a2v_ref[...]
    a2h = a2h_ref[...]
    a3 = a3_ref[...]
    hs = hskp_ref[...]
    cty = cty_ref[...]
    vmult = vmult_ref[...]
    rl = rl_ref[...]
    rf = rf_ref[...]
    cl = cl_ref[...]
    cf = cf_ref[...]

    inv_mu1 = 1.0 / mu1
    inv_mu2 = 1.0 / mu2
    inv_mu3 = 1.0 / mu3
    rows = x.shape[0]
    ncols = x.shape[1]

    # L_tf(sk): negated forward differences, zero in the last row / column of
    # every image (XLU rolls + multiplicative masks, no MXU).
    lsk1 = (x - pltpu.roll(x, rows - 1, 0)) * rl      # vertical   (rows)
    lsk2 = (x - pltpu.roll(x, ncols - 1, 1)) * cl     # horizontal (cols)

    a1s = a1 * inv_mu1
    a2vs = a2v * inv_mu2
    a2hs = a2h * inv_mu2
    a3s = a3 * inv_mu3

    # soft_2d_gradient2_rgb — isotropic soft-threshold of the gradients.
    vv = lsk1 + a2vs
    hh = lsk2 + a2hs
    mag = jnp.sqrt(vv * vv + hh * hh + 1.11e-14)
    magt = jnp.maximum(mag - tau, 0.0)
    mmult = magt * pl.reciprocal(magt + tau, approx=True)
    u1 = vv * mmult
    u2 = hh * mmult

    # v-update (vmult = 1/(CtC+mu1) precomputed) and w-update (non-negativity).
    vkp = vmult * (a1 + mu1 * hs + cty)
    wkp = jnp.maximum(a3s + x, 0.0)

    # Ltv_tf divergence term and the FFT-free part of the s-update numerator
    # (mu1 * Hadj(vkp - a1/mu1) is added after the XLA rFFT stage).
    tv_a = u1 - a2vs
    tv_b = u2 - a2hs
    ltv = ((tv_a - pltpu.roll(tv_a, 1, 0) * rf) +
           (tv_b - pltpu.roll(tv_b, 1, 1) * cf))
    num = mu3 * (wkp - a3s) + mu2 * ltv

    u1_ref[...] = u1
    u2_ref[...] = u2
    vkp_ref[...] = vkp
    wkp_ref[...] = wkp
    num_ref[...] = num
    adj_ref[...] = vkp - a1s


def _admm_dual_kernel(skp_ref, hsu_ref, vkp_ref, u1_ref, u2_ref, wkp_ref,
                      a1_ref, a2v_ref, a2h_ref, a3_ref, rl_ref, cl_ref,
                      a1o_ref, a2vo_ref, a2ho_ref, a3o_ref,
                      *, mu1, mu2, mu3):
    """Dual-variable (alpha) updates after the FFT-based s-update."""
    s = skp_ref[...]
    rl = rl_ref[...]
    cl = cl_ref[...]
    rows = s.shape[0]
    ncols = s.shape[1]

    lskp1 = (s - pltpu.roll(s, rows - 1, 0)) * rl
    lskp2 = (s - pltpu.roll(s, ncols - 1, 1)) * cl

    a1o_ref[...] = a1_ref[...] + mu1 * (hsu_ref[...] - vkp_ref[...])
    a2vo_ref[...] = a2v_ref[...] + mu2 * (lskp1 - u1_ref[...])
    a2ho_ref[...] = a2h_ref[...] + mu2 * (lskp2 - u2_ref[...])
    a3o_ref[...] = a3_ref[...] + mu3 * (s - wkp_ref[...])


def _normalize_kernel(x_ref, o_ref):
    """Per-batch normalize_image: multiply by 1/max over channels*pixels."""
    x = x_ref[0]
    inv = 1.0 / jnp.maximum(jnp.max(x), 1e-30)
    o_ref[0] = x * inv


# ----------------------------------------------------------------------------
# Host-side constant operators / helpers
# ----------------------------------------------------------------------------
def _laplacian(s0, s1):
    lapl = np.zeros((s0, s1), np.float32)
    lapl[0, 0] = 4.0
    lapl[0, 1] = -1.0
    lapl[1, 0] = -1.0
    lapl[0, -1] = -1.0
    lapl[-1, 0] = -1.0
    return lapl


def _freq_operators_full(h, p0, p1):
    """Full-spectrum H, H*, |H|^2, |L|^2 — used by the pure-JAX reference."""
    h_pad = jnp.pad(h, ((p0, p0), (p1, p1)))
    hf = jnp.fft.fft2(jnp.fft.fftshift(h_pad))
    hconj = jnp.conj(hf)
    hth = jnp.real(hf * hconj).astype(jnp.float32)
    s0, s1 = h_pad.shape
    ltl = jnp.asarray(np.abs(np.fft.fft2(_laplacian(s0, s1))).astype(np.float32))
    return hf, hconj, hth, ltl


def _freq_operators_rfft(h, p0, p1):
    """rfft-sized spectra (all signals are real) for the fused FFT chain."""
    h_pad = jnp.pad(h, ((p0, p0), (p1, p1)))
    hf = jnp.fft.rfft2(jnp.fft.fftshift(h_pad))
    hconj = jnp.conj(hf)
    hth = jnp.real(hf * hconj).astype(jnp.float32)
    s0, s1 = h_pad.shape
    ltl = jnp.asarray(
        np.abs(np.fft.rfft2(_laplacian(s0, s1))).astype(np.float32))
    return hf, hconj, hth, ltl


def _choose_bc_tile(bc, s0, s1, *, n_buffers=32, budget_bytes=24 * 1024 * 1024):
    """Largest batch*channel tile that keeps double-buffered VMEM use within a
    budget safe on all generations (v7x has only 64 MiB) while leaving a grid
    of >= 2 steps for DMA/compute pipeline overlap when possible."""
    img_bytes = s0 * s1 * 4
    max_tile = max(1, budget_bytes // (n_buffers * img_bytes))
    divisors = [t for t in range(1, bc + 1) if bc % t == 0 and t <= max_tile]
    if not divisors:
        return 1
    pipelined = [t for t in divisors if bc // t >= 2]
    return max(pipelined) if pipelined else max(divisors)


# ----------------------------------------------------------------------------
# Forward pass (Pallas + XLA rFFT)
# ----------------------------------------------------------------------------
@functools.partial(jax.jit, static_argnames=("iterations", "mu", "tau"))
def admm_net_forward(inputs, h_psf, iterations=3, mu=1e-4, tau=2e-3):
    """ADMM_Net.forward.  inputs: (B, 3, D0, D1) NCHW f32, h_psf: (D0, D1)."""
    b, c, d0, d1 = inputs.shape
    p0, p1 = d0 // 2, d1 // 2
    s0, s1 = 2 * d0, 2 * d1
    bc = b * c
    f32 = jnp.float32
    mu1 = mu2 = mu3 = float(mu)
    tau_f = float(tau)

    # Frequency-domain operators (rfft-sized) and the s-update multiplier,
    # hoisted out of the iteration loop (mu/tau are static).
    hf_r, hconj_r, hth_r, ltl_r = _freq_operators_rfft(h_psf.astype(f32), p0, p1)
    smult_r = 1.0 / (mu1 * hth_r + mu2 * ltl_r + mu3)

    pad4 = ((0, 0), (0, 0), (p0, p0), (p1, p1))
    y = inputs.astype(f32)
    cty = jnp.pad(y, pad4).reshape(bc * s0, s1)

    # vmult = 1/(CtC + mu1) is identical for every batch*channel element:
    # precompute once and keep it VMEM-resident via a constant index_map.
    ctc2d = jnp.pad(jnp.ones((d0, d1), f32), ((p0, p0), (p1, p1)))
    vmult2d = 1.0 / (ctc2d + mu1)

    bc_tile = _choose_bc_tile(bc, s0, s1)
    n_blocks = bc // bc_tile
    rows = bc_tile * s0
    vmult = jnp.tile(vmult2d, (bc_tile, 1))                 # (rows, s1)

    # Tiny multiplicative 0/1 masks for the roll-based stencils.
    local_row = np.arange(rows) % s0
    col_idx = np.arange(s1)
    rl = jnp.asarray((local_row < s0 - 1).astype(np.float32)).reshape(rows, 1)
    rf = jnp.asarray((local_row >= 1).astype(np.float32)).reshape(rows, 1)
    cl = jnp.asarray((col_idx < s1 - 1).astype(np.float32)).reshape(1, s1)
    cf = jnp.asarray((col_idx >= 1).astype(np.float32)).reshape(1, s1)

    state_spec = pl.BlockSpec((rows, s1), lambda i: (i, 0))
    vmult_spec = pl.BlockSpec((rows, s1), lambda i: (0, 0))   # VMEM-resident
    rmask_spec = pl.BlockSpec((rows, 1), lambda i: (0, 0))
    cmask_spec = pl.BlockSpec((1, s1), lambda i: (0, 0))
    state_shape = jax.ShapeDtypeStruct((bc * s0, s1), f32)

    block_bytes = rows * s1 * 4
    est = 32 * block_bytes                                   # double-buffered streams
    vmem_limit = int(min(56 * 1024 * 1024, max(32 * 1024 * 1024, 2 * est)))
    cparams = pltpu.CompilerParams(dimension_semantics=("parallel",),
                                   vmem_limit_bytes=vmem_limit)

    pre_call = pl.pallas_call(
        functools.partial(_admm_pre_kernel, mu1=mu1, mu2=mu2, mu3=mu3,
                          tau=tau_f),
        out_shape=(state_shape,) * 6,
        grid_spec=pltpu.PrefetchScalarGridSpec(
            num_scalar_prefetch=0,
            grid=(n_blocks,),
            in_specs=[state_spec] * 7 + [vmult_spec, rmask_spec, rmask_spec,
                                         cmask_spec, cmask_spec],
            out_specs=(state_spec,) * 6),
        compiler_params=cparams)

    dual_call = pl.pallas_call(
        functools.partial(_admm_dual_kernel, mu1=mu1, mu2=mu2, mu3=mu3),
        out_shape=(state_shape,) * 4,
        grid_spec=pltpu.PrefetchScalarGridSpec(
            num_scalar_prefetch=0,
            grid=(n_blocks,),
            in_specs=[state_spec] * 10 + [rmask_spec, cmask_spec],
            out_specs=(state_spec,) * 4),
        compiler_params=cparams)

    zeros = jnp.zeros((bc * s0, s1), f32)
    sk, a1, a2v, a2h, a3, hskp = zeros, zeros, zeros, zeros, zeros, zeros

    for _ in range(iterations):
        u1, u2, vkp, wkp, num_partial, adj_in = pre_call(
            sk, a1, a2v, a2h, a3, hskp, cty, vmult, rl, rf, cl, cf)

        # --- frequency-domain s-update (fused XLA rFFTs, no Pallas equiv.) ---
        # TODO(synk): torch.fft.fft2/ifft2 (Hadj, Smult solve, Hfor) have no
        # Pallas TPU lowering; they run as fused XLA rFFT ops between stages.
        num_f = jnp.fft.rfft2(num_partial.reshape(bc, s0, s1))
        adj_f = jnp.fft.rfft2(adj_in.reshape(bc, s0, s1))
        x_f = smult_r * (num_f + mu1 * (hconj_r * adj_f))
        skp = jnp.fft.irfft2(x_f, s=(s0, s1)).astype(f32).reshape(bc * s0, s1)
        hskp_new = jnp.fft.irfft2(hf_r * x_f,
                                  s=(s0, s1)).astype(f32).reshape(bc * s0, s1)

        a1, a2v, a2h, a3 = dual_call(skp, hskp_new, vkp, u1, u2, wkp,
                                     a1, a2v, a2h, a3, rl, cl)
        sk, hskp = skp, hskp_new

    # crop + per-batch normalization (lane-dense layout when possible).
    x_out = sk.reshape(b, c, s0, s1)[:, :, p0:p0 + d0, p1:p1 + d1]
    n_el = c * d0 * d1
    if n_el % 128 == 0:
        x_flat = x_out.reshape(b, n_el // 128, 128)
    else:
        x_flat = x_out.reshape(b, c * d0, d1)
    norm_spec = pl.BlockSpec((1,) + x_flat.shape[1:], lambda i: (i, 0, 0))
    x_norm = pl.pallas_call(
        _normalize_kernel,
        out_shape=jax.ShapeDtypeStruct(x_flat.shape, f32),
        grid_spec=pltpu.PrefetchScalarGridSpec(
            num_scalar_prefetch=0, grid=(b,),
            in_specs=[norm_spec], out_specs=norm_spec),
        compiler_params=pltpu.CompilerParams(dimension_semantics=("parallel",)),
    )(x_flat)
    return x_norm.reshape(b, c, d0, d1)


# ----------------------------------------------------------------------------
# Pure-JAX reference (literal transcription of the PyTorch forward)
# ----------------------------------------------------------------------------
def _reference_forward(inputs, h_psf, iterations=3, mu=1e-4, tau_val=2e-3):
    b, c, d0, d1 = inputs.shape
    p0, p1 = d0 // 2, d1 // 2
    s0, s1 = 2 * d0, 2 * d1
    hf, hconj, hth, ltl = _freq_operators_full(h_psf.astype(jnp.float32), p0, p1)

    pad4 = ((0, 0), (0, 0), (p0, p0), (p1, p1))
    y = inputs.astype(jnp.float32)
    cty = jnp.pad(y, pad4)
    ctc = jnp.pad(jnp.ones_like(y), pad4)

    sk = jnp.zeros_like(cty)
    a1 = jnp.zeros_like(cty)
    a3 = jnp.zeros_like(cty)
    hskp = jnp.zeros_like(cty)
    a2_1 = jnp.zeros((b, c, s0 - 1, s1), jnp.float32)
    a2_2 = jnp.zeros((b, c, s0, s1 - 1), jnp.float32)

    def hadj(x):
        return jnp.real(jnp.fft.ifft2(hconj * jnp.fft.fft2(x)))

    def hfor(x):
        return jnp.real(jnp.fft.ifft2(hf * jnp.fft.fft2(x)))

    def l_tf(a):
        xd = a[:, :, 1:, :] - a[:, :, :-1, :]
        yd = a[:, :, :, 1:] - a[:, :, :, :-1]
        return -xd, -yd

    def ltv(aa, bb):
        ta = jnp.concatenate([aa[:, :, 0:1, :],
                              aa[:, :, 1:, :] - aa[:, :, :-1, :],
                              -aa[:, :, -1:, :]], axis=2)
        tb = jnp.concatenate([bb[:, :, :, 0:1],
                              bb[:, :, :, 1:] - bb[:, :, :, :-1],
                              -bb[:, :, :, -1:]], axis=3)
        return ta + tb

    for _ in range(iterations):
        mu1 = mu2 = mu3 = mu
        tau = tau_val
        smult = 1.0 / (mu1 * hth + mu2 * ltl + mu3)
        vmult = 1.0 / (ctc + mu1)
        lsk1, lsk2 = l_tf(sk)
        v = lsk1 + a2_1 / mu2
        hh = lsk2 + a2_2 / mu2
        vv = jnp.concatenate([v, jnp.zeros((b, c, 1, s1), jnp.float32)], axis=2)
        hhh = jnp.concatenate([hh, jnp.zeros((b, c, s0, 1), jnp.float32)], axis=3)
        mag = jnp.sqrt(vv * vv + hhh * hhh + 1.11e-14)
        magt = jnp.maximum(mag - tau, 0.0)
        mmult = magt / (magt + tau)
        ukp_1 = v * mmult[:, :, :-1, :]
        ukp_2 = hh * mmult[:, :, :, :-1]
        vkp = vmult * (mu1 * (a1 / mu1 + hskp) + cty)
        wkp = jnp.maximum(a3 / mu3 + sk, 0.0)
        skp_num = (mu3 * (wkp - a3 / mu3)
                   + mu1 * hadj(vkp - a1 / mu1)
                   + mu2 * ltv(ukp_1 - a2_1 / mu2, ukp_2 - a2_2 / mu2))
        skp = jnp.real(jnp.fft.ifft2(smult * jnp.fft.fft2(skp_num)))
        hskp_up = hfor(skp)
        a1 = a1 + mu1 * (hskp_up - vkp)
        lskp1, lskp2 = l_tf(skp)
        a2_1 = a2_1 + mu2 * (lskp1 - ukp_1)
        a2_2 = a2_2 + mu2 * (lskp2 - ukp_2)
        a3 = a3 + mu3 * (skp - wkp)
        sk, hskp = skp, hskp_up

    x_out = sk[:, :, p0:p0 + d0, p1:p1 + d1]
    m = jnp.max(x_out.reshape(b, -1), axis=1).reshape(b, 1, 1, 1)
    return x_out / m


# ----------------------------------------------------------------------------
# Demo / self-test
# ----------------------------------------------------------------------------
if __name__ == "__main__":
    B, C = 2, 3            # RGB, as required by soft_2d_gradient2_rgb
    D0, D1 = 8, 64         # sensor dims; padded image is (16, 128) -> lane-dense
    ITER = 3

    key = jax.random.PRNGKey(0)
    kx, kh = jax.random.split(key)
    x = jax.random.uniform(kx, (B, C, D0, D1), dtype=jnp.float32)
    h_psf = jax.random.uniform(kh, (D0, D1), dtype=jnp.float32)
    h_psf = h_psf / jnp.sum(h_psf)            # normalized non-negative PSF

    out = admm_net_forward(x, h_psf, iterations=ITER)
    out = jax.block_until_ready(out)

    ref = _reference_forward(x, h_psf, iterations=ITER)
    assert out.shape == (B, C, D0, D1)
    assert bool(jnp.all(jnp.isfinite(out)))
    rel_err = float(jnp.max(jnp.abs(out - ref)) /
                    (jnp.max(jnp.abs(ref)) + 1e-12))
    assert rel_err < 5e-3, f"mismatch vs reference, rel_err={rel_err}"

    print("KERNEL_OK")
</pallas_src>

<mosaic_0001>
module attributes {stable_mosaic.version = 11 : i64} {
  func.func @_admm_pre_kernel(%arg0: i32, %arg1: memref<48x128xf32, #tpu.memory_space<vmem>>, %arg2: memref<48x128xf32, #tpu.memory_space<vmem>>, %arg3: memref<48x128xf32, #tpu.memory_space<vmem>>, %arg4: memref<48x128xf32, #tpu.memory_space<vmem>>, %arg5: memref<48x128xf32, #tpu.memory_space<vmem>>, %arg6: memref<48x128xf32, #tpu.memory_space<vmem>>, %arg7: memref<48x128xf32, #tpu.memory_space<vmem>>, %arg8: memref<48x128xf32, #tpu.memory_space<vmem>>, %arg9: memref<48x1xf32, #tpu.memory_space<vmem>>, %arg10: memref<48x1xf32, #tpu.memory_space<vmem>>, %arg11: memref<1x128xf32, #tpu.memory_space<vmem>>, %arg12: memref<1x128xf32, #tpu.memory_space<vmem>>, %arg13: memref<48x128xf32, #tpu.memory_space<vmem>>, %arg14: memref<48x128xf32, #tpu.memory_space<vmem>>, %arg15: memref<48x128xf32, #tpu.memory_space<vmem>>, %arg16: memref<48x128xf32, #tpu.memory_space<vmem>>, %arg17: memref<48x128xf32, #tpu.memory_space<vmem>>, %arg18: memref<48x128xf32, #tpu.memory_space<vmem>>) attributes {dimension_semantics = [#tpu.dimension_semantics<parallel>], iteration_bounds = array<i64: 2>, scalar_prefetch = 0 : i64, scratch_operands = 0 : i64, tpu.core_type = #tpu.core_type<tc>, window_params = [{transform_indices = @transform_0, window_bounds = array<i64: 48, 128>}, {transform_indices = @transform_1, window_bounds = array<i64: 48, 128>}, {transform_indices = @transform_2, window_bounds = array<i64: 48, 128>}, {transform_indices = @transform_3, window_bounds = array<i64: 48, 128>}, {transform_indices = @transform_4, window_bounds = array<i64: 48, 128>}, {transform_indices = @transform_5, window_bounds = array<i64: 48, 128>}, {transform_indices = @transform_6, window_bounds = array<i64: 48, 128>}, {pipeline_mode = #tpu.pipeline_mode<synchronous>, transform_indices = @transform_7, window_bounds = array<i64: 48, 128>}, {pipeline_mode = #tpu.pipeline_mode<synchronous>, transform_indices = @transform_8, window_bounds = array<i64: 48, 1>}, {pipeline_mode = #tpu.pipeline_mode<synchronous>, transform_indices = @transform_9, window_bounds = array<i64: 48, 1>}, {pipeline_mode = #tpu.pipeline_mode<synchronous>, transform_indices = @transform_10, window_bounds = array<i64: 1, 128>}, {pipeline_mode = #tpu.pipeline_mode<synchronous>, transform_indices = @transform_11, window_bounds = array<i64: 1, 128>}, {transform_indices = @transform_12, window_bounds = array<i64: 48, 128>}, {transform_indices = @transform_13, window_bounds = array<i64: 48, 128>}, {transform_indices = @transform_14, window_bounds = array<i64: 48, 128>}, {transform_indices = @transform_15, window_bounds = array<i64: 48, 128>}, {transform_indices = @transform_16, window_bounds = array<i64: 48, 128>}, {transform_indices = @transform_17, window_bounds = array<i64: 48, 128>}]} {
    %c0 = arith.constant 0 : index
    %c0_0 = arith.constant 0 : index
    %0 = vector.load %arg1[%c0, %c0_0] : memref<48x128xf32, #tpu.memory_space<vmem>>, vector<48x128xf32>
    %c0_1 = arith.constant 0 : index
    %c0_2 = arith.constant 0 : index
    %1 = vector.load %arg2[%c0_1, %c0_2] : memref<48x128xf32, #tpu.memory_space<vmem>>, vector<48x128xf32>
    %c0_3 = arith.constant 0 : index
    %c0_4 = arith.constant 0 : index
    %2 = vector.load %arg3[%c0_3, %c0_4] : memref<48x128xf32, #tpu.memory_space<vmem>>, vector<48x128xf32>
    %c0_5 = arith.constant 0 : index
    %c0_6 = arith.constant 0 : index
    %3 = vector.load %arg4[%c0_5, %c0_6] : memref<48x128xf32, #tpu.memory_space<vmem>>, vector<48x128xf32>
    %c0_7 = arith.constant 0 : index
    %c0_8 = arith.constant 0 : index
    %4 = vector.load %arg5[%c0_7, %c0_8] : memref<48x128xf32, #tpu.memory_space<vmem>>, vector<48x128xf32>
    %c0_9 = arith.constant 0 : index
    %c0_10 = arith.constant 0 : index
    %5 = vector.load %arg6[%c0_9, %c0_10] : memref<48x128xf32, #tpu.memory_space<vmem>>, vector<48x128xf32>
    %c0_11 = arith.constant 0 : index
    %c0_12 = arith.constant 0 : index
    %6 = vector.load %arg7[%c0_11, %c0_12] : memref<48x128xf32, #tpu.memory_space<vmem>>, vector<48x128xf32>
    %c0_13 = arith.constant 0 : index
    %c0_14 = arith.constant 0 : index
    %7 = vector.load %arg8[%c0_13, %c0_14] : memref<48x128xf32, #tpu.memory_space<vmem>>, vector<48x128xf32>
    %c0_15 = arith.constant 0 : index
    %c0_16 = arith.constant 0 : index
    %8 = vector.load %arg9[%c0_15, %c0_16] : memref<48x1xf32, #tpu.memory_space<vmem>>, vector<48x1xf32>
    %c0_17 = arith.constant 0 : index
    %c0_18 = arith.constant 0 : index
    %9 = vector.load %arg10[%c0_17, %c0_18] : memref<48x1xf32, #tpu.memory_space<vmem>>, vector<48x1xf32>
    %c0_19 = arith.constant 0 : index
    %c0_20 = arith.constant 0 : index
    %10 = vector.load %arg11[%c0_19, %c0_20] : memref<1x128xf32, #tpu.memory_space<vmem>>, vector<1x128xf32>
    %c0_21 = arith.constant 0 : index
    %c0_22 = arith.constant 0 : index
    %11 = vector.load %arg12[%c0_21, %c0_22] : memref<1x128xf32, #tpu.memory_space<vmem>>, vector<1x128xf32>
    %c47_i32 = arith.constant 47 : i32
    %12 = tpu.dynamic_rotate %0 by %c47_i32 dim 0 : vector<48x128xf32>, i32 -> vector<48x128xf32>
    %13 = arith.subf %0, %12 : vector<48x128xf32>
    %14 = vector.broadcast %8 : vector<48x1xf32> to vector<48x128xf32>
    %15 = arith.mulf %13, %14 : vector<48x128xf32>
    %c127_i32 = arith.constant 127 : i32
    %16 = tpu.dynamic_rotate %0 by %c127_i32 dim 1 : vector<48x128xf32>, i32 -> vector<48x128xf32>
    %17 = arith.subf %0, %16 : vector<48x128xf32>
    %18 = vector.broadcast %10 : vector<1x128xf32> to vector<48x128xf32>
    %19 = arith.mulf %17, %18 : vector<48x128xf32>
    %cst = arith.constant 1.000000e+04 : f32
    %20 = vector.broadcast %cst : f32 to vector<48x128xf32>
    %21 = arith.mulf %1, %20 : vector<48x128xf32>
    %cst_23 = arith.constant 1.000000e+04 : f32
    %22 = vector.broadcast %cst_23 : f32 to vector<48x128xf32>
    %23 = arith.mulf %2, %22 : vector<48x128xf32>
    %cst_24 = arith.constant 1.000000e+04 : f32
    %24 = vector.broadcast %cst_24 : f32 to vector<48x128xf32>
    %25 = arith.mulf %3, %24 : vector<48x128xf32>
    %cst_25 = arith.constant 1.000000e+04 : f32
    %26 = vector.broadcast %cst_25 : f32 to vector<48x128xf32>
    %27 = arith.mulf %4, %26 : vector<48x128xf32>
    %28 = arith.addf %15, %23 : vector<48x128xf32>
    %29 = arith.addf %19, %25 : vector<48x128xf32>
    %30 = arith.mulf %28, %28 : vector<48x128xf32>
    %31 = arith.mulf %29, %29 : vector<48x128xf32>
    %32 = arith.addf %30, %31 : vector<48x128xf32>
    %cst_26 = arith.constant 1.110000e-14 : f32
    %33 = vector.broadcast %cst_26 : f32 to vector<48x128xf32>
    %34 = arith.addf %32, %33 : vector<48x128xf32>
    %35 = math.sqrt %34 : vector<48x128xf32>
    %cst_27 = arith.constant 2.000000e-03 : f32
    %36 = vector.broadcast %cst_27 : f32 to vector<48x128xf32>
    %37 = arith.subf %35, %36 : vector<48x128xf32>
    %cst_28 = arith.constant 0.000000e+00 : f32
    %38 = vector.broadcast %cst_28 : f32 to vector<48x128xf32>
    %39 = arith.maximumf %37, %38 : vector<48x128xf32>
    %cst_29 = arith.constant 2.000000e-03 : f32
    %40 = vector.broadcast %cst_29 : f32 to vector<48x128xf32>
    %41 = arith.addf %39, %40 : vector<48x128xf32>
    %42 = tpu.reciprocal %41 {approx = true} : vector<48x128xf32> -> vector<48x128xf32>
    %43 = arith.mulf %39, %42 : vector<48x128xf32>
    %44 = arith.mulf %28, %43 : vector<48x128xf32>
    %45 = arith.mulf %29, %43 : vector<48x128xf32>
    %cst_30 = arith.constant 9.99999974E-5 : f32
    %46 = vector.broadcast %cst_30 : f32 to vector<48x128xf32>
    %47 = arith.mulf %46, %5 : vector<48x128xf32>
    %48 = arith.addf %1, %47 : vector<48x128xf32>
    %49 = arith.addf %48, %6 : vector<48x128xf32>
    %50 = arith.mulf %7, %49 : vector<48x128xf32>
    %51 = arith.addf %27, %0 : vector<48x128xf32>
    %cst_31 = arith.constant 0.000000e+00 : f32
    %52 = vector.broadcast %cst_31 : f32 to vector<48x128xf32>
    %53 = arith.maximumf %51, %52 : vector<48x128xf32>
    %54 = arith.subf %44, %23 : vector<48x128xf32>
    %55 = arith.subf %45, %25 : vector<48x128xf32>
    %c1_i32 = arith.constant 1 : i32
    %56 = tpu.dynamic_rotate %54 by %c1_i32 dim 0 : vector<48x128xf32>, i32 -> vector<48x128xf32>
    %57 = vector.broadcast %9 : vector<48x1xf32> to vector<48x128xf32>
    %58 = arith.mulf %56, %57 : vector<48x128xf32>
    %59 = arith.subf %54, %58 : vector<48x128xf32>
    %c1_i32_32 = arith.constant 1 : i32
    %60 = tpu.dynamic_rotate %55 by %c1_i32_32 dim 1 : vector<48x128xf32>, i32 -> vector<48x128xf32>
    %61 = vector.broadcast %11 : vector<1x128xf32> to vector<48x128xf32>
    %62 = arith.mulf %60, %61 : vector<48x128xf32>
    %63 = arith.subf %55, %62 : vector<48x128xf32>
    %64 = arith.addf %59, %63 : vector<48x128xf32>
    %65 = arith.subf %53, %27 : vector<48x128xf32>
    %cst_33 = arith.constant 9.99999974E-5 : f32
    %66 = vector.broadcast %cst_33 : f32 to vector<48x128xf32>
    %67 = arith.mulf %66, %65 : vector<48x128xf32>
    %cst_34 = arith.constant 9.99999974E-5 : f32
    %68 = vector.broadcast %cst_34 : f32 to vector<48x128xf32>
    %69 = arith.mulf %68, %64 : vector<48x128xf32>
    %70 = arith.addf %67, %69 : vector<48x128xf32>
    %c0_35 = arith.constant 0 : index
    %c0_36 = arith.constant 0 : index
    %71 = vector.load %arg13[%c0_35, %c0_36] : memref<48x128xf32, #tpu.memory_space<vmem>>, vector<48x128xf32>
    tpu.vector_store %arg13[%c0_35, %c0_36], %44 {strides = array<i32>} : memref<48x128xf32, #tpu.memory_space<vmem>>, vector<48x128xf32>,
    %c0_37 = arith.constant 0 : index
    %c0_38 = arith.constant 0 : index
    %72 = vector.load %arg14[%c0_37, %c0_38] : memref<48x128xf32, #tpu.memory_space<vmem>>, vector<48x128xf32>
    tpu.vector_store %arg14[%c0_37, %c0_38], %45 {strides = array<i32>} : memref<48x128xf32, #tpu.memory_space<vmem>>, vector<48x128xf32>,
    %c0_39 = arith.constant 0 : index
    %c0_40 = arith.constant 0 : index
    %73 = vector.load %arg15[%c0_39, %c0_40] : memref<48x128xf32, #tpu.memory_space<vmem>>, vector<48x128xf32>
    tpu.vector_store %arg15[%c0_39, %c0_40], %50 {strides = array<i32>} : memref<48x128xf32, #tpu.memory_space<vmem>>, vector<48x128xf32>,
    %c0_41 = arith.constant 0 : index
    %c0_42 = arith.constant 0 : index
    %74 = vector.load %arg16[%c0_41, %c0_42] : memref<48x128xf32, #tpu.memory_space<vmem>>, vector<48x128xf32>
    tpu.vector_store %arg16[%c0_41, %c0_42], %53 {strides = array<i32>} : memref<48x128xf32, #tpu.memory_space<vmem>>, vector<48x128xf32>,
    %c0_43 = arith.constant 0 : index
    %c0_44 = arith.constant 0 : index
    %75 = vector.load %arg17[%c0_43, %c0_44] : memref<48x128xf32, #tpu.memory_space<vmem>>, vector<48x128xf32>
    tpu.vector_store %arg17[%c0_43, %c0_44], %70 {strides = array<i32>} : memref<48x128xf32, #tpu.memory_space<vmem>>, vector<48x128xf32>,
    %76 = arith.subf %50, %21 : vector<48x128xf32>
    %c0_45 = arith.constant 0 : index
    %c0_46 = arith.constant 0 : index
    %77 = vector.load %arg18[%c0_45, %c0_46] : memref<48x128xf32, #tpu.memory_space<vmem>>, vector<48x128xf32>
    tpu.vector_store %arg18[%c0_45, %c0_46], %76 {strides = array<i32>} : memref<48x128xf32, #tpu.memory_space<vmem>>, vector<48x128xf32>,
    return
  }
  func.func @transform_0(%arg0: i32) -> (i32, i32) {
    %c0_i32 = arith.constant 0 : i32
    %c0_i32_0 = arith.constant 0 : i32
    return %arg0, %c0_i32 : i32, i32
  }
  func.func @transform_1(%arg0: i32) -> (i32, i32) {
    %c0_i32 = arith.constant 0 : i32
    %c0_i32_0 = arith.constant 0 : i32
    return %arg0, %c0_i32 : i32, i32
  }
  func.func @transform_2(%arg0: i32) -> (i32, i32) {
    %c0_i32 = arith.constant 0 : i32
    %c0_i32_0 = arith.constant 0 : i32
    return %arg0, %c0_i32 : i32, i32
  }
  func.func @transform_3(%arg0: i32) -> (i32, i32) {
    %c0_i32 = arith.constant 0 : i32
    %c0_i32_0 = arith.constant 0 : i32
    return %arg0, %c0_i32 : i32, i32
  }
  func.func @transform_4(%arg0: i32) -> (i32, i32) {
    %c0_i32 = arith.constant 0 : i32
    %c0_i32_0 = arith.constant 0 : i32
    return %arg0, %c0_i32 : i32, i32
  }
  func.func @transform_5(%arg0: i32) -> (i32, i32) {
    %c0_i32 = arith.constant 0 : i32
    %c0_i32_0 = arith.constant 0 : i32
    return %arg0, %c0_i32 : i32, i32
  }
  func.func @transform_6(%arg0: i32) -> (i32, i32) {
    %c0_i32 = arith.constant 0 : i32
    %c0_i32_0 = arith.constant 0 : i32
    return %arg0, %c0_i32 : i32, i32
  }
  func.func @transform_7(%arg0: i32) -> (i32, i32) {
    %c0_i32 = arith.constant 0 : i32
    %c0_i32_0 = arith.constant 0 : i32
    %c0_i32_1 = arith.constant 0 : i32
    return %c0_i32, %c0_i32_0 : i32, i32
  }
  func.func @transform_8(%arg0: i32) -> (i32, i32) {
    %c0_i32 = arith.constant 0 : i32
    %c0_i32_0 = arith.constant 0 : i32
    %c0_i32_1 = arith.constant 0 : i32
    return %c0_i32, %c0_i32_0 : i32, i32
  }
  func.func @transform_9(%arg0: i32) -> (i32, i32) {
    %c0_i32 = arith.constant 0 : i32
    %c0_i32_0 = arith.constant 0 : i32
    %c0_i32_1 = arith.constant 0 : i32
    return %c0_i32, %c0_i32_0 : i32, i32
  }
  func.func @transform_10(%arg0: i32) -> (i32, i32) {
    %c0_i32 = arith.constant 0 : i32
    %c0_i32_0 = arith.constant 0 : i32
    %c0_i32_1 = arith.constant 0 : i32
    return %c0_i32, %c0_i32_0 : i32, i32
  }
  func.func @transform_11(%arg0: i32) -> (i32, i32) {
    %c0_i32 = arith.constant 0 : i32
    %c0_i32_0 = arith.constant 0 : i32
    %c0_i32_1 = arith.constant 0 : i32
    return %c0_i32, %c0_i32_0 : i32, i32
  }
  func.func @transform_12(%arg0: i32) -> (i32, i32) {
    %c0_i32 = arith.constant 0 : i32
    %c0_i32_0 = arith.constant 0 : i32
    return %arg0, %c0_i32 : i32, i32
  }
  func.func @transform_13(%arg0: i32) -> (i32, i32) {
    %c0_i32 = arith.constant 0 : i32
    %c0_i32_0 = arith.constant 0 : i32
    return %arg0, %c0_i32 : i32, i32
  }
  func.func @transform_14(%arg0: i32) -> (i32, i32) {
    %c0_i32 = arith.constant 0 : i32
    %c0_i32_0 = arith.constant 0 : i32
    return %arg0, %c0_i32 : i32, i32
  }
  func.func @transform_15(%arg0: i32) -> (i32, i32) {
    %c0_i32 = arith.constant 0 : i32
    %c0_i32_0 = arith.constant 0 : i32
    return %arg0, %c0_i32 : i32, i32
  }
  func.func @transform_16(%arg0: i32) -> (i32, i32) {
    %c0_i32 = arith.constant 0 : i32
    %c0_i32_0 = arith.constant 0 : i32
    return %arg0, %c0_i32 : i32, i32
  }
  func.func @transform_17(%arg0: i32) -> (i32, i32) {
    %c0_i32 = arith.constant 0 : i32
    %c0_i32_0 = arith.constant 0 : i32
    return %arg0, %c0_i32 : i32, i32
  }
}

module attributes {stable_mosaic.version = 11 : i64} {
  func.func @_admm_dual_kernel(%arg0: i32, %arg1: memref<48x128xf32, #tpu.memory_space<vmem>>, %arg2: memref<48x128xf32, #tpu.memory_space<vmem>>, %arg3: memref<48x128xf32, #tpu.memory_space<vmem>>, %arg4: memref<48x128xf32, #tpu.memory_space<vmem>>, %arg5: memref<48x128xf32, #tpu.memory_space<vmem>>, %arg6: memref<48x128xf32, #tpu.memory_space<vmem>>, %arg7: memref<48x128xf32, #tpu.memory_space<vmem>>, %arg8: memref<48x128xf32, #tpu.memory_space<vmem>>, %arg9: memref<48x128xf32, #tpu.memory_space<vmem>>, %arg10: memref<48x128xf32, #tpu.memory_space<vmem>>, %arg11: memref<48x1xf32, #tpu.memory_space<vmem>>, %arg12: memref<1x128xf32, #tpu.memory_space<vmem>>, %arg13: memref<48x128xf32, #tpu.memory_space<vmem>>, %arg14: memref<48x128xf32, #tpu.memory_space<vmem>>, %arg15: memref<48x128xf32, #tpu.memory_space<vmem>>, %arg16: memref<48x128xf32, #tpu.memory_space<vmem>>) attributes {dimension_semantics = [#tpu.dimension_semantics<parallel>], iteration_bounds = array<i64: 2>, scalar_prefetch = 0 : i64, scratch_operands = 0 : i64, tpu.core_type = #tpu.core_type<tc>, window_params = [{transform_indices = @transform_0, window_bounds = array<i64: 48, 128>}, {transform_indices = @transform_1, window_bounds = array<i64: 48, 128>}, {transform_indices = @transform_2, window_bounds = array<i64: 48, 128>}, {transform_indices = @transform_3, window_bounds = array<i64: 48, 128>}, {transform_indices = @transform_4, window_bounds = array<i64: 48, 128>}, {transform_indices = @transform_5, window_bounds = array<i64: 48, 128>}, {transform_indices = @transform_6, window_bounds = array<i64: 48, 128>}, {transform_indices = @transform_7, window_bounds = array<i64: 48, 128>}, {transform_indices = @transform_8, window_bounds = array<i64: 48, 128>}, {transform_indices = @transform_9, window_bounds = array<i64: 48, 128>}, {pipeline_mode = #tpu.pipeline_mode<synchronous>, transform_indices = @transform_10, window_bounds = array<i64: 48, 1>}, {pipeline_mode = #tpu.pipeline_mode<synchronous>, transform_indices = @transform_11, window_bounds = array<i64: 1, 128>}, {transform_indices = @transform_12, window_bounds = array<i64: 48, 128>}, {transform_indices = @transform_13, window_bounds = array<i64: 48, 128>}, {transform_indices = @transform_14, window_bounds = array<i64: 48, 128>}, {transform_indices = @transform_15, window_bounds = array<i64: 48, 128>}]} {
    %c0 = arith.constant 0 : index
    %c0_0 = arith.constant 0 : index
    %0 = vector.load %arg1[%c0, %c0_0] : memref<48x128xf32, #tpu.memory_space<vmem>>, vector<48x128xf32>
    %c0_1 = arith.constant 0 : index
    %c0_2 = arith.constant 0 : index
    %1 = vector.load %arg11[%c0_1, %c0_2] : memref<48x1xf32, #tpu.memory_space<vmem>>, vector<48x1xf32>
    %c0_3 = arith.constant 0 : index
    %c0_4 = arith.constant 0 : index
    %2 = vector.load %arg12[%c0_3, %c0_4] : memref<1x128xf32, #tpu.memory_space<vmem>>, vector<1x128xf32>
    %c47_i32 = arith.constant 47 : i32
    %3 = tpu.dynamic_rotate %0 by %c47_i32 dim 0 : vector<48x128xf32>, i32 -> vector<48x128xf32>
    %4 = arith.subf %0, %3 : vector<48x128xf32>
    %5 = vector.broadcast %1 : vector<48x1xf32> to vector<48x128xf32>
    %6 = arith.mulf %4, %5 : vector<48x128xf32>
    %c127_i32 = arith.constant 127 : i32
    %7 = tpu.dynamic_rotate %0 by %c127_i32 dim 1 : vector<48x128xf32>, i32 -> vector<48x128xf32>
    %8 = arith.subf %0, %7 : vector<48x128xf32>
    %9 = vector.broadcast %2 : vector<1x128xf32> to vector<48x128xf32>
    %10 = arith.mulf %8, %9 : vector<48x128xf32>
    %c0_5 = arith.constant 0 : index
    %c0_6 = arith.constant 0 : index
    %11 = vector.load %arg7[%c0_5, %c0_6] : memref<48x128xf32, #tpu.memory_space<vmem>>, vector<48x128xf32>
    %c0_7 = arith.constant 0 : index
    %c0_8 = arith.constant 0 : index
    %12 = vector.load %arg2[%c0_7, %c0_8] : memref<48x128xf32, #tpu.memory_space<vmem>>, vector<48x128xf32>
    %c0_9 = arith.constant 0 : index
    %c0_10 = arith.constant 0 : index
    %13 = vector.load %arg3[%c0_9, %c0_10] : memref<48x128xf32, #tpu.memory_space<vmem>>, vector<48x128xf32>
    %14 = arith.subf %12, %13 : vector<48x128xf32>
    %cst = arith.constant 9.99999974E-5 : f32
    %15 = vector.broadcast %cst : f32 to vector<48x128xf32>
    %16 = arith.mulf %15, %14 : vector<48x128xf32>
    %17 = arith.addf %11, %16 : vector<48x128xf32>
    %c0_11 = arith.constant 0 : index
    %c0_12 = arith.constant 0 : index
    %18 = vector.load %arg13[%c0_11, %c0_12] : memref<48x128xf32, #tpu.memory_space<vmem>>, vector<48x128xf32>
    tpu.vector_store %arg13[%c0_11, %c0_12], %17 {strides = array<i32>} : memref<48x128xf32, #tpu.memory_space<vmem>>, vector<48x128xf32>,
    %c0_13 = arith.constant 0 : index
    %c0_14 = arith.constant 0 : index
    %19 = vector.load %arg8[%c0_13, %c0_14] : memref<48x128xf32, #tpu.memory_space<vmem>>, vector<48x128xf32>
    %c0_15 = arith.constant 0 : index
    %c0_16 = arith.constant 0 : index
    %20 = vector.load %arg4[%c0_15, %c0_16] : memref<48x128xf32, #tpu.memory_space<vmem>>, vector<48x128xf32>
    %21 = arith.subf %6, %20 : vector<48x128xf32>
    %cst_17 = arith.constant 9.99999974E-5 : f32
    %22 = vector.broadcast %cst_17 : f32 to vector<48x128xf32>
    %23 = arith.mulf %22, %21 : vector<48x128xf32>
    %24 = arith.addf %19, %23 : vector<48x128xf32>
    %c0_18 = arith.constant 0 : index
    %c0_19 = arith.constant 0 : index
    %25 = vector.load %arg14[%c0_18, %c0_19] : memref<48x128xf32, #tpu.memory_space<vmem>>, vector<48x128xf32>
    tpu.vector_store %arg14[%c0_18, %c0_19], %24 {strides = array<i32>} : memref<48x128xf32, #tpu.memory_space<vmem>>, vector<48x128xf32>,
    %c0_20 = arith.constant 0 : index
    %c0_21 = arith.constant 0 : index
    %26 = vector.load %arg9[%c0_20, %c0_21] : memref<48x128xf32, #tpu.memory_space<vmem>>, vector<48x128xf32>
    %c0_22 = arith.constant 0 : index
    %c0_23 = arith.constant 0 : index
    %27 = vector.load %arg5[%c0_22, %c0_23] : memref<48x128xf32, #tpu.memory_space<vmem>>, vector<48x128xf32>
    %28 = arith.subf %10, %27 : vector<48x128xf32>
    %cst_24 = arith.constant 9.99999974E-5 : f32
    %29 = vector.broadcast %cst_24 : f32 to vector<48x128xf32>
    %30 = arith.mulf %29, %28 : vector<48x128xf32>
    %31 = arith.addf %26, %30 : vector<48x128xf32>
    %c0_25 = arith.constant 0 : index
    %c0_26 = arith.constant 0 : index
    %32 = vector.load %arg15[%c0_25, %c0_26] : memref<48x128xf32, #tpu.memory_space<vmem>>, vector<48x128xf32>
    tpu.vector_store %arg15[%c0_25, %c0_26], %31 {strides = array<i32>} : memref<48x128xf32, #tpu.memory_space<vmem>>, vector<48x128xf32>,
    %c0_27 = arith.constant 0 : index
    %c0_28 = arith.constant 0 : index
    %33 = vector.load %arg10[%c0_27, %c0_28] : memref<48x128xf32, #tpu.memory_space<vmem>>, vector<48x128xf32>
    %c0_29 = arith.constant 0 : index
    %c0_30 = arith.constant 0 : index
    %34 = vector.load %arg6[%c0_29, %c0_30] : memref<48x128xf32, #tpu.memory_space<vmem>>, vector<48x128xf32>
    %35 = arith.subf %0, %34 : vector<48x128xf32>
    %cst_31 = arith.constant 9.99999974E-5 : f32
    %36 = vector.broadcast %cst_31 : f32 to vector<48x128xf32>
    %37 = arith.mulf %36, %35 : vector<48x128xf32>
    %38 = arith.addf %33, %37 : vector<48x128xf32>
    %c0_32 = arith.constant 0 : index
    %c0_33 = arith.constant 0 : index
    %39 = vector.load %arg16[%c0_32, %c0_33] : memref<48x128xf32, #tpu.memory_space<vmem>>, vector<48x128xf32>
    tpu.vector_store %arg16[%c0_32, %c0_33], %38 {strides = array<i32>} : memref<48x128xf32, #tpu.memory_space<vmem>>, vector<48x128xf32>,
    return
  }
  func.func @transform_0(%arg0: i32) -> (i32, i32) {
    %c0_i32 = arith.constant 0 : i32
    %c0_i32_0 = arith.constant 0 : i32
    return %arg0, %c0_i32 : i32, i32
  }
  func.func @transform_1(%arg0: i32) -> (i32, i32) {
    %c0_i32 = arith.constant 0 : i32
    %c0_i32_0 = arith.constant 0 : i32
    return %arg0, %c0_i32 : i32, i32
  }
  func.func @transform_2(%arg0: i32) -> (i32, i32) {
    %c0_i32 = arith.constant 0 : i32
    %c0_i32_0 = arith.constant 0 : i32
    return %arg0, %c0_i32 : i32, i32
  }
  func.func @transform_3(%arg0: i32) -> (i32, i32) {
    %c0_i32 = arith.constant 0 : i32
    %c0_i32_0 = arith.constant 0 : i32
    return %arg0, %c0_i32 : i32, i32
  }
  func.func @transform_4(%arg0: i32) -> (i32, i32) {
    %c0_i32 = arith.constant 0 : i32
    %c0_i32_0 = arith.constant 0 : i32
    return %arg0, %c0_i32 : i32, i32
  }
  func.func @transform_5(%arg0: i32) -> (i32, i32) {
    %c0_i32 = arith.constant 0 : i32
    %c0_i32_0 = arith.constant 0 : i32
    return %arg0, %c0_i32 : i32, i32
  }
  func.func @transform_6(%arg0: i32) -> (i32, i32) {
    %c0_i32 = arith.constant 0 : i32
    %c0_i32_0 = arith.constant 0 : i32
    return %arg0, %c0_i32 : i32, i32
  }
  func.func @transform_7(%arg0: i32) -> (i32, i32) {
    %c0_i32 = arith.constant 0 : i32
    %c0_i32_0 = arith.constant 0 : i32
    return %arg0, %c0_i32 : i32, i32
  }
  func.func @transform_8(%arg0: i32) -> (i32, i32) {
    %c0_i32 = arith.constant 0 : i32
    %c0_i32_0 = arith.constant 0 : i32
    return %arg0, %c0_i32 : i32, i32
  }
  func.func @transform_9(%arg0: i32) -> (i32, i32) {
    %c0_i32 = arith.constant 0 : i32
    %c0_i32_0 = arith.constant 0 : i32
    return %arg0, %c0_i32 : i32, i32
  }
  func.func @transform_10(%arg0: i32) -> (i32, i32) {
    %c0_i32 = arith.constant 0 : i32
    %c0_i32_0 = arith.constant 0 : i32
    %c0_i32_1 = arith.constant 0 : i32
    return %c0_i32, %c0_i32_0 : i32, i32
  }
  func.func @transform_11(%arg0: i32) -> (i32, i32) {
    %c0_i32 = arith.constant 0 : i32
    %c0_i32_0 = arith.constant 0 : i32
    %c0_i32_1 = arith.constant 0 : i32
    return %c0_i32, %c0_i32_0 : i32, i32
  }
  func.func @transform_12(%arg0: i32) -> (i32, i32) {
    %c0_i32 = arith.constant 0 : i32
    %c0_i32_0 = arith.constant 0 : i32
    return %arg0, %c0_i32 : i32, i32
  }
  func.func @transform_13(%arg0: i32) -> (i32, i32) {
    %c0_i32 = arith.constant 0 : i32
    %c0_i32_0 = arith.constant 0 : i32
    return %arg0, %c0_i32 : i32, i32
  }
  func.func @transform_14(%arg0: i32) -> (i32, i32) {
    %c0_i32 = arith.constant 0 : i32
    %c0_i32_0 = arith.constant 0 : i32
    return %arg0, %c0_i32 : i32, i32
  }
  func.func @transform_15(%arg0: i32) -> (i32, i32) {
    %c0_i32 = arith.constant 0 : i32
    %c0_i32_0 = arith.constant 0 : i32
    return %arg0, %c0_i32 : i32, i32
  }
}

module attributes {stable_mosaic.version = 11 : i64} {
  func.func @_admm_pre_kernel(%arg0: i32, %arg1: memref<48x128xf32, #tpu.memory_space<vmem>>, %arg2: memref<48x128xf32, #tpu.memory_space<vmem>>, %arg3: memref<48x128xf32, #tpu.memory_space<vmem>>, %arg4: memref<48x128xf32, #tpu.memory_space<vmem>>, %arg5: memref<48x128xf32, #tpu.memory_space<vmem>>, %arg6: memref<48x128xf32, #tpu.memory_space<vmem>>, %arg7: memref<48x128xf32, #tpu.memory_space<vmem>>, %arg8: memref<48x128xf32, #tpu.memory_space<vmem>>, %arg9: memref<48x1xf32, #tpu.memory_space<vmem>>, %arg10: memref<48x1xf32, #tpu.memory_space<vmem>>, %arg11: memref<1x128xf32, #tpu.memory_space<vmem>>, %arg12: memref<1x128xf32, #tpu.memory_space<vmem>>, %arg13: memref<48x128xf32, #tpu.memory_space<vmem>>, %arg14: memref<48x128xf32, #tpu.memory_space<vmem>>, %arg15: memref<48x128xf32, #tpu.memory_space<vmem>>, %arg16: memref<48x128xf32, #tpu.memory_space<vmem>>, %arg17: memref<48x128xf32, #tpu.memory_space<vmem>>, %arg18: memref<48x128xf32, #tpu.memory_space<vmem>>) attributes {dimension_semantics = [#tpu.dimension_semantics<parallel>], iteration_bounds = array<i64: 2>, scalar_prefetch = 0 : i64, scratch_operands = 0 : i64, tpu.core_type = #tpu.core_type<tc>, window_params = [{transform_indices = @transform_0, window_bounds = array<i64: 48, 128>}, {transform_indices = @transform_1, window_bounds = array<i64: 48, 128>}, {transform_indices = @transform_2, window_bounds = array<i64: 48, 128>}, {transform_indices = @transform_3, window_bounds = array<i64: 48, 128>}, {transform_indices = @transform_4, window_bounds = array<i64: 48, 128>}, {transform_indices = @transform_5, window_bounds = array<i64: 48, 128>}, {transform_indices = @transform_6, window_bounds = array<i64: 48, 128>}, {pipeline_mode = #tpu.pipeline_mode<synchronous>, transform_indices = @transform_7, window_bounds = array<i64: 48, 128>}, {pipeline_mode = #tpu.pipeline_mode<synchronous>, transform_indices = @transform_8, window_bounds = array<i64: 48, 1>}, {pipeline_mode = #tpu.pipeline_mode<synchronous>, transform_indices = @transform_9, window_bounds = array<i64: 48, 1>}, {pipeline_mode = #tpu.pipeline_mode<synchronous>, transform_indices = @transform_10, window_bounds = array<i64: 1, 128>}, {pipeline_mode = #tpu.pipeline_mode<synchronous>, transform_indices = @transform_11, window_bounds = array<i64: 1, 128>}, {transform_indices = @transform_12, window_bounds = array<i64: 48, 128>}, {transform_indices = @transform_13, window_bounds = array<i64: 48, 128>}, {transform_indices = @transform_14, window_bounds = array<i64: 48, 128>}, {transform_indices = @transform_15, window_bounds = array<i64: 48, 128>}, {transform_indices = @transform_16, window_bounds = array<i64: 48, 128>}, {transform_indices = @transform_17, window_bounds = array<i64: 48, 128>}]} {
    %c0 = arith.constant 0 : index
    %c0_0 = arith.constant 0 : index
    %0 = vector.load %arg1[%c0, %c0_0] : memref<48x128xf32, #tpu.memory_space<vmem>>, vector<48x128xf32>
    %c0_1 = arith.constant 0 : index
    %c0_2 = arith.constant 0 : index
    %1 = vector.load %arg2[%c0_1, %c0_2] : memref<48x128xf32, #tpu.memory_space<vmem>>, vector<48x128xf32>
    %c0_3 = arith.constant 0 : index
    %c0_4 = arith.constant 0 : index
    %2 = vector.load %arg3[%c0_3, %c0_4] : memref<48x128xf32, #tpu.memory_space<vmem>>, vector<48x128xf32>
    %c0_5 = arith.constant 0 : index
    %c0_6 = arith.constant 0 : index
    %3 = vector.load %arg4[%c0_5, %c0_6] : memref<48x128xf32, #tpu.memory_space<vmem>>, vector<48x128xf32>
    %c0_7 = arith.constant 0 : index
    %c0_8 = arith.constant 0 : index
    %4 = vector.load %arg5[%c0_7, %c0_8] : memref<48x128xf32, #tpu.memory_space<vmem>>, vector<48x128xf32>
    %c0_9 = arith.constant 0 : index
    %c0_10 = arith.constant 0 : index
    %5 = vector.load %arg6[%c0_9, %c0_10] : memref<48x128xf32, #tpu.memory_space<vmem>>, vector<48x128xf32>
    %c0_11 = arith.constant 0 : index
    %c0_12 = arith.constant 0 : index
    %6 = vector.load %arg7[%c0_11, %c0_12] : memref<48x128xf32, #tpu.memory_space<vmem>>, vector<48x128xf32>
    %c0_13 = arith.constant 0 : index
    %c0_14 = arith.constant 0 : index
    %7 = vector.load %arg8[%c0_13, %c0_14] : memref<48x128xf32, #tpu.memory_space<vmem>>, vector<48x128xf32>
    %c0_15 = arith.constant 0 : index
    %c0_16 = arith.constant 0 : index
    %8 = vector.load %arg9[%c0_15, %c0_16] : memref<48x1xf32, #tpu.memory_space<vmem>>, vector<48x1xf32>
    %c0_17 = arith.constant 0 : index
    %c0_18 = arith.constant 0 : index
    %9 = vector.load %arg10[%c0_17, %c0_18] : memref<48x1xf32, #tpu.memory_space<vmem>>, vector<48x1xf32>
    %c0_19 = arith.constant 0 : index
    %c0_20 = arith.constant 0 : index
    %10 = vector.load %arg11[%c0_19, %c0_20] : memref<1x128xf32, #tpu.memory_space<vmem>>, vector<1x128xf32>
    %c0_21 = arith.constant 0 : index
    %c0_22 = arith.constant 0 : index
    %11 = vector.load %arg12[%c0_21, %c0_22] : memref<1x128xf32, #tpu.memory_space<vmem>>, vector<1x128xf32>
    %c47_i32 = arith.constant 47 : i32
    %12 = tpu.dynamic_rotate %0 by %c47_i32 dim 0 : vector<48x128xf32>, i32 -> vector<48x128xf32>
    %13 = arith.subf %0, %12 : vector<48x128xf32>
    %14 = vector.broadcast %8 : vector<48x1xf32> to vector<48x128xf32>
    %15 = arith.mulf %13, %14 : vector<48x128xf32>
    %c127_i32 = arith.constant 127 : i32
    %16 = tpu.dynamic_rotate %0 by %c127_i32 dim 1 : vector<48x128xf32>, i32 -> vector<48x128xf32>
    %17 = arith.subf %0, %16 : vector<48x128xf32>
    %18 = vector.broadcast %10 : vector<1x128xf32> to vector<48x128xf32>
    %19 = arith.mulf %17, %18 : vector<48x128xf32>
    %cst = arith.constant 1.000000e+04 : f32
    %20 = vector.broadcast %cst : f32 to vector<48x128xf32>
    %21 = arith.mulf %1, %20 : vector<48x128xf32>
    %cst_23 = arith.constant 1.000000e+04 : f32
    %22 = vector.broadcast %cst_23 : f32 to vector<48x128xf32>
    %23 = arith.mulf %2, %22 : vector<48x128xf32>
    %cst_24 = arith.constant 1.000000e+04 : f32
    %24 = vector.broadcast %cst_24 : f32 to vector<48x128xf32>
    %25 = arith.mulf %3, %24 : vector<48x128xf32>
    %cst_25 = arith.constant 1.000000e+04 : f32
    %26 = vector.broadcast %cst_25 : f32 to vector<48x128xf32>
    %27 = arith.mulf %4, %26 : vector<48x128xf32>
    %28 = arith.addf %15, %23 : vector<48x128xf32>
    %29 = arith.addf %19, %25 : vector<48x128xf32>
    %30 = arith.mulf %28, %28 : vector<48x128xf32>
    %31 = arith.mulf %29, %29 : vector<48x128xf32>
    %32 = arith.addf %30, %31 : vector<48x128xf32>
    %cst_26 = arith.constant 1.110000e-14 : f32
    %33 = vector.broadcast %cst_26 : f32 to vector<48x128xf32>
    %34 = arith.addf %32, %33 : vector<48x128xf32>
    %35 = math.sqrt %34 : vector<48x128xf32>
    %cst_27 = arith.constant 2.000000e-03 : f32
    %36 = vector.broadcast %cst_27 : f32 to vector<48x128xf32>
    %37 = arith.subf %35, %36 : vector<48x128xf32>
    %cst_28 = arith.constant 0.000000e+00 : f32
    %38 = vector.broadcast %cst_28 : f32 to vector<48x128xf32>
    %39 = arith.maximumf %37, %38 : vector<48x128xf32>
    %cst_29 = arith.constant 2.000000e-03 : f32
    %40 = vector.broadcast %cst_29 : f32 to vector<48x128xf32>
    %41 = arith.addf %39, %40 : vector<48x128xf32>
    %42 = tpu.reciprocal %41 {approx = true} : vector<48x128xf32> -> vector<48x128xf32>
    %43 = arith.mulf %39, %42 : vector<48x128xf32>
    %44 = arith.mulf %28, %43 : vector<48x128xf32>
    %45 = arith.mulf %29, %43 : vector<48x128xf32>
    %cst_30 = arith.constant 9.99999974E-5 : f32
    %46 = vector.broadcast %cst_30 : f32 to vector<48x128xf32>
    %47 = arith.mulf %46, %5 : vector<48x128xf32>
    %48 = arith.addf %1, %47 : vector<48x128xf32>
    %49 = arith.addf %48, %6 : vector<48x128xf32>
    %50 = arith.mulf %7, %49 : vector<48x128xf32>
    %51 = arith.addf %27, %0 : vector<48x128xf32>
    %cst_31 = arith.constant 0.000000e+00 : f32
    %52 = vector.broadcast %cst_31 : f32 to vector<48x128xf32>
    %53 = arith.maximumf %51, %52 : vector<48x128xf32>
    %54 = arith.subf %44, %23 : vector<48x128xf32>
    %55 = arith.subf %45, %25 : vector<48x128xf32>
    %c1_i32 = arith.constant 1 : i32
    %56 = tpu.dynamic_rotate %54 by %c1_i32 dim 0 : vector<48x128xf32>, i32 -> vector<48x128xf32>
    %57 = vector.broadcast %9 : vector<48x1xf32> to vector<48x128xf32>
    %58 = arith.mulf %56, %57 : vector<48x128xf32>
    %59 = arith.subf %54, %58 : vector<48x128xf32>
    %c1_i32_32 = arith.constant 1 : i32
    %60 = tpu.dynamic_rotate %55 by %c1_i32_32 dim 1 : vector<48x128xf32>, i32 -> vector<48x128xf32>
    %61 = vector.broadcast %11 : vector<1x128xf32> to vector<48x128xf32>
    %62 = arith.mulf %60, %61 : vector<48x128xf32>
    %63 = arith.subf %55, %62 : vector<48x128xf32>
    %64 = arith.addf %59, %63 : vector<48x128xf32>
    %65 = arith.subf %53, %27 : vector<48x128xf32>
    %cst_33 = arith.constant 9.99999974E-5 : f32
    %66 = vector.broadcast %cst_33 : f32 to vector<48x128xf32>
    %67 = arith.mulf %66, %65 : vector<48x128xf32>
    %cst_34 = arith.constant 9.99999974E-5 : f32
    %68 = vector.broadcast %cst_34 : f32 to vector<48x128xf32>
    %69 = arith.mulf %68, %64 : vector<48x128xf32>
    %70 = arith.addf %67, %69 : vector<48x128xf32>
    %c0_35 = arith.constant 0 : index
    %c0_36 = arith.constant 0 : index
    %71 = vector.load %arg13[%c0_35, %c0_36] : memref<48x128xf32, #tpu.memory_space<vmem>>, vector<48x128xf32>
    tpu.vector_store %arg13[%c0_35, %c0_36], %44 {strides = array<i32>} : memref<48x128xf32, #tpu.memory_space<vmem>>, vector<48x128xf32>,
    %c0_37 = arith.constant 0 : index
    %c0_38 = arith.constant 0 : index
    %72 = vector.load %arg14[%c0_37, %c0_38] : memref<48x128xf32, #tpu.memory_space<vmem>>, vector<48x128xf32>
    tpu.vector_store %arg14[%c0_37, %c0_38], %45 {strides = array<i32>} : memref<48x128xf32, #tpu.memory_space<vmem>>, vector<48x128xf32>,
    %c0_39 = arith.constant 0 : index
    %c0_40 = arith.constant 0 : index
    %73 = vector.load %arg15[%c0_39, %c0_40] : memref<48x128xf32, #tpu.memory_space<vmem>>, vector<48x128xf32>
    tpu.vector_store %arg15[%c0_39, %c0_40], %50 {strides = array<i32>} : memref<48x128xf32, #tpu.memory_space<vmem>>, vector<48x128xf32>,
    %c0_41 = arith.constant 0 : index
    %c0_42 = arith.constant 0 : index
    %74 = vector.load %arg16[%c0_41, %c0_42] : memref<48x128xf32, #tpu.memory_space<vmem>>, vector<48x128xf32>
    tpu.vector_store %arg16[%c0_41, %c0_42], %53 {strides = array<i32>} : memref<48x128xf32, #tpu.memory_space<vmem>>, vector<48x128xf32>,
    %c0_43 = arith.constant 0 : index
    %c0_44 = arith.constant 0 : index
    %75 = vector.load %arg17[%c0_43, %c0_44] : memref<48x128xf32, #tpu.memory_space<vmem>>, vector<48x128xf32>
    tpu.vector_store %arg17[%c0_43, %c0_44], %70 {strides = array<i32>} : memref<48x128xf32, #tpu.memory_space<vmem>>, vector<48x128xf32>,
    %76 = arith.subf %50, %21 : vector<48x128xf32>
    %c0_45 = arith.constant 0 : index
    %c0_46 = arith.constant 0 : index
    %77 = vector.load %arg18[%c0_45, %c0_46] : memref<48x128xf32, #tpu.memory_space<vmem>>, vector<48x128xf32>
    tpu.vector_store %arg18[%c0_45, %c0_46], %76 {strides = array<i32>} : memref<48x128xf32, #tpu.memory_space<vmem>>, vector<48x128xf32>,
    return
  }
  func.func @transform_0(%arg0: i32) -> (i32, i32) {
    %c0_i32 = arith.constant 0 : i32
    %c0_i32_0 = arith.constant 0 : i32
    return %arg0, %c0_i32 : i32, i32
  }
  func.func @transform_1(%arg0: i32) -> (i32, i32) {
    %c0_i32 = arith.constant 0 : i32
    %c0_i32_0 = arith.constant 0 : i32
    return %arg0, %c0_i32 : i32, i32
  }
  func.func @transform_2(%arg0: i32) -> (i32, i32) {
    %c0_i32 = arith.constant 0 : i32
    %c0_i32_0 = arith.constant 0 : i32
    return %arg0, %c0_i32 : i32, i32
  }
  func.func @transform_3(%arg0: i32) -> (i32, i32) {
    %c0_i32 = arith.constant 0 : i32
    %c0_i32_0 = arith.constant 0 : i32
    return %arg0, %c0_i32 : i32, i32
  }
  func.func @transform_4(%arg0: i32) -> (i32, i32) {
    %c0_i32 = arith.constant 0 : i32
    %c0_i32_0 = arith.constant 0 : i32
    return %arg0, %c0_i32 : i32, i32
  }
  func.func @transform_5(%arg0: i32) -> (i32, i32) {
    %c0_i32 = arith.constant 0 : i32
    %c0_i32_0 = arith.constant 0 : i32
    return %arg0, %c0_i32 : i32, i32
  }
  func.func @transform_6(%arg0: i32) -> (i32, i32) {
    %c0_i32 = arith.constant 0 : i32
    %c0_i32_0 = arith.constant 0 : i32
    return %arg0, %c0_i32 : i32, i32
  }
  func.func @transform_7(%arg0: i32) -> (i32, i32) {
    %c0_i32 = arith.constant 0 : i32
    %c0_i32_0 = arith.constant 0 : i32
    %c0_i32_1 = arith.constant 0 : i32
    return %c0_i32, %c0_i32_0 : i32, i32
  }
  func.func @transform_8(%arg0: i32) -> (i32, i32) {
    %c0_i32 = arith.constant 0 : i32
    %c0_i32_0 = arith.constant 0 : i32
    %c0_i32_1 = arith.constant 0 : i32
    return %c0_i32, %c0_i32_0 : i32, i32
  }
  func.func @transform_9(%arg0: i32) -> (i32, i32) {
    %c0_i32 = arith.constant 0 : i32
    %c0_i32_0 = arith.constant 0 : i32
    %c0_i32_1 = arith.constant 0 : i32
    return %c0_i32, %c0_i32_0 : i32, i32
  }
  func.func @transform_10(%arg0: i32) -> (i32, i32) {
    %c0_i32 = arith.constant 0 : i32
    %c0_i32_0 = arith.constant 0 : i32
    %c0_i32_1 = arith.constant 0 : i32
    return %c0_i32, %c0_i32_0 : i32, i32
  }
  func.func @transform_11(%arg0: i32) -> (i32, i32) {
    %c0_i32 = arith.constant 0 : i32
    %c0_i32_0 = arith.constant 0 : i32
    %c0_i32_1 = arith.constant 0 : i32
    return %c0_i32, %c0_i32_0 : i32, i32
  }
  func.func @transform_12(%arg0: i32) -> (i32, i32) {
    %c0_i32 = arith.constant 0 : i32
    %c0_i32_0 = arith.constant 0 : i32
    return %arg0, %c0_i32 : i32, i32
  }
  func.func @transform_13(%arg0: i32) -> (i32, i32) {
    %c0_i32 = arith.constant 0 : i32
    %c0_i32_0 = arith.constant 0 : i32
    return %arg0, %c0_i32 : i32, i32
  }
  func.func @transform_14(%arg0: i32) -> (i32, i32) {
    %c0_i32 = arith.constant 0 : i32
    %c0_i32_0 = arith.constant 0 : i32
    return %arg0, %c0_i32 : i32, i32
  }
  func.func @transform_15(%arg0: i32) -> (i32, i32) {
    %c0_i32 = arith.constant 0 : i32
    %c0_i32_0 = arith.constant 0 : i32
    return %arg0, %c0_i32 : i32, i32
  }
  func.func @transform_16(%arg0: i32) -> (i32, i32) {
    %c0_i32 = arith.constant 0 : i32
    %c0_i32_0 = arith.constant 0 : i32
    return %arg0, %c0_i32 : i32, i32
  }
  func.func @transform_17(%arg0: i32) -> (i32, i32) {
    %c0_i32 = arith.constant 0 : i32
    %c0_i32_0 = arith.constant 0 : i32
    return %arg0, %c0_i32 : i32, i32
  }
}

module attributes {stable_mosaic.version = 11 : i64} {
  func.func @_normalize_kernel(%arg0: i32, %arg1: memref<1x12x128xf32, #tpu.memory_space<vmem>>, %arg2: memref<1x12x128xf32, #tpu.memory_space<vmem>>) attributes {dimension_semantics = [#tpu.dimension_semantics<parallel>], iteration_bounds = array<i64: 2>, scalar_prefetch = 0 : i64, scratch_operands = 0 : i64, tpu.core_type = #tpu.core_type<tc>, window_params = [{transform_indices = @transform_0, window_bounds = array<i64: 1, 12, 128>}, {transform_indices = @transform_1, window_bounds = array<i64: 1, 12, 128>}]} {
    %c0 = arith.constant 0 : index
    %c0_0 = arith.constant 0 : index
    %c0_1 = arith.constant 0 : index
    %0 = vector.load %arg1[%c0, %c0_0, %c0_1] : memref<1x12x128xf32, #tpu.memory_space<vmem>>, vector<1x12x128xf32>
    %1 = vector.shape_cast %0 : vector<1x12x128xf32> to vector<12x128xf32>
    %2 = vector.shape_cast %1 : vector<12x128xf32> to vector<1x12x128xf32>
    %cst = arith.constant dense<0xFF800000> : vector<1xf32>
    %3 = vector.multi_reduction <maximumf>, %2, %cst [1, 2] : vector<1x12x128xf32> to vector<1xf32>
    %4 = vector.shape_cast %3 : vector<1xf32> to vector<1x1x1xf32>
    %5 = vector.extract %4[0, 0, 0] : f32 from vector<1x1x1xf32>
    %cst_2 = arith.constant 1.000000e-30 : f32
    %6 = arith.maximumf %5, %cst_2 : f32
    %cst_3 = arith.constant 1.000000e+00 : f32
    %7 = arith.divf %cst_3, %6 : f32
    %8 = vector.broadcast %7 : f32 to vector<12x128xf32>
    %9 = arith.mulf %1, %8 : vector<12x128xf32>
    %c0_4 = arith.constant 0 : index
    %c0_5 = arith.constant 0 : index
    %c0_6 = arith.constant 0 : index
    %10 = vector.load %arg2[%c0_4, %c0_5, %c0_6] : memref<1x12x128xf32, #tpu.memory_space<vmem>>, vector<1x12x128xf32>
    %11 = vector.shape_cast %10 : vector<1x12x128xf32> to vector<12x128xf32>
    %12 = vector.shape_cast %9 : vector<12x128xf32> to vector<1x12x128xf32>
    tpu.vector_store %arg2[%c0_4, %c0_5, %c0_6], %12 {strides = array<i32>} : memref<1x12x128xf32, #tpu.memory_space<vmem>>, vector<1x12x128xf32>,
    return
  }
  func.func @transform_0(%arg0: i32) -> (i32, i32, i32) {
    %c0_i32 = arith.constant 0 : i32
    %c0_i32_0 = arith.constant 0 : i32
    %c0_i32_1 = arith.constant 0 : i32
    return %arg0, %c0_i32, %c0_i32_0 : i32, i32, i32
  }
  func.func @transform_1(%arg0: i32) -> (i32, i32, i32) {
    %c0_i32 = arith.constant 0 : i32
    %c0_i32_0 = arith.constant 0 : i32
    %c0_i32_1 = arith.constant 0 : i32
    return %arg0, %c0_i32, %c0_i32_0 : i32, i32, i32
  }
}

</mosaic_0001>

<llo_original>
// kernel: admm_net_forward.6
$region0: #{admm_net_forward.6}
  #allocation0 [shape = 'u32[]', space=smem, size = 0x4, offset = 0x4, fixed_abs, tag = 'smem constant byte address 0x4 - core index']
  #allocation1 [shape = 'u32[144,128]{1,0:T(1,128)}', space=vmem, size = 0x12000, scoped, tag = 'internal scratch']
  %s0 = inlined_call_operand.vmem [shape: f32[96,128], index: 0, kind: input, shape index: {}, may-alias: {0,1,2,3,4,5}]
  %s1 = inlined_call_operand.vmem [shape: f32[96,128], index: 1, kind: input, shape index: {}, may-alias: {0,1,2,3,4,5}]
  %s2 = inlined_call_operand.vmem [shape: f32[96,128], index: 2, kind: input, shape index: {}, may-alias: {0,1,2,3,4,5}]
  %s3 = inlined_call_operand.vmem [shape: f32[96,128], index: 3, kind: input, shape index: {}, may-alias: {0,1,2,3,4,5}]
  %s4 = inlined_call_operand.vmem [shape: f32[96,128], index: 4, kind: input, shape index: {}, may-alias: {0,1,2,3,4,5}]
  %s5 = inlined_call_operand.vmem [shape: f32[96,128], index: 5, kind: input, shape index: {}, may-alias: {0,1,2,3,4,5}]
  %s6 = inlined_call_operand.vmem [shape: f32[96,128], index: 6, kind: input, shape index: {}]
  %s7 = inlined_call_operand.vmem [shape: f32[48,128], index: 7, kind: input, shape index: {}]
  %s8 = inlined_call_operand.vmem [shape: f32[48,1], index: 8, kind: input, shape index: {}]
  %s9 = inlined_call_operand.vmem [shape: f32[48,1], index: 9, kind: input, shape index: {}]
  %s10 = inlined_call_operand.vmem [shape: f32[1,128], index: 10, kind: input, shape index: {}]
  %s11 = inlined_call_operand.vmem [shape: f32[1,128], index: 11, kind: input, shape index: {}]
  %s12 = inlined_call_operand.vmem [shape: f32[96,128], index: 12, kind: output, shape index: {0}]
  %s13 = inlined_call_operand.vmem [shape: f32[96,128], index: 13, kind: output, shape index: {1}]
  %s14 = inlined_call_operand.vmem [shape: f32[96,128], index: 14, kind: output, shape index: {2}]
  %s15 = inlined_call_operand.vmem [shape: f32[96,128], index: 15, kind: output, shape index: {3}]
  %s16 = inlined_call_operand.vmem [shape: f32[96,128], index: 16, kind: output, shape index: {4}]
  %s17 = inlined_call_operand.vmem [shape: f32[96,128], index: 17, kind: output, shape index: {5}]
  %18 = xla_tuple %s12, %s13, %s14, %s15, %s16, %s17
  %s19 = sld [smem:[#allocation0]]
  $region121: #{admm_net_forward.6} parent=0
    _
  %s21 = ssub.s32 1, %s19
  %s22 = scalar_select 0, %s21, %s19
  loop: start=0, step=1, limit=4
  $region2: #{admm_net_forward.6} parent=0 // loop_pre_header
    _
  $region3: #{admm_net_forward.6} parent=0 // loop_header
    %s24 = sphi 0, %s28
    %p25 = scmp.ge.s32.totalorder %s24, 4
    %s34 = sphi 0, %s36
    %s37 = sphi 0, %s34
    %s38 = sphi 0, %s37
    %s54 = sphi 0, %s38
    %s60 = sphi 0, %s62
    %s63 = sphi 0, %s60
    %s64 = sphi 0, %s63
    %s80 = sphi 0, %s64
    %s86 = sphi 0, %s88
    %s89 = sphi 0, %s86
    %s90 = sphi 0, %s89
    %s106 = sphi 0, %s90
    %s112 = sphi 0, %s114
    %s115 = sphi 0, %s112
    %s116 = sphi 0, %s115
    %s132 = sphi 0, %s116
    %s138 = sphi 0, %s140
    %s141 = sphi 0, %s138
    %s142 = sphi 0, %s141
    %s158 = sphi 0, %s142
    %s164 = sphi 0, %s166
    %s167 = sphi 0, %s164
    %s168 = sphi 0, %s167
    %s184 = sphi 0, %s168
    %s190 = sphi 0, %s192
    %s193 = sphi 0, %s190
    %s194 = sphi 0, %s193
    %s210 = sphi 0, %s194
    %s214 = sphi 0, %s214
    %s216 = sphi 0, %s214
    %s217 = sphi 0, %s216
    %s231 = sphi 0, %s217
    %s235 = sphi 0, %s235
    %s237 = sphi 0, %s235
    %s238 = sphi 0, %s237
    %s252 = sphi 0, %s238
    %s256 = sphi 0, %s256
    %s258 = sphi 0, %s256
    %s259 = sphi 0, %s258
    %s273 = sphi 0, %s259
    %s277 = sphi 0, %s277
    %s279 = sphi 0, %s277
    %s280 = sphi 0, %s279
    %s294 = sphi 0, %s280
    %s298 = sphi 0, %s298
    %s300 = sphi 0, %s298
    %s301 = sphi 0, %s300
    %s315 = sphi 0, %s301
    %s321 = sphi 0, %s323
    %s324 = sphi 0, %s321
    %s325 = sphi 0, %s324
    %s341 = sphi 0, %s325
    %s347 = sphi 0, %s349
    %s350 = sphi 0, %s347
    %s351 = sphi 0, %s350
    %s367 = sphi 0, %s351
    %s373 = sphi 0, %s375
    %s376 = sphi 0, %s373
    %s377 = sphi 0, %s376
    %s393 = sphi 0, %s377
    %s399 = sphi 0, %s401
    %s402 = sphi 0, %s399
    %s403 = sphi 0, %s402
    %s419 = sphi 0, %s403
    %s425 = sphi 0, %s427
    %s428 = sphi 0, %s425
    %s429 = sphi 0, %s428
    %s445 = sphi 0, %s429
    %s451 = sphi 0, %s453
    %s454 = sphi 0, %s451
    %s455 = sphi 0, %s454
    %s471 = sphi 0, %s455
  $region4: #{admm_net_forward.6} parent=0 // loop_header_branch
    %27 = sbr.rel (%p25) target = $region8
  $region5: #{admm_net_forward.6} parent=0 // loop_body
    %s29 = ssub.s32 %s24, 1
    %s30 = ssub.s32 %s24, 2
    %s31 = sadd.s32 %s24, 1
    %s32 = ssub.s32 %s24, %s31
    %p33 = scmp.eq.s32.totalorder %s32, 0
    %s35 = sadd.s32 %s34, 1
    %s36 = scalar_select %p33, %s34, %s35
    %p39 = pneg %p33
    %p40 = scmp.eq.s32.totalorder %s24, 1
    %p41 = por %p39, %p40
    %p42 = scmp.ne.s32.totalorder %s34, %s37
    %p43 = scmp.eq.s32.totalorder %s24, 0
    %p44 = por %p42, %p43
    %p45 = scmp.ne.s32.totalorder %s34, %s37
    %p46 = scmp.eq.s32.totalorder %s29, 1
    %p47 = por %p45, %p46
    %p48 = scmp.ne.s32.totalorder %s37, %s38
    %p49 = scmp.eq.s32.totalorder %s29, 0
    %p50 = por %p48, %p49
    %p51 = scmp.ne.s32.totalorder %s37, %s38
    %p52 = scmp.eq.s32.totalorder %s30, 1
    %p53 = por %p51, %p52
    %p55 = scmp.ne.s32.totalorder %s38, %s54
    %p56 = scmp.eq.s32.totalorder %s30, 0
    %p57 = por %p55, %p56
    %s58 = ssub.s32 %s24, %s31
    %p59 = scmp.eq.s32.totalorder %s58, 0
    %s61 = sadd.s32 %s60, 1
    %s62 = scalar_select %p59, %s60, %s61
    %p65 = pneg %p59
    %p66 = scmp.eq.s32.totalorder %s24, 1
    %p67 = por %p65, %p66
    %p68 = scmp.ne.s32.totalorder %s60, %s63
    %p69 = scmp.eq.s32.totalorder %s24, 0
    %p70 = por %p68, %p69
    %p71 = scmp.ne.s32.totalorder %s60, %s63
    %p72 = scmp.eq.s32.totalorder %s29, 1
    %p73 = por %p71, %p72
    %p74 = scmp.ne.s32.totalorder %s63, %s64
    %p75 = scmp.eq.s32.totalorder %s29, 0
    %p76 = por %p74, %p75
    %p77 = scmp.ne.s32.totalorder %s63, %s64
    %p78 = scmp.eq.s32.totalorder %s30, 1
    %p79 = por %p77, %p78
    %p81 = scmp.ne.s32.totalorder %s64, %s80
    %p82 = scmp.eq.s32.totalorder %s30, 0
    %p83 = por %p81, %p82
    %s84 = ssub.s32 %s24, %s31
    %p85 = scmp.eq.s32.totalorder %s84, 0
    %s87 = sadd.s32 %s86, 1
    %s88 = scalar_select %p85, %s86, %s87
    %p91 = pneg %p85
    %p92 = scmp.eq.s32.totalorder %s24, 1
    %p93 = por %p91, %p92
    %p94 = scmp.ne.s32.totalorder %s86, %s89
    %p95 = scmp.eq.s32.totalorder %s24, 0
    %p96 = por %p94, %p95
    %p97 = scmp.ne.s32.totalorder %s86, %s89
    %p98 = scmp.eq.s32.totalorder %s29, 1
    %p99 = por %p97, %p98
    %p100 = scmp.ne.s32.totalorder %s89, %s90
    %p101 = scmp.eq.s32.totalorder %s29, 0
    %p102 = por %p100, %p101
    %p103 = scmp.ne.s32.totalorder %s89, %s90
    %p104 = scmp.eq.s32.totalorder %s30, 1
    %p105 = por %p103, %p104
    %p107 = scmp.ne.s32.totalorder %s90, %s106
    %p108 = scmp.eq.s32.totalorder %s30, 0
    %p109 = por %p107, %p108
    %s110 = ssub.s32 %s24, %s31
    %p111 = scmp.eq.s32.totalorder %s110, 0
    %s113 = sadd.s32 %s112, 1
    %s114 = scalar_select %p111, %s112, %s113
    %p117 = pneg %p111
    %p118 = scmp.eq.s32.totalorder %s24, 1
    %p119 = por %p117, %p118
    %p120 = scmp.ne.s32.totalorder %s112, %s115
    %p121 = scmp.eq.s32.totalorder %s24, 0
    %p122 = por %p120, %p121
    %p123 = scmp.ne.s32.totalorder %s112, %s115
    %p124 = scmp.eq.s32.totalorder %s29, 1
    %p125 = por %p123, %p124
    %p126 = scmp.ne.s32.totalorder %s115, %s116
    %p127 = scmp.eq.s32.totalorder %s29, 0
    %p128 = por %p126, %p127
    %p129 = scmp.ne.s32.totalorder %s115, %s116
    %p130 = scmp.eq.s32.totalorder %s30, 1
    %p131 = por %p129, %p130
    %p133 = scmp.ne.s32.totalorder %s116, %s132
    %p134 = scmp.eq.s32.totalorder %s30, 0
    %p135 = por %p133, %p134
    %s136 = ssub.s32 %s24, %s31
    %p137 = scmp.eq.s32.totalorder %s136, 0
    %s139 = sadd.s32 %s138, 1
    %s140 = scalar_select %p137, %s138, %s139
    %p143 = pneg %p137
    %p144 = scmp.eq.s32.totalorder %s24, 1
    %p145 = por %p143, %p144
    %p146 = scmp.ne.s32.totalorder %s138, %s141
    %p147 = scmp.eq.s32.totalorder %s24, 0
    %p148 = por %p146, %p147
    %p149 = scmp.ne.s32.totalorder %s138, %s141
    %p150 = scmp.eq.s32.totalorder %s29, 1
    %p151 = por %p149, %p150
    %p152 = scmp.ne.s32.totalorder %s141, %s142
    %p153 = scmp.eq.s32.totalorder %s29, 0
    %p154 = por %p152, %p153
    %p155 = scmp.ne.s32.totalorder %s141, %s142
    %p156 = scmp.eq.s32.totalorder %s30, 1
    %p157 = por %p155, %p156
    %p159 = scmp.ne.s32.totalorder %s142, %s158
    %p160 = scmp.eq.s32.totalorder %s30, 0
    %p161 = por %p159, %p160
    %s162 = ssub.s32 %s24, %s31
    %p163 = scmp.eq.s32.totalorder %s162, 0
    %s165 = sadd.s32 %s164, 1
    %s166 = scalar_select %p163, %s164, %s165
    %p169 = pneg %p163
    %p170 = scmp.eq.s32.totalorder %s24, 1
    %p171 = por %p169, %p170
    %p172 = scmp.ne.s32.totalorder %s164, %s167
    %p173 = scmp.eq.s32.totalorder %s24, 0
    %p174 = por %p172, %p173
    %p175 = scmp.ne.s32.totalorder %s164, %s167
    %p176 = scmp.eq.s32.totalorder %s29, 1
    %p177 = por %p175, %p176
    %p178 = scmp.ne.s32.totalorder %s167, %s168
    %p179 = scmp.eq.s32.totalorder %s29, 0
    %p180 = por %p178, %p179
    %p181 = scmp.ne.s32.totalorder %s167, %s168
    %p182 = scmp.eq.s32.totalorder %s30, 1
    %p183 = por %p181, %p182
    %p185 = scmp.ne.s32.totalorder %s168, %s184
    %p186 = scmp.eq.s32.totalorder %s30, 0
    %p187 = por %p185, %p186
    %s188 = ssub.s32 %s24, %s31
    %p189 = scmp.eq.s32.totalorder %s188, 0
    %s191 = sadd.s32 %s190, 1
    %s192 = scalar_select %p189, %s190, %s191
    %p195 = pneg %p189
    %p196 = scmp.eq.s32.totalorder %s24, 1
    %p197 = por %p195, %p196
    %p198 = scmp.ne.s32.totalorder %s190, %s193
    %p199 = scmp.eq.s32.totalorder %s24, 0
    %p200 = por %p198, %p199
    %p201 = scmp.ne.s32.totalorder %s190, %s193
    %p202 = scmp.eq.s32.totalorder %s29, 1
    %p203 = por %p201, %p202
    %p204 = scmp.ne.s32.totalorder %s193, %s194
    %p205 = scmp.eq.s32.totalorder %s29, 0
    %p206 = por %p204, %p205
    %p207 = scmp.ne.s32.totalorder %s193, %s194
    %p208 = scmp.eq.s32.totalorder %s30, 1
    %p209 = por %p207, %p208
    %p211 = scmp.ne.s32.totalorder %s194, %s210
    %p212 = scmp.eq.s32.totalorder %s30, 0
    %p213 = por %p211, %p212
    %s215 = sadd.s32 %s214, 1
    %p218 = scmp.eq.s32.totalorder %s24, 1
    %p219 = scmp.ne.s32.totalorder %s214, %s216
    %p220 = scmp.eq.s32.totalorder %s24, 0
    %p221 = por %p219, %p220
    %p222 = scmp.ne.s32.totalorder %s214, %s216
    %p223 = scmp.eq.s32.totalorder %s29, 1
    %p224 = por %p222, %p223
    %p225 = scmp.ne.s32.totalorder %s216, %s217
    %p226 = scmp.eq.s32.totalorder %s29, 0
    %p227 = por %p225, %p226
    %p228 = scmp.ne.s32.totalorder %s216, %s217
    %p229 = scmp.eq.s32.totalorder %s30, 1
    %p230 = por %p228, %p229
    %p232 = scmp.ne.s32.totalorder %s217, %s231
    %p233 = scmp.eq.s32.totalorder %s30, 0
    %p234 = por %p232, %p233
    %s236 = sadd.s32 %s235, 1
    %p239 = scmp.eq.s32.totalorder %s24, 1
    %p240 = scmp.ne.s32.totalorder %s235, %s237
    %p241 = scmp.eq.s32.totalorder %s24, 0
    %p242 = por %p240, %p241
    %p243 = scmp.ne.s32.totalorder %s235, %s237
    %p244 = scmp.eq.s32.totalorder %s29, 1
    %p245 = por %p243, %p244
    %p246 = scmp.ne.s32.totalorder %s237, %s238
    %p247 = scmp.eq.s32.totalorder %s29, 0
    %p248 = por %p246, %p247
    %p249 = scmp.ne.s32.totalorder %s237, %s238
    %p250 = scmp.eq.s32.totalorder %s30, 1
    %p251 = por %p249, %p250
    %p253 = scmp.ne.s32.totalorder %s238, %s252
    %p254 = scmp.eq.s32.totalorder %s30, 0
    %p255 = por %p253, %p254
    %s257 = sadd.s32 %s256, 1
    %p260 = scmp.eq.s32.totalorder %s24, 1
    %p261 = scmp.ne.s32.totalorder %s256, %s258
    %p262 = scmp.eq.s32.totalorder %s24, 0
    %p263 = por %p261, %p262
    %p264 = scmp.ne.s32.totalorder %s256, %s258
    %p265 = scmp.eq.s32.totalorder %s29, 1
    %p266 = por %p264, %p265
    %p267 = scmp.ne.s32.totalorder %s258, %s259
    %p268 = scmp.eq.s32.totalorder %s29, 0
    %p269 = por %p267, %p268
    %p270 = scmp.ne.s32.totalorder %s258, %s259
    %p271 = scmp.eq.s32.totalorder %s30, 1
    %p272 = por %p270, %p271
    %p274 = scmp.ne.s32.totalorder %s259, %s273
    %p275 = scmp.eq.s32.totalorder %s30, 0
    %p276 = por %p274, %p275
    %s278 = sadd.s32 %s277, 1
    %p281 = scmp.eq.s32.totalorder %s24, 1
    %p282 = scmp.ne.s32.totalorder %s277, %s279
    %p283 = scmp.eq.s32.totalorder %s24, 0
    %p284 = por %p282, %p283
    %p285 = scmp.ne.s32.totalorder %s277, %s279
    %p286 = scmp.eq.s32.totalorder %s29, 1
    %p287 = por %p285, %p286
    %p288 = scmp.ne.s32.totalorder %s279, %s280
    %p289 = scmp.eq.s32.totalorder %s29, 0
    %p290 = por %p288, %p289
    %p291 = scmp.ne.s32.totalorder %s279, %s280
    %p292 = scmp.eq.s32.totalorder %s30, 1
    %p293 = por %p291, %p292
    %p295 = scmp.ne.s32.totalorder %s280, %s294
    %p296 = scmp.eq.s32.totalorder %s30, 0
    %p297 = por %p295, %p296
    %s299 = sadd.s32 %s298, 1
    %p302 = scmp.eq.s32.totalorder %s24, 1
    %p303 = scmp.ne.s32.totalorder %s298, %s300
    %p304 = scmp.eq.s32.totalorder %s24, 0
    %p305 = por %p303, %p304
    %p306 = scmp.ne.s32.totalorder %s298, %s300
    %p307 = scmp.eq.s32.totalorder %s29, 1
    %p308 = por %p306, %p307
    %p309 = scmp.ne.s32.totalorder %s300, %s301
    %p310 = scmp.eq.s32.totalorder %s29, 0
    %p311 = por %p309, %p310
    %p312 = scmp.ne.s32.totalorder %s300, %s301
    %p313 = scmp.eq.s32.totalorder %s30, 1
    %p314 = por %p312, %p313
    %p316 = scmp.ne.s32.totalorder %s301, %s315
    %p317 = scmp.eq.s32.totalorder %s30, 0
    %p318 = por %p316, %p317
    %s319 = ssub.s32 %s24, %s31
    %p320 = scmp.eq.s32.totalorder %s319, 0
    %s322 = sadd.s32 %s321, 1
    %s323 = scalar_select %p320, %s321, %s322
    %p326 = pneg %p320
    %p327 = scmp.eq.s32.totalorder %s24, 1
    %p328 = por %p326, %p327
    %p329 = scmp.ne.s32.totalorder %s321, %s324
    %p330 = scmp.eq.s32.totalorder %s24, 0
    %p331 = por %p329, %p330
    %p332 = scmp.ne.s32.totalorder %s321, %s324
    %p333 = scmp.eq.s32.totalorder %s29, 1
    %p334 = por %p332, %p333
    %p335 = scmp.ne.s32.totalorder %s324, %s325
    %p336 = scmp.eq.s32.totalorder %s29, 0
    %p337 = por %p335, %p336
    %p338 = scmp.ne.s32.totalorder %s324, %s325
    %p339 = scmp.eq.s32.totalorder %s30, 1
    %p340 = por %p338, %p339
    %p342 = scmp.ne.s32.totalorder %s325, %s341
    %p343 = scmp.eq.s32.totalorder %s30, 0
    %p344 = por %p342, %p343
    %s345 = ssub.s32 %s24, %s31
    %p346 = scmp.eq.s32.totalorder %s345, 0
    %s348 = sadd.s32 %s347, 1
    %s349 = scalar_select %p346, %s347, %s348
    %p352 = pneg %p346
    %p353 = scmp.eq.s32.totalorder %s24, 1
    %p354 = por %p352, %p353
    %p355 = scmp.ne.s32.totalorder %s347, %s350
    %p356 = scmp.eq.s32.totalorder %s24, 0
    %p357 = por %p355, %p356
    %p358 = scmp.ne.s32.totalorder %s347, %s350
    %p359 = scmp.eq.s32.totalorder %s29, 1
    %p360 = por %p358, %p359
    %p361 = scmp.ne.s32.totalorder %s350, %s351
    %p362 = scmp.eq.s32.totalorder %s29, 0
    %p363 = por %p361, %p362
    %p364 = scmp.ne.s32.totalorder %s350, %s351
    %p365 = scmp.eq.s32.totalorder %s30, 1
    %p366 = por %p364, %p365
    %p368 = scmp.ne.s32.totalorder %s351, %s367
    %p369 = scmp.eq.s32.totalorder %s30, 0
    %p370 = por %p368, %p369
    %s371 = ssub.s32 %s24, %s31
    %p372 = scmp.eq.s32.totalorder %s371, 0
    %s374 = sadd.s32 %s373, 1
    %s375 = scalar_select %p372, %s373, %s374
    %p378 = pneg %p372
    %p379 = scmp.eq.s32.totalorder %s24, 1
    %p380 = por %p378, %p379
    %p381 = scmp.ne.s32.totalorder %s373, %s376
    %p382 = scmp.eq.s32.totalorder %s24, 0
    %p383 = por %p381, %p382
    %p384 = scmp.ne.s32.totalorder %s373, %s376
    %p385 = scmp.eq.s32.totalorder %s29, 1
    %p386 = por %p384, %p385
    %p387 = scmp.ne.s32.totalorder %s376, %s377
    %p388 = scmp.eq.s32.totalorder %s29, 0
    %p389 = por %p387, %p388
    %p390 = scmp.ne.s32.totalorder %s376, %s377
    %p391 = scmp.eq.s32.totalorder %s30, 1
    %p392 = por %p390, %p391
    %p394 = scmp.ne.s32.totalorder %s377, %s393
    %p395 = scmp.eq.s32.totalorder %s30, 0
    %p396 = por %p394, %p395
    %s397 = ssub.s32 %s24, %s31
    %p398 = scmp.eq.s32.totalorder %s397, 0
    %s400 = sadd.s32 %s399, 1
    %s401 = scalar_select %p398, %s399, %s400
    %p404 = pneg %p398
    %p405 = scmp.eq.s32.totalorder %s24, 1
    %p406 = por %p404, %p405
    %p407 = scmp.ne.s32.totalorder %s399, %s402
    %p408 = scmp.eq.s32.totalorder %s24, 0
    %p409 = por %p407, %p408
    %p410 = scmp.ne.s32.totalorder %s399, %s402
    %p411 = scmp.eq.s32.totalorder %s29, 1
    %p412 = por %p410, %p411
    %p413 = scmp.ne.s32.totalorder %s402, %s403
    %p414 = scmp.eq.s32.totalorder %s29, 0
    %p415 = por %p413, %p414
    %p416 = scmp.ne.s32.totalorder %s402, %s403
    %p417 = scmp.eq.s32.totalorder %s30, 1
    %p418 = por %p416, %p417
    %p420 = scmp.ne.s32.totalorder %s403, %s419
    %p421 = scmp.eq.s32.totalorder %s30, 0
    %p422 = por %p420, %p421
    %s423 = ssub.s32 %s24, %s31
    %p424 = scmp.eq.s32.totalorder %s423, 0
    %s426 = sadd.s32 %s425, 1
    %s427 = scalar_select %p424, %s425, %s426
    %p430 = pneg %p424
    %p431 = scmp.eq.s32.totalorder %s24, 1
    %p432 = por %p430, %p431
    %p433 = scmp.ne.s32.totalorder %s425, %s428
    %p434 = scmp.eq.s32.totalorder %s24, 0
    %p435 = por %p433, %p434
    %p436 = scmp.ne.s32.totalorder %s425, %s428
    %p437 = scmp.eq.s32.totalorder %s29, 1
    %p438 = por %p436, %p437
    %p439 = scmp.ne.s32.totalorder %s428, %s429
    %p440 = scmp.eq.s32.totalorder %s29, 0
    %p441 = por %p439, %p440
    %p442 = scmp.ne.s32.totalorder %s428, %s429
    %p443 = scmp.eq.s32.totalorder %s30, 1
    %p444 = por %p442, %p443
    %p446 = scmp.ne.s32.totalorder %s429, %s445
    %p447 = scmp.eq.s32.totalorder %s30, 0
    %p448 = por %p446, %p447
    %s449 = ssub.s32 %s24, %s31
    %p450 = scmp.eq.s32.totalorder %s449, 0
    %s452 = sadd.s32 %s451, 1
    %s453 = scalar_select %p450, %s451, %s452
    %p456 = pneg %p450
    %p457 = scmp.eq.s32.totalorder %s24, 1
    %p458 = por %p456, %p457
    %p459 = scmp.ne.s32.totalorder %s451, %s454
    %p460 = scmp.eq.s32.totalorder %s24, 0
    %p461 = por %p459, %p460
    %p462 = scmp.ne.s32.totalorder %s451, %s454
    %p463 = scmp.eq.s32.totalorder %s29, 1
    %p464 = por %p462, %p463
    %p465 = scmp.ne.s32.totalorder %s454, %s455
    %p466 = scmp.eq.s32.totalorder %s29, 0
    %p467 = por %p465, %p466
    %p468 = scmp.ne.s32.totalorder %s454, %s455
    %p469 = scmp.eq.s32.totalorder %s30, 1
    %p470 = por %p468, %p469
    %p472 = scmp.ne.s32.totalorder %s455, %s471
    %p473 = scmp.eq.s32.totalorder %s30, 0
    %p474 = por %p472, %p473
    %p475 = scmp.le.s32.totalorder 1, %s24
    %p476 = scmp.lt.s32.totalorder %s24, 3
    %p477 = pnand %p475, %p476
    %p478 = pneg %p477
    // Predicated region
    $region9: #{admm_net_forward.6} parent=5 // pred_check
      _
    $region10: #{admm_net_forward.6} parent=5 // pred_check_branch
      %480 = sbr.rel (%p477) target = $region12
    $region11: #{admm_net_forward.6} parent=5 // pred_region
      %s481 = ssub.s32 %s24, 1
      // Predicated region
      $region13: #{admm_net_forward.6} parent=11 // pred_check
        %p482 = pneg %p227
      $region14: #{admm_net_forward.6} parent=11 // pred_check_branch
        %484 = sbr.rel (%p482) target = $region16
      $region15: #{admm_net_forward.6} parent=11 // pred_region
        _
      $region16: #{admm_net_forward.6} parent=11 // pred_fallthru
        _
      // Predicated region
      $region17: #{admm_net_forward.6} parent=11 // pred_check
        %p485 = pneg %p248
      $region18: #{admm_net_forward.6} parent=11 // pred_check_branch
        %487 = sbr.rel (%p485) target = $region20
      $region19: #{admm_net_forward.6} parent=11 // pred_region
        _
      $region20: #{admm_net_forward.6} parent=11 // pred_fallthru
        _
      // Predicated region
      $region21: #{admm_net_forward.6} parent=11 // pred_check
        %p488 = pneg %p269
      $region22: #{admm_net_forward.6} parent=11 // pred_check_branch
        %490 = sbr.rel (%p488) target = $region24
      $region23: #{admm_net_forward.6} parent=11 // pred_region
        _
      $region24: #{admm_net_forward.6} parent=11 // pred_fallthru
        _
      // Predicated region
      $region25: #{admm_net_forward.6} parent=11 // pred_check
        %p491 = pneg %p290
      $region26: #{admm_net_forward.6} parent=11 // pred_check_branch
        %493 = sbr.rel (%p491) target = $region28
      $region27: #{admm_net_forward.6} parent=11 // pred_region
        _
      $region28: #{admm_net_forward.6} parent=11 // pred_fallthru
        _
      // Predicated region
      $region29: #{admm_net_forward.6} parent=11 // pred_check
        %p494 = pneg %p311
      $region30: #{admm_net_forward.6} parent=11 // pred_check_branch
        %496 = sbr.rel (%p494) target = $region32
      $region31: #{admm_net_forward.6} parent=11 // pred_region
        _
      $region32: #{admm_net_forward.6} parent=11 // pred_fallthru
        _
    $region12: #{admm_net_forward.6} parent=5 // pred_fallthru
      _
    %p497 = scmp.lt.s32.totalorder %s24, 2
    // Predicated region
    $region33: #{admm_net_forward.6} parent=5 // pred_check
      %p498 = pneg %p497
    $region34: #{admm_net_forward.6} parent=5 // pred_check_branch
      %500 = sbr.rel (%p498) target = $region36
    $region35: #{admm_net_forward.6} parent=5 // pred_region
      // Predicated region
      $region37: #{admm_net_forward.6} parent=35 // pred_check
        %p501 = pneg %p44
      $region38: #{admm_net_forward.6} parent=35 // pred_check_branch
        %503 = sbr.rel (%p501) target = $region40
      $region39: #{admm_net_forward.6} parent=35 // pred_region
        %s504 = smul.u32 6, %s24
        %p505 = scmp.lt.s32.totalorder %s504, 11
        %s506 = scalar_select %p505, %s504, 11
        %s507 = smul.addr %s506, 8
        %s508 = scalar_lea.vmem %s0, %s507
        %s509 = smul.u32 6, %s24
      $region40: #{admm_net_forward.6} parent=35 // pred_fallthru
        _
      // Predicated region
      $region41: #{admm_net_forward.6} parent=35 // pred_check
        %p510 = pneg %p70
      $region42: #{admm_net_forward.6} parent=35 // pred_check_branch
        %512 = sbr.rel (%p510) target = $region44
      $region43: #{admm_net_forward.6} parent=35 // pred_region
        %s513 = smul.u32 6, %s24
        %p514 = scmp.lt.s32.totalorder %s513, 11
        %s515 = scalar_select %p514, %s513, 11
        %s516 = smul.addr %s515, 8
        %s517 = scalar_lea.vmem %s1, %s516
        %s518 = smul.u32 6, %s24
      $region44: #{admm_net_forward.6} parent=35 // pred_fallthru
        _
      // Predicated region
      $region45: #{admm_net_forward.6} parent=35 // pred_check
        %p519 = pneg %p96
      $region46: #{admm_net_forward.6} parent=35 // pred_check_branch
        %521 = sbr.rel (%p519) target = $region48
      $region47: #{admm_net_forward.6} parent=35 // pred_region
        %s522 = smul.u32 6, %s24
        %p523 = scmp.lt.s32.totalorder %s522, 11
        %s524 = scalar_select %p523, %s522, 11
        %s525 = smul.addr %s524, 8
        %s526 = scalar_lea.vmem %s2, %s525
        %s527 = smul.u32 6, %s24
      $region48: #{admm_net_forward.6} parent=35 // pred_fallthru
        _
      // Predicated region
      $region49: #{admm_net_forward.6} parent=35 // pred_check
        %p528 = pneg %p122
      $region50: #{admm_net_forward.6} parent=35 // pred_check_branch
        %530 = sbr.rel (%p528) target = $region52
      $region51: #{admm_net_forward.6} parent=35 // pred_region
        %s531 = smul.u32 6, %s24
        %p532 = scmp.lt.s32.totalorder %s531, 11
        %s533 = scalar_select %p532, %s531, 11
        %s534 = smul.addr %s533, 8
        %s535 = scalar_lea.vmem %s3, %s534
        %s536 = smul.u32 6, %s24
      $region52: #{admm_net_forward.6} parent=35 // pred_fallthru
        _
      // Predicated region
      $region53: #{admm_net_forward.6} parent=35 // pred_check
        %p537 = pneg %p148
      $region54: #{admm_net_forward.6} parent=35 // pred_check_branch
        %539 = sbr.rel (%p537) target = $region56
      $region55: #{admm_net_forward.6} parent=35 // pred_region
        %s540 = smul.u32 6, %s24
        %p541 = scmp.lt.s32.totalorder %s540, 11
        %s542 = scalar_select %p541, %s540, 11
        %s543 = smul.addr %s542, 8
        %s544 = scalar_lea.vmem %s4, %s543
        %s545 = smul.u32 6, %s24
      $region56: #{admm_net_forward.6} parent=35 // pred_fallthru
        _
      // Predicated region
      $region57: #{admm_net_forward.6} parent=35 // pred_check
        %p546 = pneg %p174
      $region58: #{admm_net_forward.6} parent=35 // pred_check_branch
        %548 = sbr.rel (%p546) target = $region60
      $region59: #{admm_net_forward.6} parent=35 // pred_region
        %s549 = smul.u32 6, %s24
        %p550 = scmp.lt.s32.totalorder %s549, 11
        %s551 = scalar_select %p550, %s549, 11
        %s552 = smul.addr %s551, 8
        %s553 = scalar_lea.vmem %s5, %s552
        %s554 = smul.u32 6, %s24
      $region60: #{admm_net_forward.6} parent=35 // pred_fallthru
        _
      // Predicated region
      $region61: #{admm_net_forward.6} parent=35 // pred_check
        %p555 = pneg %p200
      $region62: #{admm_net_forward.6} parent=35 // pred_check_branch
        %557 = sbr.rel (%p555) target = $region64
      $region63: #{admm_net_forward.6} parent=35 // pred_region
        %s558 = smul.u32 6, %s24
        %p559 = scmp.lt.s32.totalorder %s558, 11
        %s560 = scalar_select %p559, %s558, 11
        %s561 = smul.addr %s560, 8
        %s562 = scalar_lea.vmem %s6, %s561
        %s563 = smul.u32 6, %s24
      $region64: #{admm_net_forward.6} parent=35 // pred_fallthru
        _
    $region36: #{admm_net_forward.6} parent=5 // pred_fallthru
      _
    %p564 = scmp.le.s32.totalorder 1, %s24
    %p565 = scmp.lt.s32.totalorder %s24, 3
    %p566 = pnand %p564, %p565
    %p567 = pneg %p566
    // Predicated region
    $region65: #{admm_net_forward.6} parent=5 // pred_check
      _
    $region66: #{admm_net_forward.6} parent=5 // pred_check_branch
      %569 = sbr.rel (%p566) target = $region68
    $region67: #{admm_net_forward.6} parent=5 // pred_region
      %s570 = ssub.s32 %s24, 1
      %s571 = smul.u32 6, %s29
      %p572 = scmp.lt.s32.totalorder %s571, 11
      %s573 = scalar_select %p572, %s571, 11
      %s574 = smul.addr %s573, 8
      %s575 = scalar_lea.vmem %s0, %s574
      %p576 = pneg %p50
      %p577 = pneg %p47
      %s578 = smul.u32 6, %s29
      %p579 = scmp.lt.s32.totalorder %s578, 11
      %s580 = scalar_select %p579, %s578, 11
      %s581 = smul.addr %s580, 8
      %s582 = scalar_lea.vmem %s1, %s581
      %p583 = pneg %p76
      %p584 = pneg %p73
      %s585 = smul.u32 6, %s29
      %p586 = scmp.lt.s32.totalorder %s585, 11
      %s587 = scalar_select %p586, %s585, 11
      %s588 = smul.addr %s587, 8
      %s589 = scalar_lea.vmem %s2, %s588
      %p590 = pneg %p102
      %p591 = pneg %p99
      %s592 = smul.u32 6, %s29
      %p593 = scmp.lt.s32.totalorder %s592, 11
      %s594 = scalar_select %p593, %s592, 11
      %s595 = smul.addr %s594, 8
      %s596 = scalar_lea.vmem %s3, %s595
      %p597 = pneg %p128
      %p598 = pneg %p125
      %s599 = smul.u32 6, %s29
      %p600 = scmp.lt.s32.totalorder %s599, 11
      %s601 = scalar_select %p600, %s599, 11
      %s602 = smul.addr %s601, 8
      %s603 = scalar_lea.vmem %s4, %s602
      %p604 = pneg %p154
      %p605 = pneg %p151
      %s606 = smul.u32 6, %s29
      %p607 = scmp.lt.s32.totalorder %s606, 11
      %s608 = scalar_select %p607, %s606, 11
      %s609 = smul.addr %s608, 8
      %s610 = scalar_lea.vmem %s5, %s609
      %p611 = pneg %p180
      %p612 = pneg %p177
      %s613 = smul.u32 6, %s29
      %p614 = scmp.lt.s32.totalorder %s613, 11
      %s615 = scalar_select %p614, %s613, 11
      %s616 = smul.addr %s615, 8
      %s617 = scalar_lea.vmem %s6, %s616
      %p618 = pneg %p206
      %p619 = pneg %p203
      %p620 = pneg %p227
      %p621 = pneg %p224
      %p622 = pneg %p248
      %p623 = pneg %p245
      %p624 = pneg %p269
      %p625 = pneg %p266
      %p626 = pneg %p290
      %p627 = pneg %p287
      %p628 = pneg %p311
      %p629 = pneg %p308
      %p630 = pneg %p337
      %p631 = pneg %p334
      %s632 = smul.u32 6, %s29
      %p633 = scmp.lt.s32.totalorder %s632, 11
      %s634 = scalar_select %p633, %s632, 11
      %s635 = smul.addr %s634, 8
      %s636 = scalar_lea.vmem %s12, %s635
      %p637 = pneg %p363
      %p638 = pneg %p360
      %s639 = smul.u32 6, %s29
      %p640 = scmp.lt.s32.totalorder %s639, 11
      %s641 = scalar_select %p640, %s639, 11
      %s642 = smul.addr %s641, 8
      %s643 = scalar_lea.vmem %s13, %s642
      %p644 = pneg %p389
      %p645 = pneg %p386
      %s646 = smul.u32 6, %s29
      %p647 = scmp.lt.s32.totalorder %s646, 11
      %s648 = scalar_select %p647, %s646, 11
      %s649 = smul.addr %s648, 8
      %s650 = scalar_lea.vmem %s14, %s649
      %p651 = pneg %p415
      %p652 = pneg %p412
      %s653 = smul.u32 6, %s29
      %p654 = scmp.lt.s32.totalorder %s653, 11
      %s655 = scalar_select %p654, %s653, 11
      %s656 = smul.addr %s655, 8
      %s657 = scalar_lea.vmem %s15, %s656
      %p658 = pneg %p441
      %p659 = pneg %p438
      %s660 = smul.u32 6, %s29
      %p661 = scmp.lt.s32.totalorder %s660, 11
      %s662 = scalar_select %p661, %s660, 11
      %s663 = smul.addr %s662, 8
      %s664 = scalar_lea.vmem %s16, %s663
      %p665 = pneg %p467
      %p666 = pneg %p464
      %s667 = smul.u32 6, %s29
      %p668 = scmp.lt.s32.totalorder %s667, 11
      %s669 = scalar_select %p668, %s667, 11
      %s670 = smul.addr %s669, 8
      %s671 = scalar_lea.vmem %s17, %s670
      %s672 = smul.u32 6, %s29
      %p673 = scmp.lt.s32.totalorder %s672, 11
      %s674 = scalar_select %p673, %s672, 11
      %s675 = smul.addr %s674, 8
      %s676 = scalar_lea.vmem %s0, %s675
      %s677 = smul.u32 6, %s29
      %s678 = smul.u32 6, %s29
      %p679 = scmp.lt.s32.totalorder %s678, 11
      %s680 = scalar_select %p679, %s678, 11
      %s681 = smul.addr %s680, 8
      %s682 = scalar_lea.vmem %s1, %s681
      %s683 = smul.u32 6, %s29
      %s684 = smul.u32 6, %s29
      %p685 = scmp.lt.s32.totalorder %s684, 11
      %s686 = scalar_select %p685, %s684, 11
      %s687 = smul.addr %s686, 8
      %s688 = scalar_lea.vmem %s2, %s687
      %s689 = smul.u32 6, %s29
      %s690 = smul.u32 6, %s29
      %p691 = scmp.lt.s32.totalorder %s690, 11
      %s692 = scalar_select %p691, %s690, 11
      %s693 = smul.addr %s692, 8
      %s694 = scalar_lea.vmem %s3, %s693
      %s695 = smul.u32 6, %s29
      %s696 = smul.u32 6, %s29
      %p697 = scmp.lt.s32.totalorder %s696, 11
      %s698 = scalar_select %p697, %s696, 11
      %s699 = smul.addr %s698, 8
      %s700 = scalar_lea.vmem %s4, %s699
      %s701 = smul.u32 6, %s29
      %s702 = smul.u32 6, %s29
      %p703 = scmp.lt.s32.totalorder %s702, 11
      %s704 = scalar_select %p703, %s702, 11
      %s705 = smul.addr %s704, 8
      %s706 = scalar_lea.vmem %s5, %s705
      %s707 = smul.u32 6, %s29
      %s708 = smul.u32 6, %s29
      %p709 = scmp.lt.s32.totalorder %s708, 11
      %s710 = scalar_select %p709, %s708, 11
      %s711 = smul.addr %s710, 8
      %s712 = scalar_lea.vmem %s6, %s711
      %s713 = smul.u32 6, %s29
      %s714 = smul.u32 6, %s29
      %p715 = scmp.lt.s32.totalorder %s714, 11
      %s716 = scalar_select %p715, %s714, 11
      %s717 = smul.addr %s716, 8
      %s718 = scalar_lea.vmem %s12, %s717
      %s719 = smul.u32 6, %s29
      %s720 = smul.u32 6, %s29
      %p721 = scmp.lt.s32.totalorder %s720, 11
      %s722 = scalar_select %p721, %s720, 11
      %s723 = smul.addr %s722, 8
      %s724 = scalar_lea.vmem %s13, %s723
      %s725 = smul.u32 6, %s29
      %s726 = smul.u32 6, %s29
      %p727 = scmp.lt.s32.totalorder %s726, 11
      %s728 = scalar_select %p727, %s726, 11
      %s729 = smul.addr %s728, 8
      %s730 = scalar_lea.vmem %s14, %s729
      %s731 = smul.u32 6, %s29
      %s732 = smul.u32 6, %s29
      %p733 = scmp.lt.s32.totalorder %s732, 11
      %s734 = scalar_select %p733, %s732, 11
      %s735 = smul.addr %s734, 8
      %s736 = scalar_lea.vmem %s15, %s735
      %s737 = smul.u32 6, %s29
      %s738 = smul.u32 6, %s29
      %p739 = scmp.lt.s32.totalorder %s738, 11
      %s740 = scalar_select %p739, %s738, 11
      %s741 = smul.addr %s740, 8
      %s742 = scalar_lea.vmem %s16, %s741
      %s743 = smul.u32 6, %s29
      %s744 = smul.u32 6, %s29
      %p745 = scmp.lt.s32.totalorder %s744, 11
      %s746 = scalar_select %p745, %s744, 11
      %s747 = smul.addr %s746, 8
      %s748 = scalar_lea.vmem %s17, %s747
      %s749 = smul.u32 6, %s29
      %v750 = vld [vmem:[%s676] sm:$0xff]
      %v751 = vld [vmem:[%s676 + $0x8] sm:$0xff]
      %v752 = vld [vmem:[%s676 + $0x10] sm:$0xff]
      %v753 = vld [vmem:[%s676 + $0x18] sm:$0xff]
      %v754 = vld [vmem:[%s676 + $0x20] sm:$0xff]
      %v755 = vld [vmem:[%s676 + $0x28] sm:$0xff]
      %v756 = vld [vmem:[%s682] sm:$0xff]
      %v757 = vld [vmem:[%s682 + $0x8] sm:$0xff]
      %v758 = vld [vmem:[%s682 + $0x10] sm:$0xff]
      %v759 = vld [vmem:[%s682 + $0x18] sm:$0xff]
      %v760 = vld [vmem:[%s682 + $0x20] sm:$0xff]
      %v761 = vld [vmem:[%s682 + $0x28] sm:$0xff]
      %v762 = vld [vmem:[%s688] sm:$0xff]
      %v763 = vld [vmem:[%s688 + $0x8] sm:$0xff]
      %v764 = vld [vmem:[%s688 + $0x10] sm:$0xff]
      %v765 = vld [vmem:[%s688 + $0x18] sm:$0xff]
      %v766 = vld [vmem:[%s688 + $0x20] sm:$0xff]
      %v767 = vld [vmem:[%s688 + $0x28] sm:$0xff]
      %v768 = vld [vmem:[%s694] sm:$0xff]
      %v769 = vld [vmem:[%s694 + $0x8] sm:$0xff]
      %v770 = vld [vmem:[%s694 + $0x10] sm:$0xff]
      %v771 = vld [vmem:[%s694 + $0x18] sm:$0xff]
      %v772 = vld [vmem:[%s694 + $0x20] sm:$0xff]
      %v773 = vld [vmem:[%s694 + $0x28] sm:$0xff]
      %v774 = vld [vmem:[%s700] sm:$0xff]
      %v775 = vld [vmem:[%s700 + $0x8] sm:$0xff]
      %v776 = vld [vmem:[%s700 + $0x10] sm:$0xff]
      %v777 = vld [vmem:[%s700 + $0x18] sm:$0xff]
      %v778 = vld [vmem:[%s700 + $0x20] sm:$0xff]
      %v779 = vld [vmem:[%s700 + $0x28] sm:$0xff]
      %v780 = vld [vmem:[%s706] sm:$0xff]
      %v781 = vld [vmem:[%s706 + $0x8] sm:$0xff]
      %v782 = vld [vmem:[%s706 + $0x10] sm:$0xff]
      %v783 = vld [vmem:[%s706 + $0x18] sm:$0xff]
      %v784 = vld [vmem:[%s706 + $0x20] sm:$0xff]
      %v785 = vld [vmem:[%s706 + $0x28] sm:$0xff]
      %v786 = vld [vmem:[%s712] sm:$0xff]
      %v787 = vld [vmem:[%s712 + $0x8] sm:$0xff]
      %v788 = vld [vmem:[%s712 + $0x10] sm:$0xff]
      %v789 = vld [vmem:[%s712 + $0x18] sm:$0xff]
      %v790 = vld [vmem:[%s712 + $0x20] sm:$0xff]
      %v791 = vld [vmem:[%s712 + $0x28] sm:$0xff]
      %v792 = vld [vmem:[%s7] sm:$0xff]
      %v793 = vld [vmem:[%s7 + $0x8] sm:$0xff]
      %v794 = vld [vmem:[%s7 + $0x10] sm:$0xff]
      %v795 = vld [vmem:[%s7 + $0x18] sm:$0xff]
      %v796 = vld [vmem:[%s7 + $0x20] sm:$0xff]
      %v797 = vld [vmem:[%s7 + $0x28] sm:$0xff]
      %v798 = vld [vmem:[%s8] sm:$0xff]
      %v799 = vld [vmem:[%s8 + $0x8] sm:$0xff]
      %v800 = vld [vmem:[%s8 + $0x10] sm:$0xff]
      %v801 = vld [vmem:[%s8 + $0x18] sm:$0xff]
      %v802 = vld [vmem:[%s8 + $0x20] sm:$0xff]
      %v803 = vld [vmem:[%s8 + $0x28] sm:$0xff]
      %v804 = vld [vmem:[%s9] sm:$0xff]
      %v805 = vld [vmem:[%s9 + $0x8] sm:$0xff]
      %v806 = vld [vmem:[%s9 + $0x10] sm:$0xff]
      %v807 = vld [vmem:[%s9 + $0x18] sm:$0xff]
      %v808 = vld [vmem:[%s9 + $0x20] sm:$0xff]
      %v809 = vld [vmem:[%s9 + $0x28] sm:$0xff]
      %v810 = vld [vmem:[%s10] sm:$0x1]
      %v811 = vld [vmem:[%s11] sm:$0x1]
      %v812 = vrot.slane %v750, 1
      %v813 = vrot.slane %v751, 1
      %v814 = vrot.slane %v752, 1
      %v815 = vrot.slane %v753, 1
      %v816 = vrot.slane %v754, 1
      %v817 = vrot.slane %v755, 1
      %v818 = vlaneseq
      %v819 = vshrl.u32 %v818, 7
      %vm820 = vcmp.lt.s32.totalorder %v819, 7
      %v821 = vsel %vm820, %v816, %v817
      %v822 = vsel %vm820, %v815, %v816
      %v823 = vsel %vm820, %v814, %v815
      %v824 = vsel %vm820, %v813, %v814
      %v825 = vsel %vm820, %v812, %v813
      %v826 = vsel %vm820, %v817, %v812
      %v827 = vsub.f32 %v750, %v825
      %v828 = vsub.f32 %v751, %v824
      %v829 = vsub.f32 %v752, %v823
      %v830 = vsub.f32 %v753, %v822
      %v831 = vsub.f32 %v754, %v821
      %v832 = vsub.f32 %v755, %v826
      %834 = vset.pattern.permute.xlu0 0
      %835 = vperm.xlu0 %834, %v798
      %v836 = vpop.permute.xlu0 %835
      %839 = vset.pattern.permute.xlu0 0
      %840 = vperm.xlu0 %839, %v799
      %v841 = vpop.permute.xlu0 %840
      %844 = vset.pattern.permute.xlu0 0
      %845 = vperm.xlu0 %844, %v800
      %v846 = vpop.permute.xlu0 %845
      %849 = vset.pattern.permute.xlu0 0
      %850 = vperm.xlu0 %849, %v801
      %v851 = vpop.permute.xlu0 %850
      %854 = vset.pattern.permute.xlu0 0
      %855 = vperm.xlu0 %854, %v802
      %v856 = vpop.permute.xlu0 %855
      %859 = vset.pattern.permute.xlu0 0
      %860 = vperm.xlu0 %859, %v803
      %v861 = vpop.permute.xlu0 %860
      %v863 = vmul.f32 %v827, %v836
      %v864 = vmul.f32 %v828, %v841
      %v865 = vmul.f32 %v829, %v846
      %v866 = vmul.f32 %v830, %v851
      %v867 = vmul.f32 %v831, %v856
      %v868 = vmul.f32 %v832, %v861
      %869 = vrot.lane.b32.xlu0 %v750, 127
      %v870 = vpop.permute.xlu0 %869
      %871 = vrot.lane.b32.xlu0 %v751, 127
      %v872 = vpop.permute.xlu0 %871
      %873 = vrot.lane.b32.xlu0 %v752, 127
      %v874 = vpop.permute.xlu0 %873
      %875 = vrot.lane.b32.xlu0 %v753, 127
      %v876 = vpop.permute.xlu0 %875
      %877 = vrot.lane.b32.xlu0 %v754, 127
      %v878 = vpop.permute.xlu0 %877
      %879 = vrot.lane.b32.xlu0 %v755, 127
      %v880 = vpop.permute.xlu0 %879
      %v881 = vsub.f32 %v750, %v870
      %v882 = vsub.f32 %v751, %v872
      %v883 = vsub.f32 %v752, %v874
      %v884 = vsub.f32 %v753, %v876
      %v885 = vsub.f32 %v754, %v878
      %v886 = vsub.f32 %v755, %v880
      %v888 = vlaneseq
      %v889 = vshrl.u32 %v888, 7
      %v890 = vsub.s32 0, %v889
      %v891 = vrot.slane %v810, %v890
      %v893 = vmul.f32 %v881, %v891
      %v894 = vmul.f32 %v882, %v891
      %v895 = vmul.f32 %v883, %v891
      %v896 = vmul.f32 %v884, %v891
      %v897 = vmul.f32 %v885, %v891
      %v898 = vmul.f32 %v886, %v891
      %v899 = vmul.f32 %v756, 10000.0
      %v900 = vmul.f32 %v757, 10000.0
      %v901 = vmul.f32 %v758, 10000.0
      %v902 = vmul.f32 %v759, 10000.0
      %v903 = vmul.f32 %v760, 10000.0
      %v904 = vmul.f32 %v761, 10000.0
      %v905 = vmul.f32 %v762, 10000.0
      %v906 = vmul.f32 %v763, 10000.0
      %v907 = vmul.f32 %v764, 10000.0
      %v908 = vmul.f32 %v765, 10000.0
      %v909 = vmul.f32 %v766, 10000.0
      %v910 = vmul.f32 %v767, 10000.0
      %v911 = vmul.f32 %v768, 10000.0
      %v912 = vmul.f32 %v769, 10000.0
      %v913 = vmul.f32 %v770, 10000.0
      %v914 = vmul.f32 %v771, 10000.0
      %v915 = vmul.f32 %v772, 10000.0
      %v916 = vmul.f32 %v773, 10000.0
      %v917 = vmul.f32 %v774, 10000.0
      %v918 = vmul.f32 %v775, 10000.0
      %v919 = vmul.f32 %v776, 10000.0
      %v920 = vmul.f32 %v777, 10000.0
      %v921 = vmul.f32 %v778, 10000.0
      %v922 = vmul.f32 %v779, 10000.0
      %v923 = vadd.f32 %v863, %v905
      %v924 = vadd.f32 %v864, %v906
      %v925 = vadd.f32 %v865, %v907
      %v926 = vadd.f32 %v866, %v908
      %v927 = vadd.f32 %v867, %v909
      %v928 = vadd.f32 %v868, %v910
      %v929 = vadd.f32 %v893, %v911
      %v930 = vadd.f32 %v894, %v912
      %v931 = vadd.f32 %v895, %v913
      %v932 = vadd.f32 %v896, %v914
      %v933 = vadd.f32 %v897, %v915
      %v934 = vadd.f32 %v898, %v916
      %v935 = vmul.f32 %v923, %v923
      %v936 = vmul.f32 %v924, %v924
      %v937 = vmul.f32 %v925, %v925
      %v938 = vmul.f32 %v926, %v926
      %v939 = vmul.f32 %v927, %v927
      %v940 = vmul.f32 %v928, %v928
      %v941 = vmul.f32 %v929, %v929
      %v942 = vmul.f32 %v930, %v930
      %v943 = vmul.f32 %v931, %v931
      %v944 = vmul.f32 %v932, %v932
      %v945 = vmul.f32 %v933, %v933
      %v946 = vmul.f32 %v934, %v934
      %v947 = vadd.f32 %v935, %v941
      %v948 = vadd.f32 %v936, %v942
      %v949 = vadd.f32 %v937, %v943
      %v950 = vadd.f32 %v938, %v944
      %v951 = vadd.f32 %v939, %v945
      %v952 = vadd.f32 %v940, %v946
      %v953 = vadd.f32 %v947, 1.11e-14
      %v954 = vadd.f32 %v948, 1.11e-14
      %v955 = vadd.f32 %v949, 1.11e-14
      %v956 = vadd.f32 %v950, 1.11e-14
      %v957 = vadd.f32 %v951, 1.11e-14
      %v958 = vadd.f32 %v952, 1.11e-14
      %v959 = vrsqrt.pop %v953
      %v960 = vmul.f32 %v953, %v959
      %vm961 = vcmp.eq.f32.partialorder %v953, inf
      %v962 = vsel %vm961, %v953, %v960
      %vm963 = vcmp.eq.f32.partialorder %v953, 0.0
      %v964 = vand.u32 %v953, 2147483648
      %v965 = vsel %vm963, %v964, %v962
      %v966 = vrsqrt.pop %v954
      %v967 = vmul.f32 %v954, %v966
      %vm968 = vcmp.eq.f32.partialorder %v954, inf
      %v969 = vsel %vm968, %v954, %v967
      %vm970 = vcmp.eq.f32.partialorder %v954, 0.0
      %v971 = vand.u32 %v954, 2147483648
      %v972 = vsel %vm970, %v971, %v969
      %v973 = vrsqrt.pop %v955
      %v974 = vmul.f32 %v955, %v973
      %vm975 = vcmp.eq.f32.partialorder %v955, inf
      %v976 = vsel %vm975, %v955, %v974
      %vm977 = vcmp.eq.f32.partialorder %v955, 0.0
      %v978 = vand.u32 %v955, 2147483648
      %v979 = vsel %vm977, %v978, %v976
      %v980 = vrsqrt.pop %v956
      %v981 = vmul.f32 %v956, %v980
      %vm982 = vcmp.eq.f32.partialorder %v956, inf
      %v983 = vsel %vm982, %v956, %v981
      %vm984 = vcmp.eq.f32.partialorder %v956, 0.0
      %v985 = vand.u32 %v956, 2147483648
      %v986 = vsel %vm984, %v985, %v983
      %v987 = vrsqrt.pop %v957
      %v988 = vmul.f32 %v957, %v987
      %vm989 = vcmp.eq.f32.partialorder %v957, inf
      %v990 = vsel %vm989, %v957, %v988
      %vm991 = vcmp.eq.f32.partialorder %v957, 0.0
      %v992 = vand.u32 %v957, 2147483648
      %v993 = vsel %vm991, %v992, %v990
      %v994 = vrsqrt.pop %v958
      %v995 = vmul.f32 %v958, %v994
      %vm996 = vcmp.eq.f32.partialorder %v958, inf
      %v997 = vsel %vm996, %v958, %v995
      %vm998 = vcmp.eq.f32.partialorder %v958, 0.0
      %v999 = vand.u32 %v958, 2147483648
      %v1000 = vsel %vm998, %v999, %v997
      %v1001 = vsub.f32 %v965, 0.002
      %v1002 = vsub.f32 %v972, 0.002
      %v1003 = vsub.f32 %v979, 0.002
      %v1004 = vsub.f32 %v986, 0.002
      %v1005 = vsub.f32 %v993, 0.002
      %v1006 = vsub.f32 %v1000, 0.002
      %v1007 = vmax.f32 %v1001, 0.0
      %v1008 = vmax.f32 %v1002, 0.0
      %v1009 = vmax.f32 %v1003, 0.0
      %v1010 = vmax.f32 %v1004, 0.0
      %v1011 = vmax.f32 %v1005, 0.0
      %v1012 = vmax.f32 %v1006, 0.0
      %v1013 = vadd.f32 %v1007, 0.002
      %v1014 = vadd.f32 %v1008, 0.002
      %v1015 = vadd.f32 %v1009, 0.002
      %v1016 = vadd.f32 %v1010, 0.002
      %v1017 = vadd.f32 %v1011, 0.002
      %v1018 = vadd.f32 %v1012, 0.002
      %v1019 = vrcp.pop %v1013
      %v1020 = vrcp.pop %v1014
      %v1021 = vrcp.pop %v1015
      %v1022 = vrcp.pop %v1016
      %v1023 = vrcp.pop %v1017
      %v1024 = vrcp.pop %v1018
      %v1025 = vmul.f32 %v1007, %v1019
      %v1026 = vmul.f32 %v1008, %v1020
      %v1027 = vmul.f32 %v1009, %v1021
      %v1028 = vmul.f32 %v1010, %v1022
      %v1029 = vmul.f32 %v1011, %v1023
      %v1030 = vmul.f32 %v1012, %v1024
      %v1031 = vmul.f32 %v923, %v1025
      %v1032 = vmul.f32 %v924, %v1026
      %v1033 = vmul.f32 %v925, %v1027
      %v1034 = vmul.f32 %v926, %v1028
      %v1035 = vmul.f32 %v927, %v1029
      %v1036 = vmul.f32 %v928, %v1030
      %v1037 = vmul.f32 %v929, %v1025
      %v1038 = vmul.f32 %v930, %v1026
      %v1039 = vmul.f32 %v931, %v1027
      %v1040 = vmul.f32 %v932, %v1028
      %v1041 = vmul.f32 %v933, %v1029
      %v1042 = vmul.f32 %v934, %v1030
      %v1043 = vmul.f32 %v780, 0.0001
      %v1044 = vmul.f32 %v781, 0.0001
      %v1045 = vmul.f32 %v782, 0.0001
      %v1046 = vmul.f32 %v783, 0.0001
      %v1047 = vmul.f32 %v784, 0.0001
      %v1048 = vmul.f32 %v785, 0.0001
      %v1049 = vadd.f32 %v756, %v1043
      %v1050 = vadd.f32 %v757, %v1044
      %v1051 = vadd.f32 %v758, %v1045
      %v1052 = vadd.f32 %v759, %v1046
      %v1053 = vadd.f32 %v760, %v1047
      %v1054 = vadd.f32 %v761, %v1048
      %v1055 = vadd.f32 %v1049, %v786
      %v1056 = vadd.f32 %v1050, %v787
      %v1057 = vadd.f32 %v1051, %v788
      %v1058 = vadd.f32 %v1052, %v789
      %v1059 = vadd.f32 %v1053, %v790
      %v1060 = vadd.f32 %v1054, %v791
      %v1061 = vmul.f32 %v792, %v1055
      %v1062 = vmul.f32 %v793, %v1056
      %v1063 = vmul.f32 %v794, %v1057
      %v1064 = vmul.f32 %v795, %v1058
      %v1065 = vmul.f32 %v796, %v1059
      %v1066 = vmul.f32 %v797, %v1060
      %v1067 = vadd.f32 %v917, %v750
      %v1068 = vadd.f32 %v918, %v751
      %v1069 = vadd.f32 %v919, %v752
      %v1070 = vadd.f32 %v920, %v753
      %v1071 = vadd.f32 %v921, %v754
      %v1072 = vadd.f32 %v922, %v755
      %v1073 = vmax.f32 %v1067, 0.0
      %v1074 = vmax.f32 %v1068, 0.0
      %v1075 = vmax.f32 %v1069, 0.0
      %v1076 = vmax.f32 %v1070, 0.0
      %v1077 = vmax.f32 %v1071, 0.0
      %v1078 = vmax.f32 %v1072, 0.0
      %v1079 = vsub.f32 %v1031, %v905
      %v1080 = vsub.f32 %v1032, %v906
      %v1081 = vsub.f32 %v1033, %v907
      %v1082 = vsub.f32 %v1034, %v908
      %v1083 = vsub.f32 %v1035, %v909
      %v1084 = vsub.f32 %v1036, %v910
      %v1085 = vsub.f32 %v1037, %v911
      %v1086 = vsub.f32 %v1038, %v912
      %v1087 = vsub.f32 %v1039, %v913
      %v1088 = vsub.f32 %v1040, %v914
      %v1089 = vsub.f32 %v1041, %v915
      %v1090 = vsub.f32 %v1042, %v916
      %v1091 = vrot.slane %v1079, 7
      %v1092 = vrot.slane %v1080, 7
      %v1093 = vrot.slane %v1081, 7
      %v1094 = vrot.slane %v1082, 7
      %v1095 = vrot.slane %v1083, 7
      %v1096 = vrot.slane %v1084, 7
      %vm1097 = vcmp.lt.s32.totalorder %v819, 1
      %v1098 = vsel %vm1097, %v1095, %v1096
      %v1099 = vsel %vm1097, %v1094, %v1095
      %v1100 = vsel %vm1097, %v1093, %v1094
      %v1101 = vsel %vm1097, %v1092, %v1093
      %v1102 = vsel %vm1097, %v1091, %v1092
      %v1103 = vsel %vm1097, %v1096, %v1091
      %1105 = vset.pattern.permute.xlu0 0
      %1106 = vperm.xlu0 %1105, %v804
      %v1107 = vpop.permute.xlu0 %1106
      %1110 = vset.pattern.permute.xlu0 0
      %1111 = vperm.xlu0 %1110, %v805
      %v1112 = vpop.permute.xlu0 %1111
      %1115 = vset.pattern.permute.xlu0 0
      %1116 = vperm.xlu0 %1115, %v806
      %v1117 = vpop.permute.xlu0 %1116
      %1120 = vset.pattern.permute.xlu0 0
      %1121 = vperm.xlu0 %1120, %v807
      %v1122 = vpop.permute.xlu0 %1121
      %1125 = vset.pattern.permute.xlu0 0
      %1126 = vperm.xlu0 %1125, %v808
      %v1127 = vpop.permute.xlu0 %1126
      %1130 = vset.pattern.permute.xlu0 0
      %1131 = vperm.xlu0 %1130, %v809
      %v1132 = vpop.permute.xlu0 %1131
      %v1134 = vmul.f32 %v1103, %v1107
      %v1135 = vmul.f32 %v1102, %v1112
      %v1136 = vmul.f32 %v1101, %v1117
      %v1137 = vmul.f32 %v1100, %v1122
      %v1138 = vmul.f32 %v1099, %v1127
      %v1139 = vmul.f32 %v1098, %v1132
      %v1140 = vsub.f32 %v1079, %v1134
      %v1141 = vsub.f32 %v1080, %v1135
      %v1142 = vsub.f32 %v1081, %v1136
      %v1143 = vsub.f32 %v1082, %v1137
      %v1144 = vsub.f32 %v1083, %v1138
      %v1145 = vsub.f32 %v1084, %v1139
      %1146 = vrot.lane.b32.xlu0 %v1085, 1
      %v1147 = vpop.permute.xlu0 %1146
      %1148 = vrot.lane.b32.xlu0 %v1086, 1
      %v1149 = vpop.permute.xlu0 %1148
      %1150 = vrot.lane.b32.xlu0 %v1087, 1
      %v1151 = vpop.permute.xlu0 %1150
      %1152 = vrot.lane.b32.xlu0 %v1088, 1
      %v1153 = vpop.permute.xlu0 %1152
      %1154 = vrot.lane.b32.xlu0 %v1089, 1
      %v1155 = vpop.permute.xlu0 %1154
      %1156 = vrot.lane.b32.xlu0 %v1090, 1
      %v1157 = vpop.permute.xlu0 %1156
      %v1159 = vlaneseq
      %v1160 = vshrl.u32 %v1159, 7
      %v1161 = vsub.s32 0, %v1160
      %v1162 = vrot.slane %v811, %v1161
      %v1164 = vmul.f32 %v1147, %v1162
      %v1165 = vmul.f32 %v1149, %v1162
      %v1166 = vmul.f32 %v1151, %v1162
      %v1167 = vmul.f32 %v1153, %v1162
      %v1168 = vmul.f32 %v1155, %v1162
      %v1169 = vmul.f32 %v1157, %v1162
      %v1170 = vsub.f32 %v1085, %v1164
      %v1171 = vsub.f32 %v1086, %v1165
      %v1172 = vsub.f32 %v1087, %v1166
      %v1173 = vsub.f32 %v1088, %v1167
      %v1174 = vsub.f32 %v1089, %v1168
      %v1175 = vsub.f32 %v1090, %v1169
      %v1176 = vadd.f32 %v1140, %v1170
      %v1177 = vadd.f32 %v1141, %v1171
      %v1178 = vadd.f32 %v1142, %v1172
      %v1179 = vadd.f32 %v1143, %v1173
      %v1180 = vadd.f32 %v1144, %v1174
      %v1181 = vadd.f32 %v1145, %v1175
      %v1182 = vsub.f32 %v1073, %v917
      %v1183 = vsub.f32 %v1074, %v918
      %v1184 = vsub.f32 %v1075, %v919
      %v1185 = vsub.f32 %v1076, %v920
      %v1186 = vsub.f32 %v1077, %v921
      %v1187 = vsub.f32 %v1078, %v922
      %v1188 = vmul.f32 %v1182, 0.0001
      %v1189 = vmul.f32 %v1183, 0.0001
      %v1190 = vmul.f32 %v1184, 0.0001
      %v1191 = vmul.f32 %v1185, 0.0001
      %v1192 = vmul.f32 %v1186, 0.0001
      %v1193 = vmul.f32 %v1187, 0.0001
      %v1194 = vmul.f32 %v1176, 0.0001
      %v1195 = vmul.f32 %v1177, 0.0001
      %v1196 = vmul.f32 %v1178, 0.0001
      %v1197 = vmul.f32 %v1179, 0.0001
      %v1198 = vmul.f32 %v1180, 0.0001
      %v1199 = vmul.f32 %v1181, 0.0001
      %v1200 = vadd.f32 %v1188, %v1194
      %v1201 = vadd.f32 %v1189, %v1195
      %v1202 = vadd.f32 %v1190, %v1196
      %v1203 = vadd.f32 %v1191, %v1197
      %v1204 = vadd.f32 %v1192, %v1198
      %v1205 = vadd.f32 %v1193, %v1199
      %1206 = vst [vmem:[%s718] sm:$0xff] %v1031
      %1207 = vst [vmem:[%s718 + $0x8] sm:$0xff] %v1032
      %1208 = vst [vmem:[%s718 + $0x10] sm:$0xff] %v1033
      %1209 = vst [vmem:[%s718 + $0x18] sm:$0xff] %v1034
      %1210 = vst [vmem:[%s718 + $0x20] sm:$0xff] %v1035
      %1211 = vst [vmem:[%s718 + $0x28] sm:$0xff] %v1036
      %1212 = vst [vmem:[%s724] sm:$0xff] %v1037
      %1213 = vst [vmem:[%s724 + $0x8] sm:$0xff] %v1038
      %1214 = vst [vmem:[%s724 + $0x10] sm:$0xff] %v1039
      %1215 = vst [vmem:[%s724 + $0x18] sm:$0xff] %v1040
      %1216 = vst [vmem:[%s724 + $0x20] sm:$0xff] %v1041
      %1217 = vst [vmem:[%s724 + $0x28] sm:$0xff] %v1042
      %1218 = vst [vmem:[%s730] sm:$0xff] %v1061
      %1219 = vst [vmem:[%s730 + $0x8] sm:$0xff] %v1062
      %1220 = vst [vmem:[%s730 + $0x10] sm:$0xff] %v1063
      %1221 = vst [vmem:[%s730 + $0x18] sm:$0xff] %v1064
      %1222 = vst [vmem:[%s730 + $0x20] sm:$0xff] %v1065
      %1223 = vst [vmem:[%s730 + $0x28] sm:$0xff] %v1066
      %1224 = vst [vmem:[%s736] sm:$0xff] %v1073
      %1225 = vst [vmem:[%s736 + $0x8] sm:$0xff] %v1074
      %1226 = vst [vmem:[%s736 + $0x10] sm:$0xff] %v1075
      %1227 = vst [vmem:[%s736 + $0x18] sm:$0xff] %v1076
      %1228 = vst [vmem:[%s736 + $0x20] sm:$0xff] %v1077
      %1229 = vst [vmem:[%s736 + $0x28] sm:$0xff] %v1078
      %1230 = vst [vmem:[%s742] sm:$0xff] %v1200
      %1231 = vst [vmem:[%s742 + $0x8] sm:$0xff] %v1201
      %1232 = vst [vmem:[%s742 + $0x10] sm:$0xff] %v1202
      %1233 = vst [vmem:[%s742 + $0x18] sm:$0xff] %v1203
      %1234 = vst [vmem:[%s742 + $0x20] sm:$0xff] %v1204
      %1235 = vst [vmem:[%s742 + $0x28] sm:$0xff] %v1205
      %v1236 = vsub.f32 %v1061, %v899
      %v1237 = vsub.f32 %v1062, %v900
      %v1238 = vsub.f32 %v1063, %v901
      %v1239 = vsub.f32 %v1064, %v902
      %v1240 = vsub.f32 %v1065, %v903
      %v1241 = vsub.f32 %v1066, %v904
      %1242 = vst [vmem:[%s748] sm:$0xff] %v1236
      %1243 = vst [vmem:[%s748 + $0x8] sm:$0xff] %v1237
      %1244 = vst [vmem:[%s748 + $0x10] sm:$0xff] %v1238
      %1245 = vst [vmem:[%s748 + $0x18] sm:$0xff] %v1239
      %1246 = vst [vmem:[%s748 + $0x20] sm:$0xff] %v1240
      %1247 = vst [vmem:[%s748 + $0x28] sm:$0xff] %v1241
      %s1248 = smul.u32 6, %s29
      %p1249 = scmp.lt.s32.totalorder %s1248, 11
      %s1250 = scalar_select %p1249, %s1248, 11
      %s1251 = smul.addr %s1250, 8
      %s1252 = scalar_lea.vmem %s12, %s1251
      %s1253 = smul.u32 6, %s29
      %p1254 = scmp.lt.s32.totalorder %s1253, 11
      %s1255 = scalar_select %p1254, %s1253, 11
      %s1256 = smul.addr %s1255, 8
      %s1257 = scalar_lea.vmem %s13, %s1256
      %s1258 = smul.u32 6, %s29
      %p1259 = scmp.lt.s32.totalorder %s1258, 11
      %s1260 = scalar_select %p1259, %s1258, 11
      %s1261 = smul.addr %s1260, 8
      %s1262 = scalar_lea.vmem %s14, %s1261
      %s1263 = smul.u32 6, %s29
      %p1264 = scmp.lt.s32.totalorder %s1263, 11
      %s1265 = scalar_select %p1264, %s1263, 11
      %s1266 = smul.addr %s1265, 8
      %s1267 = scalar_lea.vmem %s15, %s1266
      %s1268 = smul.u32 6, %s29
      %p1269 = scmp.lt.s32.totalorder %s1268, 11
      %s1270 = scalar_select %p1269, %s1268, 11
      %s1271 = smul.addr %s1270, 8
      %s1272 = scalar_lea.vmem %s16, %s1271
      %s1273 = smul.u32 6, %s29
      %p1274 = scmp.lt.s32.totalorder %s1273, 11
      %s1275 = scalar_select %p1274, %s1273, 11
      %s1276 = smul.addr %s1275, 8
      %s1277 = scalar_lea.vmem %s17, %s1276
      // Predicated region
      $region69: #{admm_net_forward.6} parent=67 // pred_check
        %p1278 = pneg %p334
      $region70: #{admm_net_forward.6} parent=67 // pred_check_branch
        %1280 = sbr.rel (%p1278) target = $region72
      $region71: #{admm_net_forward.6} parent=67 // pred_region
        %s1281 = smul.u32 6, %s29
      $region72: #{admm_net_forward.6} parent=67 // pred_fallthru
        _
      // Predicated region
      $region73: #{admm_net_forward.6} parent=67 // pred_check
        %p1282 = pneg %p360
      $region74: #{admm_net_forward.6} parent=67 // pred_check_branch
        %1284 = sbr.rel (%p1282) target = $region76
      $region75: #{admm_net_forward.6} parent=67 // pred_region
        %s1285 = smul.u32 6, %s29
      $region76: #{admm_net_forward.6} parent=67 // pred_fallthru
        _
      // Predicated region
      $region77: #{admm_net_forward.6} parent=67 // pred_check
        %p1286 = pneg %p386
      $region78: #{admm_net_forward.6} parent=67 // pred_check_branch
        %1288 = sbr.rel (%p1286) target = $region80
      $region79: #{admm_net_forward.6} parent=67 // pred_region
        %s1289 = smul.u32 6, %s29
      $region80: #{admm_net_forward.6} parent=67 // pred_fallthru
        _
      // Predicated region
      $region81: #{admm_net_forward.6} parent=67 // pred_check
        %p1290 = pneg %p412
      $region82: #{admm_net_forward.6} parent=67 // pred_check_branch
        %1292 = sbr.rel (%p1290) target = $region84
      $region83: #{admm_net_forward.6} parent=67 // pred_region
        %s1293 = smul.u32 6, %s29
      $region84: #{admm_net_forward.6} parent=67 // pred_fallthru
        _
      // Predicated region
      $region85: #{admm_net_forward.6} parent=67 // pred_check
        %p1294 = pneg %p438
      $region86: #{admm_net_forward.6} parent=67 // pred_check_branch
        %1296 = sbr.rel (%p1294) target = $region88
      $region87: #{admm_net_forward.6} parent=67 // pred_region
        %s1297 = smul.u32 6, %s29
      $region88: #{admm_net_forward.6} parent=67 // pred_fallthru
        _
      // Predicated region
      $region89: #{admm_net_forward.6} parent=67 // pred_check
        %p1298 = pneg %p464
      $region90: #{admm_net_forward.6} parent=67 // pred_check_branch
        %1300 = sbr.rel (%p1298) target = $region92
      $region91: #{admm_net_forward.6} parent=67 // pred_region
        %s1301 = smul.u32 6, %s29
      $region92: #{admm_net_forward.6} parent=67 // pred_fallthru
        _
    $region68: #{admm_net_forward.6} parent=5 // pred_fallthru
      _
    %p1302 = scmp.le.s32.totalorder 2, %s24
    // Predicated region
    $region93: #{admm_net_forward.6} parent=5 // pred_check
      %p1303 = pneg %p1302
    $region94: #{admm_net_forward.6} parent=5 // pred_check_branch
      %1305 = sbr.rel (%p1303) target = $region96
    $region95: #{admm_net_forward.6} parent=5 // pred_region
      %s1306 = ssub.s32 %s24, 2
      // Predicated region
      $region97: #{admm_net_forward.6} parent=95 // pred_check
        %p1307 = pneg %p340
      $region98: #{admm_net_forward.6} parent=95 // pred_check_branch
        %1309 = sbr.rel (%p1307) target = $region100
      $region99: #{admm_net_forward.6} parent=95 // pred_region
        %s1310 = smul.u32 6, %s30
        %p1311 = scmp.lt.s32.totalorder %s1310, 11
        %s1312 = scalar_select %p1311, %s1310, 11
        %s1313 = smul.addr %s1312, 8
        %s1314 = scalar_lea.vmem %s12, %s1313
      $region100: #{admm_net_forward.6} parent=95 // pred_fallthru
        _
      // Predicated region
      $region101: #{admm_net_forward.6} parent=95 // pred_check
        %p1315 = pneg %p366
      $region102: #{admm_net_forward.6} parent=95 // pred_check_branch
        %1317 = sbr.rel (%p1315) target = $region104
      $region103: #{admm_net_forward.6} parent=95 // pred_region
        %s1318 = smul.u32 6, %s30
        %p1319 = scmp.lt.s32.totalorder %s1318, 11
        %s1320 = scalar_select %p1319, %s1318, 11
        %s1321 = smul.addr %s1320, 8
        %s1322 = scalar_lea.vmem %s13, %s1321
      $region104: #{admm_net_forward.6} parent=95 // pred_fallthru
        _
      // Predicated region
      $region105: #{admm_net_forward.6} parent=95 // pred_check
        %p1323 = pneg %p392
      $region106: #{admm_net_forward.6} parent=95 // pred_check_branch
        %1325 = sbr.rel (%p1323) target = $region108
      $region107: #{admm_net_forward.6} parent=95 // pred_region
        %s1326 = smul.u32 6, %s30
        %p1327 = scmp.lt.s32.totalorder %s1326, 11
        %s1328 = scalar_select %p1327, %s1326, 11
        %s1329 = smul.addr %s1328, 8
        %s1330 = scalar_lea.vmem %s14, %s1329
      $region108: #{admm_net_forward.6} parent=95 // pred_fallthru
        _
      // Predicated region
      $region109: #{admm_net_forward.6} parent=95 // pred_check
        %p1331 = pneg %p418
      $region110: #{admm_net_forward.6} parent=95 // pred_check_branch
        %1333 = sbr.rel (%p1331) target = $region112
      $region111: #{admm_net_forward.6} parent=95 // pred_region
        %s1334 = smul.u32 6, %s30
        %p1335 = scmp.lt.s32.totalorder %s1334, 11
        %s1336 = scalar_select %p1335, %s1334, 11
        %s1337 = smul.addr %s1336, 8
        %s1338 = scalar_lea.vmem %s15, %s1337
      $region112: #{admm_net_forward.6} parent=95 // pred_fallthru
        _
      // Predicated region
      $region113: #{admm_net_forward.6} parent=95 // pred_check
        %p1339 = pneg %p444
      $region114: #{admm_net_forward.6} parent=95 // pred_check_branch
        %1341 = sbr.rel (%p1339) target = $region116
      $region115: #{admm_net_forward.6} parent=95 // pred_region
        %s1342 = smul.u32 6, %s30
        %p1343 = scmp.lt.s32.totalorder %s1342, 11
        %s1344 = scalar_select %p1343, %s1342, 11
        %s1345 = smul.addr %s1344, 8
        %s1346 = scalar_lea.vmem %s16, %s1345
      $region116: #{admm_net_forward.6} parent=95 // pred_fallthru
        _
      // Predicated region
      $region117: #{admm_net_forward.6} parent=95 // pred_check
        %p1347 = pneg %p470
      $region118: #{admm_net_forward.6} parent=95 // pred_check_branch
        %1349 = sbr.rel (%p1347) target = $region120
      $region119: #{admm_net_forward.6} parent=95 // pred_region
        %s1350 = smul.u32 6, %s30
        %p1351 = scmp.lt.s32.totalorder %s1350, 11
        %s1352 = scalar_select %p1351, %s1350, 11
        %s1353 = smul.addr %s1352, 8
        %s1354 = scalar_lea.vmem %s17, %s1353
      $region120: #{admm_net_forward.6} parent=95 // pred_fallthru
        _
    $region96: #{admm_net_forward.6} parent=5 // pred_fallthru
      _
  $region6: #{admm_net_forward.6} parent=0 // loop_footer
    %s28 = sadd.s32 1, %s24
  $region7: #{admm_net_forward.6} parent=0 // loop_footer_branch
    %23 = sbr.rel target = $region3
  $region8: #{admm_net_forward.6} parent=0 // loop_exit
    _

// kernel: reverse.13
$region0: #{reverse.13}
  %s0 = inlined_call_operand.vmem [shape: f32[6,16,63], index: 0, kind: input, shape index: {}]
  %s1 = inlined_call_operand.vmem [shape: f32[6,16,63], index: 1, kind: output, shape index: {}]
  %v2 = vlaneseq
  %v3 = vsub.s32 62, %v2
  %4 = vset.pattern.permute.xlu0 %v3
  $region1: #{reverse.13} parent=0
    #allocation0 [shape = 'u8[49152]{0}', space=vmem, size = 0xc000, scoped, tag = 'operand span for operand 0']
    #allocation1 [shape = 'u8[49152]{0}', space=vmem, size = 0xc000, scoped, tag = 'operand span for operand 1']
    // Predicated region
    $region2: #{reverse.13} parent=1 // pred_check
      _
    $region3: #{reverse.13} parent=1 // pred_check_branch
      %6 = sbr.rel (0) target = $region5
    $region4: #{reverse.13} parent=1 // pred_region
      // Predicated region
      $region6: #{reverse.13} parent=4 // pred_check
        _
      $region7: #{reverse.13} parent=4 // pred_check_branch
        %8 = sbr.rel (0) target = $region9
      $region8: #{reverse.13} parent=4 // pred_region
        // Predicated region
        $region21: #{reverse.13} parent=8 // pred_check
          _
        $region22: #{reverse.13} parent=8 // pred_check_branch
          %45 = sbr.rel (0) target = $region24
        $region23: #{reverse.13} parent=8 // pred_region
          loop: start=0, step=1, limit=1
          $region25: #{reverse.13} parent=23 // loop_pre_header
            _
          $region26: #{reverse.13} parent=23 // loop_header
            %s47 = sphi 0, %s51
            %p48 = scmp.ge.s32.totalorder %s47, 1
            %s52 = sphi %s0, %s0
            %s53 = sphi [#allocation0], [#allocation0]
          $region27: #{reverse.13} parent=23 // loop_header_branch
            %50 = sbr.rel (%p48) target = $region31
          $region28: #{reverse.13} parent=23 // loop_body
            %v54 = vld [vmem:[%s52] sm:$0xff]
            %55 = vst [vmem:[%s53] sm:$0xff] %v54
            %v56 = vld [vmem:[%s52 + $0x8] sm:$0xff]
            %57 = vst [vmem:[%s53 + $0x8] sm:$0xff] %v56
            %v58 = vld [vmem:[%s52 + $0x10] sm:$0xff]
            %59 = vst [vmem:[%s53 + $0x10] sm:$0xff] %v58
            %v60 = vld [vmem:[%s52 + $0x18] sm:$0xff]
            %61 = vst [vmem:[%s53 + $0x18] sm:$0xff] %v60
            %v62 = vld [vmem:[%s52 + $0x20] sm:$0xff]
            %63 = vst [vmem:[%s53 + $0x20] sm:$0xff] %v62
            %v64 = vld [vmem:[%s52 + $0x28] sm:$0xff]
            %65 = vst [vmem:[%s53 + $0x28] sm:$0xff] %v64
            %v66 = vld [vmem:[%s52 + $0x30] sm:$0xff]
            %67 = vst [vmem:[%s53 + $0x30] sm:$0xff] %v66
            %v68 = vld [vmem:[%s52 + $0x38] sm:$0xff]
            %69 = vst [vmem:[%s53 + $0x38] sm:$0xff] %v68
            %v70 = vld [vmem:[%s52 + $0x40] sm:$0xff]
            %71 = vst [vmem:[%s53 + $0x40] sm:$0xff] %v70
            %v72 = vld [vmem:[%s52 + $0x48] sm:$0xff]
            %73 = vst [vmem:[%s53 + $0x48] sm:$0xff] %v72
            %v74 = vld [vmem:[%s52 + $0x50] sm:$0xff]
            %75 = vst [vmem:[%s53 + $0x50] sm:$0xff] %v74
            %v76 = vld [vmem:[%s52 + $0x58] sm:$0xff]
            %77 = vst [vmem:[%s53 + $0x58] sm:$0xff] %v76
          $region29: #{reverse.13} parent=23 // loop_footer
            %s51 = sadd.s32 1, %s47
          $region30: #{reverse.13} parent=23 // loop_footer_branch
            %46 = sbr.rel target = $region26
          $region31: #{reverse.13} parent=23 // loop_exit
            _
        $region24: #{reverse.13} parent=8 // pred_fallthru
          _
        // Predicated region
        $region32: #{reverse.13} parent=8 // pred_check
          _
        $region33: #{reverse.13} parent=8 // pred_check_branch
          %79 = sbr.rel target = $region35
        $region34: #{reverse.13} parent=8 // pred_region
          _
        $region35: #{reverse.13} parent=8 // pred_fallthru
          _
      $region9: #{reverse.13} parent=4 // pred_fallthru
        _
      // Predicated region
      $region10: #{reverse.13} parent=4 // pred_check
        _
      $region11: #{reverse.13} parent=4 // pred_check_branch
        %10 = sbr.rel target = $region13
      $region12: #{reverse.13} parent=4 // pred_region
        loop: start=0, step=1, limit=1
        $region14: #{reverse.13} parent=12 // loop_pre_header
          _
        $region15: #{reverse.13} parent=12 // loop_header
          %s13 = sphi 0, %s17
          %p14 = scmp.ge.s32.totalorder %s13, 1
          %s18 = sphi %s0, %s0
          %s19 = sphi [#allocation0], [#allocation0]
        $region16: #{reverse.13} parent=12 // loop_header_branch
          %16 = sbr.rel (%p14) target = $region20
        $region17: #{reverse.13} parent=12 // loop_body
          %v20 = vld [vmem:[%s18] sm:$0xff]
          %21 = vst [vmem:[%s19] sm:$0xff] %v20
          %v22 = vld [vmem:[%s18 + $0x8] sm:$0xff]
          %23 = vst [vmem:[%s19 + $0x8] sm:$0xff] %v22
          %v24 = vld [vmem:[%s18 + $0x10] sm:$0xff]
          %25 = vst [vmem:[%s19 + $0x10] sm:$0xff] %v24
          %v26 = vld [vmem:[%s18 + $0x18] sm:$0xff]
          %27 = vst [vmem:[%s19 + $0x18] sm:$0xff] %v26
          %v28 = vld [vmem:[%s18 + $0x20] sm:$0xff]
          %29 = vst [vmem:[%s19 + $0x20] sm:$0xff] %v28
          %v30 = vld [vmem:[%s18 + $0x28] sm:$0xff]
          %31 = vst [vmem:[%s19 + $0x28] sm:$0xff] %v30
          %v32 = vld [vmem:[%s18 + $0x30] sm:$0xff]
          %33 = vst [vmem:[%s19 + $0x30] sm:$0xff] %v32
          %v34 = vld [vmem:[%s18 + $0x38] sm:$0xff]
          %35 = vst [vmem:[%s19 + $0x38] sm:$0xff] %v34
          %v36 = vld [vmem:[%s18 + $0x40] sm:$0xff]
          %37 = vst [vmem:[%s19 + $0x40] sm:$0xff] %v36
          %v38 = vld [vmem:[%s18 + $0x48] sm:$0xff]
          %39 = vst [vmem:[%s19 + $0x48] sm:$0xff] %v38
          %v40 = vld [vmem:[%s18 + $0x50] sm:$0xff]
          %41 = vst [vmem:[%s19 + $0x50] sm:$0xff] %v40
          %v42 = vld [vmem:[%s18 + $0x58] sm:$0xff]
          %43 = vst [vmem:[%s19 + $0x58] sm:$0xff] %v42
        $region18: #{reverse.13} parent=12 // loop_footer
          %s17 = sadd.s32 1, %s13
        $region19: #{reverse.13} parent=12 // loop_footer_branch
          %12 = sbr.rel target = $region15
        $region20: #{reverse.13} parent=12 // loop_exit
          _
      $region13: #{reverse.13} parent=4 // pred_fallthru
        _
    $region5: #{reverse.13} parent=1 // pred_fallthru
      _
    %80 = vnop
    %v81 = vld [vmem:[#allocation0] sm:$0xff]
    %82 = vperm.xlu0 %4, %v81
    %v83 = vpop.permute.xlu0 %82
    %84 = vst [vmem:[#allocation1] sm:$0xff] %v83
    %s85 = scalar_lea.vmem [#allocation1], 8
    %s86 = scalar_lea.vmem [#allocation0], 8
    %v87 = vld [vmem:[%s86] sm:$0xff]
    %88 = vperm.xlu0 %4, %v87
    %v89 = vpop.permute.xlu0 %88
    %90 = vst [vmem:[%s85] sm:$0xff] %v89
    %s91 = scalar_lea.vmem [#allocation1], 16
    %s92 = scalar_lea.vmem [#allocation0], 16
    %v93 = vld [vmem:[%s92] sm:$0xff]
    %94 = vperm.xlu0 %4, %v93
    %v95 = vpop.permute.xlu0 %94
    %96 = vst [vmem:[%s91] sm:$0xff] %v95
    %s97 = scalar_lea.vmem %s91, 8 [#allocation1]
    %s98 = scalar_lea.vmem %s92, 8 [#allocation0]
    %v99 = vld [vmem:[%s98] sm:$0xff]
    %100 = vperm.xlu0 %4, %v99
    %v101 = vpop.permute.xlu0 %100
    %102 = vst [vmem:[%s97] sm:$0xff] %v101
    %s103 = scalar_lea.vmem [#allocation1], 32
    %s104 = scalar_lea.vmem [#allocation0], 32
    %v105 = vld [vmem:[%s104] sm:$0xff]
    %106 = vperm.xlu0 %4, %v105
    %v107 = vpop.permute.xlu0 %106
    %108 = vst [vmem:[%s103] sm:$0xff] %v107
    %s109 = scalar_lea.vmem %s103, 8 [#allocation1]
    %s110 = scalar_lea.vmem %s104, 8 [#allocation0]
    %v111 = vld [vmem:[%s110] sm:$0xff]
    %112 = vperm.xlu0 %4, %v111
    %v113 = vpop.permute.xlu0 %112
    %114 = vst [vmem:[%s109] sm:$0xff] %v113
    %s115 = scalar_lea.vmem [#allocation1], 48
    %s116 = scalar_lea.vmem [#allocation0], 48
    %v117 = vld [vmem:[%s116] sm:$0xff]
    %118 = vperm.xlu0 %4, %v117
    %v119 = vpop.permute.xlu0 %118
    %120 = vst [vmem:[%s115] sm:$0xff] %v119
    %s121 = scalar_lea.vmem %s115, 8 [#allocation1]
    %s122 = scalar_lea.vmem %s116, 8 [#allocation0]
    %v123 = vld [vmem:[%s122] sm:$0xff]
    %124 = vperm.xlu0 %4, %v123
    %v125 = vpop.permute.xlu0 %124
    %126 = vst [vmem:[%s121] sm:$0xff] %v125
    %s127 = scalar_lea.vmem [#allocation1], 64
    %s128 = scalar_lea.vmem [#allocation0], 64
    %v129 = vld [vmem:[%s128] sm:$0xff]
    %130 = vperm.xlu0 %4, %v129
    %v131 = vpop.permute.xlu0 %130
    %132 = vst [vmem:[%s127] sm:$0xff] %v131
    %s133 = scalar_lea.vmem %s127, 8 [#allocation1]
    %s134 = scalar_lea.vmem %s128, 8 [#allocation0]
    %v135 = vld [vmem:[%s134] sm:$0xff]
    %136 = vperm.xlu0 %4, %v135
    %v137 = vpop.permute.xlu0 %136
    %138 = vst [vmem:[%s133] sm:$0xff] %v137
    %s139 = scalar_lea.vmem [#allocation1], 80
    %s140 = scalar_lea.vmem [#allocation0], 80
    %v141 = vld [vmem:[%s140] sm:$0xff]
    %142 = vperm.xlu0 %4, %v141
    %v143 = vpop.permute.xlu0 %142
    %144 = vst [vmem:[%s139] sm:$0xff] %v143
    %s145 = scalar_lea.vmem %s139, 8 [#allocation1]
    %s146 = scalar_lea.vmem %s140, 8 [#allocation0]
    %v147 = vld [vmem:[%s146] sm:$0xff]
    %148 = vperm.xlu0 %4, %v147
    %v149 = vpop.permute.xlu0 %148
    %150 = vst [vmem:[%s145] sm:$0xff] %v149
    // Predicated region
    $region36: #{reverse.13} parent=1 // pred_check
      _
    $region37: #{reverse.13} parent=1 // pred_check_branch
      %152 = sbr.rel (0) target = $region39
    $region38: #{reverse.13} parent=1 // pred_region
      // Predicated region
      $region40: #{reverse.13} parent=38 // pred_check
        _
      $region41: #{reverse.13} parent=38 // pred_check_branch
        %154 = sbr.rel (0) target = $region43
      $region42: #{reverse.13} parent=38 // pred_region
        // Predicated region
        $region55: #{reverse.13} parent=42 // pred_check
          _
        $region56: #{reverse.13} parent=42 // pred_check_branch
          %191 = sbr.rel (0) target = $region58
        $region57: #{reverse.13} parent=42 // pred_region
          loop: start=0, step=1, limit=1
          $region59: #{reverse.13} parent=57 // loop_pre_header
            _
          $region60: #{reverse.13} parent=57 // loop_header
            %s193 = sphi 0, %s197
            %p194 = scmp.ge.s32.totalorder %s193, 1
            %s198 = sphi [#allocation1], [#allocation1]
            %s199 = sphi %s1, %s1
          $region61: #{reverse.13} parent=57 // loop_header_branch
            %196 = sbr.rel (%p194) target = $region65
          $region62: #{reverse.13} parent=57 // loop_body
            %v200 = vld [vmem:[%s198] sm:$0xff]
            %201 = vst [vmem:[%s199] sm:$0xff] %v200
            %v202 = vld [vmem:[%s198 + $0x8] sm:$0xff]
            %203 = vst [vmem:[%s199 + $0x8] sm:$0xff] %v202
            %v204 = vld [vmem:[%s198 + $0x10] sm:$0xff]
            %205 = vst [vmem:[%s199 + $0x10] sm:$0xff] %v204
            %v206 = vld [vmem:[%s198 + $0x18] sm:$0xff]
            %207 = vst [vmem:[%s199 + $0x18] sm:$0xff] %v206
            %v208 = vld [vmem:[%s198 + $0x20] sm:$0xff]
            %209 = vst [vmem:[%s199 + $0x20] sm:$0xff] %v208
            %v210 = vld [vmem:[%s198 + $0x28] sm:$0xff]
            %211 = vst [vmem:[%s199 + $0x28] sm:$0xff] %v210
            %v212 = vld [vmem:[%s198 + $0x30] sm:$0xff]
            %213 = vst [vmem:[%s199 + $0x30] sm:$0xff] %v212
            %v214 = vld [vmem:[%s198 + $0x38] sm:$0xff]
            %215 = vst [vmem:[%s199 + $0x38] sm:$0xff] %v214
            %v216 = vld [vmem:[%s198 + $0x40] sm:$0xff]
            %217 = vst [vmem:[%s199 + $0x40] sm:$0xff] %v216
            %v218 = vld [vmem:[%s198 + $0x48] sm:$0xff]
            %219 = vst [vmem:[%s199 + $0x48] sm:$0xff] %v218
            %v220 = vld [vmem:[%s198 + $0x50] sm:$0xff]
            %221 = vst [vmem:[%s199 + $0x50] sm:$0xff] %v220
            %v222 = vld [vmem:[%s198 + $0x58] sm:$0xff]
            %223 = vst [vmem:[%s199 + $0x58] sm:$0xff] %v222
          $region63: #{reverse.13} parent=57 // loop_footer
            %s197 = sadd.s32 1, %s193
          $region64: #{reverse.13} parent=57 // loop_footer_branch
            %192 = sbr.rel target = $region60
          $region65: #{reverse.13} parent=57 // loop_exit
            _
        $region58: #{reverse.13} parent=42 // pred_fallthru
          _
        // Predicated region
        $region66: #{reverse.13} parent=42 // pred_check
          _
        $region67: #{reverse.13} parent=42 // pred_check_branch
          %225 = sbr.rel target = $region69
        $region68: #{reverse.13} parent=42 // pred_region
          _
        $region69: #{reverse.13} parent=42 // pred_fallthru
          _
      $region43: #{reverse.13} parent=38 // pred_fallthru
        _
      // Predicated region
      $region44: #{reverse.13} parent=38 // pred_check
        _
      $region45: #{reverse.13} parent=38 // pred_check_branch
        %156 = sbr.rel target = $region47
      $region46: #{reverse.13} parent=38 // pred_region
        loop: start=0, step=1, limit=1
        $region48: #{reverse.13} parent=46 // loop_pre_header
          _
        $region49: #{reverse.13} parent=46 // loop_header
          %s159 = sphi 0, %s163
          %p160 = scmp.ge.s32.totalorder %s159, 1
          %s164 = sphi [#allocation1], [#allocation1]
          %s165 = sphi %s1, %s1
        $region50: #{reverse.13} parent=46 // loop_header_branch
          %162 = sbr.rel (%p160) target = $region54
        $region51: #{reverse.13} parent=46 // loop_body
          %v166 = vld [vmem:[%s164] sm:$0xff]
          %167 = vst [vmem:[%s165] sm:$0xff] %v166
          %v168 = vld [vmem:[%s164 + $0x8] sm:$0xff]
          %169 = vst [vmem:[%s165 + $0x8] sm:$0xff] %v168
          %v170 = vld [vmem:[%s164 + $0x10] sm:$0xff]
          %171 = vst [vmem:[%s165 + $0x10] sm:$0xff] %v170
          %v172 = vld [vmem:[%s164 + $0x18] sm:$0xff]
          %173 = vst [vmem:[%s165 + $0x18] sm:$0xff] %v172
          %v174 = vld [vmem:[%s164 + $0x20] sm:$0xff]
          %175 = vst [vmem:[%s165 + $0x20] sm:$0xff] %v174
          %v176 = vld [vmem:[%s164 + $0x28] sm:$0xff]
          %177 = vst [vmem:[%s165 + $0x28] sm:$0xff] %v176
          %v178 = vld [vmem:[%s164 + $0x30] sm:$0xff]
          %179 = vst [vmem:[%s165 + $0x30] sm:$0xff] %v178
          %v180 = vld [vmem:[%s164 + $0x38] sm:$0xff]
          %181 = vst [vmem:[%s165 + $0x38] sm:$0xff] %v180
          %v182 = vld [vmem:[%s164 + $0x40] sm:$0xff]
          %183 = vst [vmem:[%s165 + $0x40] sm:$0xff] %v182
          %v184 = vld [vmem:[%s164 + $0x48] sm:$0xff]
          %185 = vst [vmem:[%s165 + $0x48] sm:$0xff] %v184
          %v186 = vld [vmem:[%s164 + $0x50] sm:$0xff]
          %187 = vst [vmem:[%s165 + $0x50] sm:$0xff] %v186
          %v188 = vld [vmem:[%s164 + $0x58] sm:$0xff]
          %189 = vst [vmem:[%s165 + $0x58] sm:$0xff] %v188
        $region52: #{reverse.13} parent=46 // loop_footer
          %s163 = sadd.s32 1, %s159
        $region53: #{reverse.13} parent=46 // loop_footer_branch
          %158 = sbr.rel target = $region49
        $region54: #{reverse.13} parent=46 // loop_exit
          _
      $region47: #{reverse.13} parent=38 // pred_fallthru
        _
    $region39: #{reverse.13} parent=1 // pred_fallthru
      _
    %226 = vnop

// kernel: admm_net_forward.7
$region0: #{admm_net_forward.7}
  #allocation0 [shape = 'u32[]', space=smem, size = 0x4, offset = 0x4, fixed_abs, tag = 'smem constant byte address 0x4 - core index']
  #allocation1 [shape = 'u32[144,128]{1,0:T(1,128)}', space=vmem, size = 0x12000, scoped, tag = 'internal scratch']
  %s0 = inlined_call_operand.vmem [shape: f32[96,128], index: 0, kind: input, shape index: {}]
  %s1 = inlined_call_operand.vmem [shape: f32[96,128], index: 1, kind: input, shape index: {}]
  %s2 = inlined_call_operand.vmem [shape: f32[96,128], index: 2, kind: input, shape index: {}]
  %s3 = inlined_call_operand.vmem [shape: f32[96,128], index: 3, kind: input, shape index: {}]
  %s4 = inlined_call_operand.vmem [shape: f32[96,128], index: 4, kind: input, shape index: {}]
  %s5 = inlined_call_operand.vmem [shape: f32[96,128], index: 5, kind: input, shape index: {}]
  %s6 = inlined_call_operand.vmem [shape: f32[96,128], index: 6, kind: input, shape index: {}, may-alias: {6,7,8,9}]
  %s7 = inlined_call_operand.vmem [shape: f32[96,128], index: 7, kind: input, shape index: {}, may-alias: {6,7,8,9}]
  %s8 = inlined_call_operand.vmem [shape: f32[96,128], index: 8, kind: input, shape index: {}, may-alias: {6,7,8,9}]
  %s9 = inlined_call_operand.vmem [shape: f32[96,128], index: 9, kind: input, shape index: {}, may-alias: {6,7,8,9}]
  %s10 = inlined_call_operand.vmem [shape: f32[48,1], index: 10, kind: input, shape index: {}]
  %s11 = inlined_call_operand.vmem [shape: f32[1,128], index: 11, kind: input, shape index: {}]
  %s12 = inlined_call_operand.vmem [shape: f32[96,128], index: 12, kind: output, shape index: {0}]
  %s13 = inlined_call_operand.vmem [shape: f32[96,128], index: 13, kind: output, shape index: {1}]
  %s14 = inlined_call_operand.vmem [shape: f32[96,128], index: 14, kind: output, shape index: {2}]
  %s15 = inlined_call_operand.vmem [shape: f32[96,128], index: 15, kind: output, shape index: {3}]
  %16 = xla_tuple %s12, %s13, %s14, %s15
  %s17 = sld [smem:[#allocation0]]
  $region105: #{admm_net_forward.7} parent=0
    _
  %s19 = ssub.s32 1, %s17
  %s20 = scalar_select 0, %s19, %s17
  loop: start=0, step=1, limit=4
  $region2: #{admm_net_forward.7} parent=0 // loop_pre_header
    _
  $region3: #{admm_net_forward.7} parent=0 // loop_header
    %s22 = sphi 0, %s26
    %p23 = scmp.ge.s32.totalorder %s22, 4
    %s32 = sphi 0, %s34
    %s35 = sphi 0, %s32
    %s36 = sphi 0, %s35
    %s52 = sphi 0, %s36
    %s58 = sphi 0, %s60
    %s61 = sphi 0, %s58
    %s62 = sphi 0, %s61
    %s78 = sphi 0, %s62
    %s84 = sphi 0, %s86
    %s87 = sphi 0, %s84
    %s88 = sphi 0, %s87
    %s104 = sphi 0, %s88
    %s110 = sphi 0, %s112
    %s113 = sphi 0, %s110
    %s114 = sphi 0, %s113
    %s130 = sphi 0, %s114
    %s136 = sphi 0, %s138
    %s139 = sphi 0, %s136
    %s140 = sphi 0, %s139
    %s156 = sphi 0, %s140
    %s162 = sphi 0, %s164
    %s165 = sphi 0, %s162
    %s166 = sphi 0, %s165
    %s182 = sphi 0, %s166
    %s188 = sphi 0, %s190
    %s191 = sphi 0, %s188
    %s192 = sphi 0, %s191
    %s208 = sphi 0, %s192
    %s214 = sphi 0, %s216
    %s217 = sphi 0, %s214
    %s218 = sphi 0, %s217
    %s234 = sphi 0, %s218
    %s240 = sphi 0, %s242
    %s243 = sphi 0, %s240
    %s244 = sphi 0, %s243
    %s260 = sphi 0, %s244
    %s266 = sphi 0, %s268
    %s269 = sphi 0, %s266
    %s270 = sphi 0, %s269
    %s286 = sphi 0, %s270
    %s290 = sphi 0, %s290
    %s292 = sphi 0, %s290
    %s293 = sphi 0, %s292
    %s307 = sphi 0, %s293
    %s311 = sphi 0, %s311
    %s313 = sphi 0, %s311
    %s314 = sphi 0, %s313
    %s328 = sphi 0, %s314
    %s334 = sphi 0, %s336
    %s337 = sphi 0, %s334
    %s338 = sphi 0, %s337
    %s354 = sphi 0, %s338
    %s360 = sphi 0, %s362
    %s363 = sphi 0, %s360
    %s364 = sphi 0, %s363
    %s380 = sphi 0, %s364
    %s386 = sphi 0, %s388
    %s389 = sphi 0, %s386
    %s390 = sphi 0, %s389
    %s406 = sphi 0, %s390
    %s412 = sphi 0, %s414
    %s415 = sphi 0, %s412
    %s416 = sphi 0, %s415
    %s432 = sphi 0, %s416
  $region4: #{admm_net_forward.7} parent=0 // loop_header_branch
    %25 = sbr.rel (%p23) target = $region8
  $region5: #{admm_net_forward.7} parent=0 // loop_body
    %s27 = ssub.s32 %s22, 1
    %s28 = ssub.s32 %s22, 2
    %s29 = sadd.s32 %s22, 1
    %s30 = ssub.s32 %s22, %s29
    %p31 = scmp.eq.s32.totalorder %s30, 0
    %s33 = sadd.s32 %s32, 1
    %s34 = scalar_select %p31, %s32, %s33
    %p37 = pneg %p31
    %p38 = scmp.eq.s32.totalorder %s22, 1
    %p39 = por %p37, %p38
    %p40 = scmp.ne.s32.totalorder %s32, %s35
    %p41 = scmp.eq.s32.totalorder %s22, 0
    %p42 = por %p40, %p41
    %p43 = scmp.ne.s32.totalorder %s32, %s35
    %p44 = scmp.eq.s32.totalorder %s27, 1
    %p45 = por %p43, %p44
    %p46 = scmp.ne.s32.totalorder %s35, %s36
    %p47 = scmp.eq.s32.totalorder %s27, 0
    %p48 = por %p46, %p47
    %p49 = scmp.ne.s32.totalorder %s35, %s36
    %p50 = scmp.eq.s32.totalorder %s28, 1
    %p51 = por %p49, %p50
    %p53 = scmp.ne.s32.totalorder %s36, %s52
    %p54 = scmp.eq.s32.totalorder %s28, 0
    %p55 = por %p53, %p54
    %s56 = ssub.s32 %s22, %s29
    %p57 = scmp.eq.s32.totalorder %s56, 0
    %s59 = sadd.s32 %s58, 1
    %s60 = scalar_select %p57, %s58, %s59
    %p63 = pneg %p57
    %p64 = scmp.eq.s32.totalorder %s22, 1
    %p65 = por %p63, %p64
    %p66 = scmp.ne.s32.totalorder %s58, %s61
    %p67 = scmp.eq.s32.totalorder %s22, 0
    %p68 = por %p66, %p67
    %p69 = scmp.ne.s32.totalorder %s58, %s61
    %p70 = scmp.eq.s32.totalorder %s27, 1
    %p71 = por %p69, %p70
    %p72 = scmp.ne.s32.totalorder %s61, %s62
    %p73 = scmp.eq.s32.totalorder %s27, 0
    %p74 = por %p72, %p73
    %p75 = scmp.ne.s32.totalorder %s61, %s62
    %p76 = scmp.eq.s32.totalorder %s28, 1
    %p77 = por %p75, %p76
    %p79 = scmp.ne.s32.totalorder %s62, %s78
    %p80 = scmp.eq.s32.totalorder %s28, 0
    %p81 = por %p79, %p80
    %s82 = ssub.s32 %s22, %s29
    %p83 = scmp.eq.s32.totalorder %s82, 0
    %s85 = sadd.s32 %s84, 1
    %s86 = scalar_select %p83, %s84, %s85
    %p89 = pneg %p83
    %p90 = scmp.eq.s32.totalorder %s22, 1
    %p91 = por %p89, %p90
    %p92 = scmp.ne.s32.totalorder %s84, %s87
    %p93 = scmp.eq.s32.totalorder %s22, 0
    %p94 = por %p92, %p93
    %p95 = scmp.ne.s32.totalorder %s84, %s87
    %p96 = scmp.eq.s32.totalorder %s27, 1
    %p97 = por %p95, %p96
    %p98 = scmp.ne.s32.totalorder %s87, %s88
    %p99 = scmp.eq.s32.totalorder %s27, 0
    %p100 = por %p98, %p99
    %p101 = scmp.ne.s32.totalorder %s87, %s88
    %p102 = scmp.eq.s32.totalorder %s28, 1
    %p103 = por %p101, %p102
    %p105 = scmp.ne.s32.totalorder %s88, %s104
    %p106 = scmp.eq.s32.totalorder %s28, 0
    %p107 = por %p105, %p106
    %s108 = ssub.s32 %s22, %s29
    %p109 = scmp.eq.s32.totalorder %s108, 0
    %s111 = sadd.s32 %s110, 1
    %s112 = scalar_select %p109, %s110, %s111
    %p115 = pneg %p109
    %p116 = scmp.eq.s32.totalorder %s22, 1
    %p117 = por %p115, %p116
    %p118 = scmp.ne.s32.totalorder %s110, %s113
    %p119 = scmp.eq.s32.totalorder %s22, 0
    %p120 = por %p118, %p119
    %p121 = scmp.ne.s32.totalorder %s110, %s113
    %p122 = scmp.eq.s32.totalorder %s27, 1
    %p123 = por %p121, %p122
    %p124 = scmp.ne.s32.totalorder %s113, %s114
    %p125 = scmp.eq.s32.totalorder %s27, 0
    %p126 = por %p124, %p125
    %p127 = scmp.ne.s32.totalorder %s113, %s114
    %p128 = scmp.eq.s32.totalorder %s28, 1
    %p129 = por %p127, %p128
    %p131 = scmp.ne.s32.totalorder %s114, %s130
    %p132 = scmp.eq.s32.totalorder %s28, 0
    %p133 = por %p131, %p132
    %s134 = ssub.s32 %s22, %s29
    %p135 = scmp.eq.s32.totalorder %s134, 0
    %s137 = sadd.s32 %s136, 1
    %s138 = scalar_select %p135, %s136, %s137
    %p141 = pneg %p135
    %p142 = scmp.eq.s32.totalorder %s22, 1
    %p143 = por %p141, %p142
    %p144 = scmp.ne.s32.totalorder %s136, %s139
    %p145 = scmp.eq.s32.totalorder %s22, 0
    %p146 = por %p144, %p145
    %p147 = scmp.ne.s32.totalorder %s136, %s139
    %p148 = scmp.eq.s32.totalorder %s27, 1
    %p149 = por %p147, %p148
    %p150 = scmp.ne.s32.totalorder %s139, %s140
    %p151 = scmp.eq.s32.totalorder %s27, 0
    %p152 = por %p150, %p151
    %p153 = scmp.ne.s32.totalorder %s139, %s140
    %p154 = scmp.eq.s32.totalorder %s28, 1
    %p155 = por %p153, %p154
    %p157 = scmp.ne.s32.totalorder %s140, %s156
    %p158 = scmp.eq.s32.totalorder %s28, 0
    %p159 = por %p157, %p158
    %s160 = ssub.s32 %s22, %s29
    %p161 = scmp.eq.s32.totalorder %s160, 0
    %s163 = sadd.s32 %s162, 1
    %s164 = scalar_select %p161, %s162, %s163
    %p167 = pneg %p161
    %p168 = scmp.eq.s32.totalorder %s22, 1
    %p169 = por %p167, %p168
    %p170 = scmp.ne.s32.totalorder %s162, %s165
    %p171 = scmp.eq.s32.totalorder %s22, 0
    %p172 = por %p170, %p171
    %p173 = scmp.ne.s32.totalorder %s162, %s165
    %p174 = scmp.eq.s32.totalorder %s27, 1
    %p175 = por %p173, %p174
    %p176 = scmp.ne.s32.totalorder %s165, %s166
    %p177 = scmp.eq.s32.totalorder %s27, 0
    %p178 = por %p176, %p177
    %p179 = scmp.ne.s32.totalorder %s165, %s166
    %p180 = scmp.eq.s32.totalorder %s28, 1
    %p181 = por %p179, %p180
    %p183 = scmp.ne.s32.totalorder %s166, %s182
    %p184 = scmp.eq.s32.totalorder %s28, 0
    %p185 = por %p183, %p184
    %s186 = ssub.s32 %s22, %s29
    %p187 = scmp.eq.s32.totalorder %s186, 0
    %s189 = sadd.s32 %s188, 1
    %s190 = scalar_select %p187, %s188, %s189
    %p193 = pneg %p187
    %p194 = scmp.eq.s32.totalorder %s22, 1
    %p195 = por %p193, %p194
    %p196 = scmp.ne.s32.totalorder %s188, %s191
    %p197 = scmp.eq.s32.totalorder %s22, 0
    %p198 = por %p196, %p197
    %p199 = scmp.ne.s32.totalorder %s188, %s191
    %p200 = scmp.eq.s32.totalorder %s27, 1
    %p201 = por %p199, %p200
    %p202 = scmp.ne.s32.totalorder %s191, %s192
    %p203 = scmp.eq.s32.totalorder %s27, 0
    %p204 = por %p202, %p203
    %p205 = scmp.ne.s32.totalorder %s191, %s192
    %p206 = scmp.eq.s32.totalorder %s28, 1
    %p207 = por %p205, %p206
    %p209 = scmp.ne.s32.totalorder %s192, %s208
    %p210 = scmp.eq.s32.totalorder %s28, 0
    %p211 = por %p209, %p210
    %s212 = ssub.s32 %s22, %s29
    %p213 = scmp.eq.s32.totalorder %s212, 0
    %s215 = sadd.s32 %s214, 1
    %s216 = scalar_select %p213, %s214, %s215
    %p219 = pneg %p213
    %p220 = scmp.eq.s32.totalorder %s22, 1
    %p221 = por %p219, %p220
    %p222 = scmp.ne.s32.totalorder %s214, %s217
    %p223 = scmp.eq.s32.totalorder %s22, 0
    %p224 = por %p222, %p223
    %p225 = scmp.ne.s32.totalorder %s214, %s217
    %p226 = scmp.eq.s32.totalorder %s27, 1
    %p227 = por %p225, %p226
    %p228 = scmp.ne.s32.totalorder %s217, %s218
    %p229 = scmp.eq.s32.totalorder %s27, 0
    %p230 = por %p228, %p229
    %p231 = scmp.ne.s32.totalorder %s217, %s218
    %p232 = scmp.eq.s32.totalorder %s28, 1
    %p233 = por %p231, %p232
    %p235 = scmp.ne.s32.totalorder %s218, %s234
    %p236 = scmp.eq.s32.totalorder %s28, 0
    %p237 = por %p235, %p236
    %s238 = ssub.s32 %s22, %s29
    %p239 = scmp.eq.s32.totalorder %s238, 0
    %s241 = sadd.s32 %s240, 1
    %s242 = scalar_select %p239, %s240, %s241
    %p245 = pneg %p239
    %p246 = scmp.eq.s32.totalorder %s22, 1
    %p247 = por %p245, %p246
    %p248 = scmp.ne.s32.totalorder %s240, %s243
    %p249 = scmp.eq.s32.totalorder %s22, 0
    %p250 = por %p248, %p249
    %p251 = scmp.ne.s32.totalorder %s240, %s243
    %p252 = scmp.eq.s32.totalorder %s27, 1
    %p253 = por %p251, %p252
    %p254 = scmp.ne.s32.totalorder %s243, %s244
    %p255 = scmp.eq.s32.totalorder %s27, 0
    %p256 = por %p254, %p255
    %p257 = scmp.ne.s32.totalorder %s243, %s244
    %p258 = scmp.eq.s32.totalorder %s28, 1
    %p259 = por %p257, %p258
    %p261 = scmp.ne.s32.totalorder %s244, %s260
    %p262 = scmp.eq.s32.totalorder %s28, 0
    %p263 = por %p261, %p262
    %s264 = ssub.s32 %s22, %s29
    %p265 = scmp.eq.s32.totalorder %s264, 0
    %s267 = sadd.s32 %s266, 1
    %s268 = scalar_select %p265, %s266, %s267
    %p271 = pneg %p265
    %p272 = scmp.eq.s32.totalorder %s22, 1
    %p273 = por %p271, %p272
    %p274 = scmp.ne.s32.totalorder %s266, %s269
    %p275 = scmp.eq.s32.totalorder %s22, 0
    %p276 = por %p274, %p275
    %p277 = scmp.ne.s32.totalorder %s266, %s269
    %p278 = scmp.eq.s32.totalorder %s27, 1
    %p279 = por %p277, %p278
    %p280 = scmp.ne.s32.totalorder %s269, %s270
    %p281 = scmp.eq.s32.totalorder %s27, 0
    %p282 = por %p280, %p281
    %p283 = scmp.ne.s32.totalorder %s269, %s270
    %p284 = scmp.eq.s32.totalorder %s28, 1
    %p285 = por %p283, %p284
    %p287 = scmp.ne.s32.totalorder %s270, %s286
    %p288 = scmp.eq.s32.totalorder %s28, 0
    %p289 = por %p287, %p288
    %s291 = sadd.s32 %s290, 1
    %p294 = scmp.eq.s32.totalorder %s22, 1
    %p295 = scmp.ne.s32.totalorder %s290, %s292
    %p296 = scmp.eq.s32.totalorder %s22, 0
    %p297 = por %p295, %p296
    %p298 = scmp.ne.s32.totalorder %s290, %s292
    %p299 = scmp.eq.s32.totalorder %s27, 1
    %p300 = por %p298, %p299
    %p301 = scmp.ne.s32.totalorder %s292, %s293
    %p302 = scmp.eq.s32.totalorder %s27, 0
    %p303 = por %p301, %p302
    %p304 = scmp.ne.s32.totalorder %s292, %s293
    %p305 = scmp.eq.s32.totalorder %s28, 1
    %p306 = por %p304, %p305
    %p308 = scmp.ne.s32.totalorder %s293, %s307
    %p309 = scmp.eq.s32.totalorder %s28, 0
    %p310 = por %p308, %p309
    %s312 = sadd.s32 %s311, 1
    %p315 = scmp.eq.s32.totalorder %s22, 1
    %p316 = scmp.ne.s32.totalorder %s311, %s313
    %p317 = scmp.eq.s32.totalorder %s22, 0
    %p318 = por %p316, %p317
    %p319 = scmp.ne.s32.totalorder %s311, %s313
    %p320 = scmp.eq.s32.totalorder %s27, 1
    %p321 = por %p319, %p320
    %p322 = scmp.ne.s32.totalorder %s313, %s314
    %p323 = scmp.eq.s32.totalorder %s27, 0
    %p324 = por %p322, %p323
    %p325 = scmp.ne.s32.totalorder %s313, %s314
    %p326 = scmp.eq.s32.totalorder %s28, 1
    %p327 = por %p325, %p326
    %p329 = scmp.ne.s32.totalorder %s314, %s328
    %p330 = scmp.eq.s32.totalorder %s28, 0
    %p331 = por %p329, %p330
    %s332 = ssub.s32 %s22, %s29
    %p333 = scmp.eq.s32.totalorder %s332, 0
    %s335 = sadd.s32 %s334, 1
    %s336 = scalar_select %p333, %s334, %s335
    %p339 = pneg %p333
    %p340 = scmp.eq.s32.totalorder %s22, 1
    %p341 = por %p339, %p340
    %p342 = scmp.ne.s32.totalorder %s334, %s337
    %p343 = scmp.eq.s32.totalorder %s22, 0
    %p344 = por %p342, %p343
    %p345 = scmp.ne.s32.totalorder %s334, %s337
    %p346 = scmp.eq.s32.totalorder %s27, 1
    %p347 = por %p345, %p346
    %p348 = scmp.ne.s32.totalorder %s337, %s338
    %p349 = scmp.eq.s32.totalorder %s27, 0
    %p350 = por %p348, %p349
    %p351 = scmp.ne.s32.totalorder %s337, %s338
    %p352 = scmp.eq.s32.totalorder %s28, 1
    %p353 = por %p351, %p352
    %p355 = scmp.ne.s32.totalorder %s338, %s354
    %p356 = scmp.eq.s32.totalorder %s28, 0
    %p357 = por %p355, %p356
    %s358 = ssub.s32 %s22, %s29
    %p359 = scmp.eq.s32.totalorder %s358, 0
    %s361 = sadd.s32 %s360, 1
    %s362 = scalar_select %p359, %s360, %s361
    %p365 = pneg %p359
    %p366 = scmp.eq.s32.totalorder %s22, 1
    %p367 = por %p365, %p366
    %p368 = scmp.ne.s32.totalorder %s360, %s363
    %p369 = scmp.eq.s32.totalorder %s22, 0
    %p370 = por %p368, %p369
    %p371 = scmp.ne.s32.totalorder %s360, %s363
    %p372 = scmp.eq.s32.totalorder %s27, 1
    %p373 = por %p371, %p372
    %p374 = scmp.ne.s32.totalorder %s363, %s364
    %p375 = scmp.eq.s32.totalorder %s27, 0
    %p376 = por %p374, %p375
    %p377 = scmp.ne.s32.totalorder %s363, %s364
    %p378 = scmp.eq.s32.totalorder %s28, 1
    %p379 = por %p377, %p378
    %p381 = scmp.ne.s32.totalorder %s364, %s380
    %p382 = scmp.eq.s32.totalorder %s28, 0
    %p383 = por %p381, %p382
    %s384 = ssub.s32 %s22, %s29
    %p385 = scmp.eq.s32.totalorder %s384, 0
    %s387 = sadd.s32 %s386, 1
    %s388 = scalar_select %p385, %s386, %s387
    %p391 = pneg %p385
    %p392 = scmp.eq.s32.totalorder %s22, 1
    %p393 = por %p391, %p392
    %p394 = scmp.ne.s32.totalorder %s386, %s389
    %p395 = scmp.eq.s32.totalorder %s22, 0
    %p396 = por %p394, %p395
    %p397 = scmp.ne.s32.totalorder %s386, %s389
    %p398 = scmp.eq.s32.totalorder %s27, 1
    %p399 = por %p397, %p398
    %p400 = scmp.ne.s32.totalorder %s389, %s390
    %p401 = scmp.eq.s32.totalorder %s27, 0
    %p402 = por %p400, %p401
    %p403 = scmp.ne.s32.totalorder %s389, %s390
    %p404 = scmp.eq.s32.totalorder %s28, 1
    %p405 = por %p403, %p404
    %p407 = scmp.ne.s32.totalorder %s390, %s406
    %p408 = scmp.eq.s32.totalorder %s28, 0
    %p409 = por %p407, %p408
    %s410 = ssub.s32 %s22, %s29
    %p411 = scmp.eq.s32.totalorder %s410, 0
    %s413 = sadd.s32 %s412, 1
    %s414 = scalar_select %p411, %s412, %s413
    %p417 = pneg %p411
    %p418 = scmp.eq.s32.totalorder %s22, 1
    %p419 = por %p417, %p418
    %p420 = scmp.ne.s32.totalorder %s412, %s415
    %p421 = scmp.eq.s32.totalorder %s22, 0
    %p422 = por %p420, %p421
    %p423 = scmp.ne.s32.totalorder %s412, %s415
    %p424 = scmp.eq.s32.totalorder %s27, 1
    %p425 = por %p423, %p424
    %p426 = scmp.ne.s32.totalorder %s415, %s416
    %p427 = scmp.eq.s32.totalorder %s27, 0
    %p428 = por %p426, %p427
    %p429 = scmp.ne.s32.totalorder %s415, %s416
    %p430 = scmp.eq.s32.totalorder %s28, 1
    %p431 = por %p429, %p430
    %p433 = scmp.ne.s32.totalorder %s416, %s432
    %p434 = scmp.eq.s32.totalorder %s28, 0
    %p435 = por %p433, %p434
    %p436 = scmp.le.s32.totalorder 1, %s22
    %p437 = scmp.lt.s32.totalorder %s22, 3
    %p438 = pnand %p436, %p437
    %p439 = pneg %p438
    // Predicated region
    $region9: #{admm_net_forward.7} parent=5 // pred_check
      _
    $region10: #{admm_net_forward.7} parent=5 // pred_check_branch
      %441 = sbr.rel (%p438) target = $region12
    $region11: #{admm_net_forward.7} parent=5 // pred_region
      %s442 = ssub.s32 %s22, 1
      // Predicated region
      $region13: #{admm_net_forward.7} parent=11 // pred_check
        %p443 = pneg %p303
      $region14: #{admm_net_forward.7} parent=11 // pred_check_branch
        %445 = sbr.rel (%p443) target = $region16
      $region15: #{admm_net_forward.7} parent=11 // pred_region
        _
      $region16: #{admm_net_forward.7} parent=11 // pred_fallthru
        _
      // Predicated region
      $region17: #{admm_net_forward.7} parent=11 // pred_check
        %p446 = pneg %p324
      $region18: #{admm_net_forward.7} parent=11 // pred_check_branch
        %448 = sbr.rel (%p446) target = $region20
      $region19: #{admm_net_forward.7} parent=11 // pred_region
        _
      $region20: #{admm_net_forward.7} parent=11 // pred_fallthru
        _
    $region12: #{admm_net_forward.7} parent=5 // pred_fallthru
      _
    %p449 = scmp.lt.s32.totalorder %s22, 2
    // Predicated region
    $region21: #{admm_net_forward.7} parent=5 // pred_check
      %p450 = pneg %p449
    $region22: #{admm_net_forward.7} parent=5 // pred_check_branch
      %452 = sbr.rel (%p450) target = $region24
    $region23: #{admm_net_forward.7} parent=5 // pred_region
      // Predicated region
      $region25: #{admm_net_forward.7} parent=23 // pred_check
        %p453 = pneg %p42
      $region26: #{admm_net_forward.7} parent=23 // pred_check_branch
        %455 = sbr.rel (%p453) target = $region28
      $region27: #{admm_net_forward.7} parent=23 // pred_region
        %s456 = smul.u32 6, %s22
        %p457 = scmp.lt.s32.totalorder %s456, 11
        %s458 = scalar_select %p457, %s456, 11
        %s459 = smul.addr %s458, 8
        %s460 = scalar_lea.vmem %s0, %s459
        %s461 = smul.u32 6, %s22
      $region28: #{admm_net_forward.7} parent=23 // pred_fallthru
        _
      // Predicated region
      $region29: #{admm_net_forward.7} parent=23 // pred_check
        %p462 = pneg %p68
      $region30: #{admm_net_forward.7} parent=23 // pred_check_branch
        %464 = sbr.rel (%p462) target = $region32
      $region31: #{admm_net_forward.7} parent=23 // pred_region
        %s465 = smul.u32 6, %s22
        %p466 = scmp.lt.s32.totalorder %s465, 11
        %s467 = scalar_select %p466, %s465, 11
        %s468 = smul.addr %s467, 8
        %s469 = scalar_lea.vmem %s1, %s468
        %s470 = smul.u32 6, %s22
      $region32: #{admm_net_forward.7} parent=23 // pred_fallthru
        _
      // Predicated region
      $region33: #{admm_net_forward.7} parent=23 // pred_check
        %p471 = pneg %p94
      $region34: #{admm_net_forward.7} parent=23 // pred_check_branch
        %473 = sbr.rel (%p471) target = $region36
      $region35: #{admm_net_forward.7} parent=23 // pred_region
        %s474 = smul.u32 6, %s22
        %p475 = scmp.lt.s32.totalorder %s474, 11
        %s476 = scalar_select %p475, %s474, 11
        %s477 = smul.addr %s476, 8
        %s478 = scalar_lea.vmem %s2, %s477
        %s479 = smul.u32 6, %s22
      $region36: #{admm_net_forward.7} parent=23 // pred_fallthru
        _
      // Predicated region
      $region37: #{admm_net_forward.7} parent=23 // pred_check
        %p480 = pneg %p120
      $region38: #{admm_net_forward.7} parent=23 // pred_check_branch
        %482 = sbr.rel (%p480) target = $region40
      $region39: #{admm_net_forward.7} parent=23 // pred_region
        %s483 = smul.u32 6, %s22
        %p484 = scmp.lt.s32.totalorder %s483, 11
        %s485 = scalar_select %p484, %s483, 11
        %s486 = smul.addr %s485, 8
        %s487 = scalar_lea.vmem %s3, %s486
        %s488 = smul.u32 6, %s22
      $region40: #{admm_net_forward.7} parent=23 // pred_fallthru
        _
      // Predicated region
      $region41: #{admm_net_forward.7} parent=23 // pred_check
        %p489 = pneg %p146
      $region42: #{admm_net_forward.7} parent=23 // pred_check_branch
        %491 = sbr.rel (%p489) target = $region44
      $region43: #{admm_net_forward.7} parent=23 // pred_region
        %s492 = smul.u32 6, %s22
        %p493 = scmp.lt.s32.totalorder %s492, 11
        %s494 = scalar_select %p493, %s492, 11
        %s495 = smul.addr %s494, 8
        %s496 = scalar_lea.vmem %s4, %s495
        %s497 = smul.u32 6, %s22
      $region44: #{admm_net_forward.7} parent=23 // pred_fallthru
        _
      // Predicated region
      $region45: #{admm_net_forward.7} parent=23 // pred_check
        %p498 = pneg %p172
      $region46: #{admm_net_forward.7} parent=23 // pred_check_branch
        %500 = sbr.rel (%p498) target = $region48
      $region47: #{admm_net_forward.7} parent=23 // pred_region
        %s501 = smul.u32 6, %s22
        %p502 = scmp.lt.s32.totalorder %s501, 11
        %s503 = scalar_select %p502, %s501, 11
        %s504 = smul.addr %s503, 8
        %s505 = scalar_lea.vmem %s5, %s504
        %s506 = smul.u32 6, %s22
      $region48: #{admm_net_forward.7} parent=23 // pred_fallthru
        _
      // Predicated region
      $region49: #{admm_net_forward.7} parent=23 // pred_check
        %p507 = pneg %p198
      $region50: #{admm_net_forward.7} parent=23 // pred_check_branch
        %509 = sbr.rel (%p507) target = $region52
      $region51: #{admm_net_forward.7} parent=23 // pred_region
        %s510 = smul.u32 6, %s22
        %p511 = scmp.lt.s32.totalorder %s510, 11
        %s512 = scalar_select %p511, %s510, 11
        %s513 = smul.addr %s512, 8
        %s514 = scalar_lea.vmem %s6, %s513
        %s515 = smul.u32 6, %s22
      $region52: #{admm_net_forward.7} parent=23 // pred_fallthru
        _
      // Predicated region
      $region53: #{admm_net_forward.7} parent=23 // pred_check
        %p516 = pneg %p224
      $region54: #{admm_net_forward.7} parent=23 // pred_check_branch
        %518 = sbr.rel (%p516) target = $region56
      $region55: #{admm_net_forward.7} parent=23 // pred_region
        %s519 = smul.u32 6, %s22
        %p520 = scmp.lt.s32.totalorder %s519, 11
        %s521 = scalar_select %p520, %s519, 11
        %s522 = smul.addr %s521, 8
        %s523 = scalar_lea.vmem %s7, %s522
        %s524 = smul.u32 6, %s22
      $region56: #{admm_net_forward.7} parent=23 // pred_fallthru
        _
      // Predicated region
      $region57: #{admm_net_forward.7} parent=23 // pred_check
        %p525 = pneg %p250
      $region58: #{admm_net_forward.7} parent=23 // pred_check_branch
        %527 = sbr.rel (%p525) target = $region60
      $region59: #{admm_net_forward.7} parent=23 // pred_region
        %s528 = smul.u32 6, %s22
        %p529 = scmp.lt.s32.totalorder %s528, 11
        %s530 = scalar_select %p529, %s528, 11
        %s531 = smul.addr %s530, 8
        %s532 = scalar_lea.vmem %s8, %s531
        %s533 = smul.u32 6, %s22
      $region60: #{admm_net_forward.7} parent=23 // pred_fallthru
        _
      // Predicated region
      $region61: #{admm_net_forward.7} parent=23 // pred_check
        %p534 = pneg %p276
      $region62: #{admm_net_forward.7} parent=23 // pred_check_branch
        %536 = sbr.rel (%p534) target = $region64
      $region63: #{admm_net_forward.7} parent=23 // pred_region
        %s537 = smul.u32 6, %s22
        %p538 = scmp.lt.s32.totalorder %s537, 11
        %s539 = scalar_select %p538, %s537, 11
        %s540 = smul.addr %s539, 8
        %s541 = scalar_lea.vmem %s9, %s540
        %s542 = smul.u32 6, %s22
      $region64: #{admm_net_forward.7} parent=23 // pred_fallthru
        _
    $region24: #{admm_net_forward.7} parent=5 // pred_fallthru
      _
    %p543 = scmp.le.s32.totalorder 1, %s22
    %p544 = scmp.lt.s32.totalorder %s22, 3
    %p545 = pnand %p543, %p544
    %p546 = pneg %p545
    // Predicated region
    $region65: #{admm_net_forward.7} parent=5 // pred_check
      _
    $region66: #{admm_net_forward.7} parent=5 // pred_check_branch
      %548 = sbr.rel (%p545) target = $region68
    $region67: #{admm_net_forward.7} parent=5 // pred_region
      %s549 = ssub.s32 %s22, 1
      %s550 = smul.u32 6, %s27
      %p551 = scmp.lt.s32.totalorder %s550, 11
      %s552 = scalar_select %p551, %s550, 11
      %s553 = smul.addr %s552, 8
      %s554 = scalar_lea.vmem %s0, %s553
      %p555 = pneg %p48
      %p556 = pneg %p45
      %s557 = smul.u32 6, %s27
      %p558 = scmp.lt.s32.totalorder %s557, 11
      %s559 = scalar_select %p558, %s557, 11
      %s560 = smul.addr %s559, 8
      %s561 = scalar_lea.vmem %s1, %s560
      %p562 = pneg %p74
      %p563 = pneg %p71
      %s564 = smul.u32 6, %s27
      %p565 = scmp.lt.s32.totalorder %s564, 11
      %s566 = scalar_select %p565, %s564, 11
      %s567 = smul.addr %s566, 8
      %s568 = scalar_lea.vmem %s2, %s567
      %p569 = pneg %p100
      %p570 = pneg %p97
      %s571 = smul.u32 6, %s27
      %p572 = scmp.lt.s32.totalorder %s571, 11
      %s573 = scalar_select %p572, %s571, 11
      %s574 = smul.addr %s573, 8
      %s575 = scalar_lea.vmem %s3, %s574
      %p576 = pneg %p126
      %p577 = pneg %p123
      %s578 = smul.u32 6, %s27
      %p579 = scmp.lt.s32.totalorder %s578, 11
      %s580 = scalar_select %p579, %s578, 11
      %s581 = smul.addr %s580, 8
      %s582 = scalar_lea.vmem %s4, %s581
      %p583 = pneg %p152
      %p584 = pneg %p149
      %s585 = smul.u32 6, %s27
      %p586 = scmp.lt.s32.totalorder %s585, 11
      %s587 = scalar_select %p586, %s585, 11
      %s588 = smul.addr %s587, 8
      %s589 = scalar_lea.vmem %s5, %s588
      %p590 = pneg %p178
      %p591 = pneg %p175
      %s592 = smul.u32 6, %s27
      %p593 = scmp.lt.s32.totalorder %s592, 11
      %s594 = scalar_select %p593, %s592, 11
      %s595 = smul.addr %s594, 8
      %s596 = scalar_lea.vmem %s6, %s595
      %p597 = pneg %p204
      %p598 = pneg %p201
      %s599 = smul.u32 6, %s27
      %p600 = scmp.lt.s32.totalorder %s599, 11
      %s601 = scalar_select %p600, %s599, 11
      %s602 = smul.addr %s601, 8
      %s603 = scalar_lea.vmem %s7, %s602
      %p604 = pneg %p230
      %p605 = pneg %p227
      %s606 = smul.u32 6, %s27
      %p607 = scmp.lt.s32.totalorder %s606, 11
      %s608 = scalar_select %p607, %s606, 11
      %s609 = smul.addr %s608, 8
      %s610 = scalar_lea.vmem %s8, %s609
      %p611 = pneg %p256
      %p612 = pneg %p253
      %s613 = smul.u32 6, %s27
      %p614 = scmp.lt.s32.totalorder %s613, 11
      %s615 = scalar_select %p614, %s613, 11
      %s616 = smul.addr %s615, 8
      %s617 = scalar_lea.vmem %s9, %s616
      %p618 = pneg %p282
      %p619 = pneg %p279
      %p620 = pneg %p303
      %p621 = pneg %p300
      %p622 = pneg %p324
      %p623 = pneg %p321
      %p624 = pneg %p350
      %p625 = pneg %p347
      %s626 = smul.u32 6, %s27
      %p627 = scmp.lt.s32.totalorder %s626, 11
      %s628 = scalar_select %p627, %s626, 11
      %s629 = smul.addr %s628, 8
      %s630 = scalar_lea.vmem %s12, %s629
      %p631 = pneg %p376
      %p632 = pneg %p373
      %s633 = smul.u32 6, %s27
      %p634 = scmp.lt.s32.totalorder %s633, 11
      %s635 = scalar_select %p634, %s633, 11
      %s636 = smul.addr %s635, 8
      %s637 = scalar_lea.vmem %s13, %s636
      %p638 = pneg %p402
      %p639 = pneg %p399
      %s640 = smul.u32 6, %s27
      %p641 = scmp.lt.s32.totalorder %s640, 11
      %s642 = scalar_select %p641, %s640, 11
      %s643 = smul.addr %s642, 8
      %s644 = scalar_lea.vmem %s14, %s643
      %p645 = pneg %p428
      %p646 = pneg %p425
      %s647 = smul.u32 6, %s27
      %p648 = scmp.lt.s32.totalorder %s647, 11
      %s649 = scalar_select %p648, %s647, 11
      %s650 = smul.addr %s649, 8
      %s651 = scalar_lea.vmem %s15, %s650
      %s652 = smul.u32 6, %s27
      %p653 = scmp.lt.s32.totalorder %s652, 11
      %s654 = scalar_select %p653, %s652, 11
      %s655 = smul.addr %s654, 8
      %s656 = scalar_lea.vmem %s0, %s655
      %s657 = smul.u32 6, %s27
      %s658 = smul.u32 6, %s27
      %p659 = scmp.lt.s32.totalorder %s658, 11
      %s660 = scalar_select %p659, %s658, 11
      %s661 = smul.addr %s660, 8
      %s662 = scalar_lea.vmem %s1, %s661
      %s663 = smul.u32 6, %s27
      %s664 = smul.u32 6, %s27
      %p665 = scmp.lt.s32.totalorder %s664, 11
      %s666 = scalar_select %p665, %s664, 11
      %s667 = smul.addr %s666, 8
      %s668 = scalar_lea.vmem %s2, %s667
      %s669 = smul.u32 6, %s27
      %s670 = smul.u32 6, %s27
      %p671 = scmp.lt.s32.totalorder %s670, 11
      %s672 = scalar_select %p671, %s670, 11
      %s673 = smul.addr %s672, 8
      %s674 = scalar_lea.vmem %s3, %s673
      %s675 = smul.u32 6, %s27
      %s676 = smul.u32 6, %s27
      %p677 = scmp.lt.s32.totalorder %s676, 11
      %s678 = scalar_select %p677, %s676, 11
      %s679 = smul.addr %s678, 8
      %s680 = scalar_lea.vmem %s4, %s679
      %s681 = smul.u32 6, %s27
      %s682 = smul.u32 6, %s27
      %p683 = scmp.lt.s32.totalorder %s682, 11
      %s684 = scalar_select %p683, %s682, 11
      %s685 = smul.addr %s684, 8
      %s686 = scalar_lea.vmem %s5, %s685
      %s687 = smul.u32 6, %s27
      %s688 = smul.u32 6, %s27
      %p689 = scmp.lt.s32.totalorder %s688, 11
      %s690 = scalar_select %p689, %s688, 11
      %s691 = smul.addr %s690, 8
      %s692 = scalar_lea.vmem %s6, %s691
      %s693 = smul.u32 6, %s27
      %s694 = smul.u32 6, %s27
      %p695 = scmp.lt.s32.totalorder %s694, 11
      %s696 = scalar_select %p695, %s694, 11
      %s697 = smul.addr %s696, 8
      %s698 = scalar_lea.vmem %s7, %s697
      %s699 = smul.u32 6, %s27
      %s700 = smul.u32 6, %s27
      %p701 = scmp.lt.s32.totalorder %s700, 11
      %s702 = scalar_select %p701, %s700, 11
      %s703 = smul.addr %s702, 8
      %s704 = scalar_lea.vmem %s8, %s703
      %s705 = smul.u32 6, %s27
      %s706 = smul.u32 6, %s27
      %p707 = scmp.lt.s32.totalorder %s706, 11
      %s708 = scalar_select %p707, %s706, 11
      %s709 = smul.addr %s708, 8
      %s710 = scalar_lea.vmem %s9, %s709
      %s711 = smul.u32 6, %s27
      %s712 = smul.u32 6, %s27
      %p713 = scmp.lt.s32.totalorder %s712, 11
      %s714 = scalar_select %p713, %s712, 11
      %s715 = smul.addr %s714, 8
      %s716 = scalar_lea.vmem %s12, %s715
      %s717 = smul.u32 6, %s27
      %s718 = smul.u32 6, %s27
      %p719 = scmp.lt.s32.totalorder %s718, 11
      %s720 = scalar_select %p719, %s718, 11
      %s721 = smul.addr %s720, 8
      %s722 = scalar_lea.vmem %s13, %s721
      %s723 = smul.u32 6, %s27
      %s724 = smul.u32 6, %s27
      %p725 = scmp.lt.s32.totalorder %s724, 11
      %s726 = scalar_select %p725, %s724, 11
      %s727 = smul.addr %s726, 8
      %s728 = scalar_lea.vmem %s14, %s727
      %s729 = smul.u32 6, %s27
      %s730 = smul.u32 6, %s27
      %p731 = scmp.lt.s32.totalorder %s730, 11
      %s732 = scalar_select %p731, %s730, 11
      %s733 = smul.addr %s732, 8
      %s734 = scalar_lea.vmem %s15, %s733
      %s735 = smul.u32 6, %s27
      %v736 = vld [vmem:[%s656] sm:$0xff]
      %v737 = vld [vmem:[%s656 + $0x8] sm:$0xff]
      %v738 = vld [vmem:[%s656 + $0x10] sm:$0xff]
      %v739 = vld [vmem:[%s656 + $0x18] sm:$0xff]
      %v740 = vld [vmem:[%s656 + $0x20] sm:$0xff]
      %v741 = vld [vmem:[%s656 + $0x28] sm:$0xff]
      %v742 = vld [vmem:[%s10] sm:$0xff]
      %v743 = vld [vmem:[%s10 + $0x8] sm:$0xff]
      %v744 = vld [vmem:[%s10 + $0x10] sm:$0xff]
      %v745 = vld [vmem:[%s10 + $0x18] sm:$0xff]
      %v746 = vld [vmem:[%s10 + $0x20] sm:$0xff]
      %v747 = vld [vmem:[%s10 + $0x28] sm:$0xff]
      %v748 = vld [vmem:[%s11] sm:$0x1]
      %v749 = vrot.slane %v736, 1
      %v750 = vrot.slane %v737, 1
      %v751 = vrot.slane %v738, 1
      %v752 = vrot.slane %v739, 1
      %v753 = vrot.slane %v740, 1
      %v754 = vrot.slane %v741, 1
      %v755 = vlaneseq
      %v756 = vshrl.u32 %v755, 7
      %vm757 = vcmp.lt.s32.totalorder %v756, 7
      %v758 = vsel %vm757, %v753, %v754
      %v759 = vsel %vm757, %v752, %v753
      %v760 = vsel %vm757, %v751, %v752
      %v761 = vsel %vm757, %v750, %v751
      %v762 = vsel %vm757, %v749, %v750
      %v763 = vsel %vm757, %v754, %v749
      %v764 = vsub.f32 %v736, %v762
      %v765 = vsub.f32 %v737, %v761
      %v766 = vsub.f32 %v738, %v760
      %v767 = vsub.f32 %v739, %v759
      %v768 = vsub.f32 %v740, %v758
      %v769 = vsub.f32 %v741, %v763
      %771 = vset.pattern.permute.xlu0 0
      %772 = vperm.xlu0 %771, %v742
      %v773 = vpop.permute.xlu0 %772
      %776 = vset.pattern.permute.xlu0 0
      %777 = vperm.xlu0 %776, %v743
      %v778 = vpop.permute.xlu0 %777
      %781 = vset.pattern.permute.xlu0 0
      %782 = vperm.xlu0 %781, %v744
      %v783 = vpop.permute.xlu0 %782
      %786 = vset.pattern.permute.xlu0 0
      %787 = vperm.xlu0 %786, %v745
      %v788 = vpop.permute.xlu0 %787
      %791 = vset.pattern.permute.xlu0 0
      %792 = vperm.xlu0 %791, %v746
      %v793 = vpop.permute.xlu0 %792
      %796 = vset.pattern.permute.xlu0 0
      %797 = vperm.xlu0 %796, %v747
      %v798 = vpop.permute.xlu0 %797
      %v800 = vmul.f32 %v764, %v773
      %v801 = vmul.f32 %v765, %v778
      %v802 = vmul.f32 %v766, %v783
      %v803 = vmul.f32 %v767, %v788
      %v804 = vmul.f32 %v768, %v793
      %v805 = vmul.f32 %v769, %v798
      %806 = vrot.lane.b32.xlu0 %v736, 127
      %v807 = vpop.permute.xlu0 %806
      %808 = vrot.lane.b32.xlu0 %v737, 127
      %v809 = vpop.permute.xlu0 %808
      %810 = vrot.lane.b32.xlu0 %v738, 127
      %v811 = vpop.permute.xlu0 %810
      %812 = vrot.lane.b32.xlu0 %v739, 127
      %v813 = vpop.permute.xlu0 %812
      %814 = vrot.lane.b32.xlu0 %v740, 127
      %v815 = vpop.permute.xlu0 %814
      %816 = vrot.lane.b32.xlu0 %v741, 127
      %v817 = vpop.permute.xlu0 %816
      %v818 = vsub.f32 %v736, %v807
      %v819 = vsub.f32 %v737, %v809
      %v820 = vsub.f32 %v738, %v811
      %v821 = vsub.f32 %v739, %v813
      %v822 = vsub.f32 %v740, %v815
      %v823 = vsub.f32 %v741, %v817
      %v825 = vlaneseq
      %v826 = vshrl.u32 %v825, 7
      %v827 = vsub.s32 0, %v826
      %v828 = vrot.slane %v748, %v827
      %v830 = vmul.f32 %v818, %v828
      %v831 = vmul.f32 %v819, %v828
      %v832 = vmul.f32 %v820, %v828
      %v833 = vmul.f32 %v821, %v828
      %v834 = vmul.f32 %v822, %v828
      %v835 = vmul.f32 %v823, %v828
      %v836 = vld [vmem:[%s692] sm:$0xff]
      %v837 = vld [vmem:[%s692 + $0x8] sm:$0xff]
      %v838 = vld [vmem:[%s692 + $0x10] sm:$0xff]
      %v839 = vld [vmem:[%s692 + $0x18] sm:$0xff]
      %v840 = vld [vmem:[%s692 + $0x20] sm:$0xff]
      %v841 = vld [vmem:[%s692 + $0x28] sm:$0xff]
      %v842 = vld [vmem:[%s662] sm:$0xff]
      %v843 = vld [vmem:[%s662 + $0x8] sm:$0xff]
      %v844 = vld [vmem:[%s662 + $0x10] sm:$0xff]
      %v845 = vld [vmem:[%s662 + $0x18] sm:$0xff]
      %v846 = vld [vmem:[%s662 + $0x20] sm:$0xff]
      %v847 = vld [vmem:[%s662 + $0x28] sm:$0xff]
      %v848 = vld [vmem:[%s668] sm:$0xff]
      %v849 = vld [vmem:[%s668 + $0x8] sm:$0xff]
      %v850 = vld [vmem:[%s668 + $0x10] sm:$0xff]
      %v851 = vld [vmem:[%s668 + $0x18] sm:$0xff]
      %v852 = vld [vmem:[%s668 + $0x20] sm:$0xff]
      %v853 = vld [vmem:[%s668 + $0x28] sm:$0xff]
      %v854 = vsub.f32 %v842, %v848
      %v855 = vsub.f32 %v843, %v849
      %v856 = vsub.f32 %v844, %v850
      %v857 = vsub.f32 %v845, %v851
      %v858 = vsub.f32 %v846, %v852
      %v859 = vsub.f32 %v847, %v853
      %v860 = vmul.f32 %v854, 0.0001
      %v861 = vmul.f32 %v855, 0.0001
      %v862 = vmul.f32 %v856, 0.0001
      %v863 = vmul.f32 %v857, 0.0001
      %v864 = vmul.f32 %v858, 0.0001
      %v865 = vmul.f32 %v859, 0.0001
      %v866 = vadd.f32 %v836, %v860
      %v867 = vadd.f32 %v837, %v861
      %v868 = vadd.f32 %v838, %v862
      %v869 = vadd.f32 %v839, %v863
      %v870 = vadd.f32 %v840, %v864
      %v871 = vadd.f32 %v841, %v865
      %872 = vst [vmem:[%s716] sm:$0xff] %v866
      %873 = vst [vmem:[%s716 + $0x8] sm:$0xff] %v867
      %874 = vst [vmem:[%s716 + $0x10] sm:$0xff] %v868
      %875 = vst [vmem:[%s716 + $0x18] sm:$0xff] %v869
      %876 = vst [vmem:[%s716 + $0x20] sm:$0xff] %v870
      %877 = vst [vmem:[%s716 + $0x28] sm:$0xff] %v871
      %v878 = vld [vmem:[%s698] sm:$0xff]
      %v879 = vld [vmem:[%s698 + $0x8] sm:$0xff]
      %v880 = vld [vmem:[%s698 + $0x10] sm:$0xff]
      %v881 = vld [vmem:[%s698 + $0x18] sm:$0xff]
      %v882 = vld [vmem:[%s698 + $0x20] sm:$0xff]
      %v883 = vld [vmem:[%s698 + $0x28] sm:$0xff]
      %v884 = vld [vmem:[%s674] sm:$0xff]
      %v885 = vld [vmem:[%s674 + $0x8] sm:$0xff]
      %v886 = vld [vmem:[%s674 + $0x10] sm:$0xff]
      %v887 = vld [vmem:[%s674 + $0x18] sm:$0xff]
      %v888 = vld [vmem:[%s674 + $0x20] sm:$0xff]
      %v889 = vld [vmem:[%s674 + $0x28] sm:$0xff]
      %v890 = vsub.f32 %v800, %v884
      %v891 = vsub.f32 %v801, %v885
      %v892 = vsub.f32 %v802, %v886
      %v893 = vsub.f32 %v803, %v887
      %v894 = vsub.f32 %v804, %v888
      %v895 = vsub.f32 %v805, %v889
      %v896 = vmul.f32 %v890, 0.0001
      %v897 = vmul.f32 %v891, 0.0001
      %v898 = vmul.f32 %v892, 0.0001
      %v899 = vmul.f32 %v893, 0.0001
      %v900 = vmul.f32 %v894, 0.0001
      %v901 = vmul.f32 %v895, 0.0001
      %v902 = vadd.f32 %v878, %v896
      %v903 = vadd.f32 %v879, %v897
      %v904 = vadd.f32 %v880, %v898
      %v905 = vadd.f32 %v881, %v899
      %v906 = vadd.f32 %v882, %v900
      %v907 = vadd.f32 %v883, %v901
      %908 = vst [vmem:[%s722] sm:$0xff] %v902
      %909 = vst [vmem:[%s722 + $0x8] sm:$0xff] %v903
      %910 = vst [vmem:[%s722 + $0x10] sm:$0xff] %v904
      %911 = vst [vmem:[%s722 + $0x18] sm:$0xff] %v905
      %912 = vst [vmem:[%s722 + $0x20] sm:$0xff] %v906
      %913 = vst [vmem:[%s722 + $0x28] sm:$0xff] %v907
      %v914 = vld [vmem:[%s704] sm:$0xff]
      %v915 = vld [vmem:[%s704 + $0x8] sm:$0xff]
      %v916 = vld [vmem:[%s704 + $0x10] sm:$0xff]
      %v917 = vld [vmem:[%s704 + $0x18] sm:$0xff]
      %v918 = vld [vmem:[%s704 + $0x20] sm:$0xff]
      %v919 = vld [vmem:[%s704 + $0x28] sm:$0xff]
      %v920 = vld [vmem:[%s680] sm:$0xff]
      %v921 = vld [vmem:[%s680 + $0x8] sm:$0xff]
      %v922 = vld [vmem:[%s680 + $0x10] sm:$0xff]
      %v923 = vld [vmem:[%s680 + $0x18] sm:$0xff]
      %v924 = vld [vmem:[%s680 + $0x20] sm:$0xff]
      %v925 = vld [vmem:[%s680 + $0x28] sm:$0xff]
      %v926 = vsub.f32 %v830, %v920
      %v927 = vsub.f32 %v831, %v921
      %v928 = vsub.f32 %v832, %v922
      %v929 = vsub.f32 %v833, %v923
      %v930 = vsub.f32 %v834, %v924
      %v931 = vsub.f32 %v835, %v925
      %v932 = vmul.f32 %v926, 0.0001
      %v933 = vmul.f32 %v927, 0.0001
      %v934 = vmul.f32 %v928, 0.0001
      %v935 = vmul.f32 %v929, 0.0001
      %v936 = vmul.f32 %v930, 0.0001
      %v937 = vmul.f32 %v931, 0.0001
      %v938 = vadd.f32 %v914, %v932
      %v939 = vadd.f32 %v915, %v933
      %v940 = vadd.f32 %v916, %v934
      %v941 = vadd.f32 %v917, %v935
      %v942 = vadd.f32 %v918, %v936
      %v943 = vadd.f32 %v919, %v937
      %944 = vst [vmem:[%s728] sm:$0xff] %v938
      %945 = vst [vmem:[%s728 + $0x8] sm:$0xff] %v939
      %946 = vst [vmem:[%s728 + $0x10] sm:$0xff] %v940
      %947 = vst [vmem:[%s728 + $0x18] sm:$0xff] %v941
      %948 = vst [vmem:[%s728 + $0x20] sm:$0xff] %v942
      %949 = vst [vmem:[%s728 + $0x28] sm:$0xff] %v943
      %v950 = vld [vmem:[%s710] sm:$0xff]
      %v951 = vld [vmem:[%s710 + $0x8] sm:$0xff]
      %v952 = vld [vmem:[%s710 + $0x10] sm:$0xff]
      %v953 = vld [vmem:[%s710 + $0x18] sm:$0xff]
      %v954 = vld [vmem:[%s710 + $0x20] sm:$0xff]
      %v955 = vld [vmem:[%s710 + $0x28] sm:$0xff]
      %v956 = vld [vmem:[%s686] sm:$0xff]
      %v957 = vld [vmem:[%s686 + $0x8] sm:$0xff]
      %v958 = vld [vmem:[%s686 + $0x10] sm:$0xff]
      %v959 = vld [vmem:[%s686 + $0x18] sm:$0xff]
      %v960 = vld [vmem:[%s686 + $0x20] sm:$0xff]
      %v961 = vld [vmem:[%s686 + $0x28] sm:$0xff]
      %v962 = vsub.f32 %v736, %v956
      %v963 = vsub.f32 %v737, %v957
      %v964 = vsub.f32 %v738, %v958
      %v965 = vsub.f32 %v739, %v959
      %v966 = vsub.f32 %v740, %v960
      %v967 = vsub.f32 %v741, %v961
      %v968 = vmul.f32 %v962, 0.0001
      %v969 = vmul.f32 %v963, 0.0001
      %v970 = vmul.f32 %v964, 0.0001
      %v971 = vmul.f32 %v965, 0.0001
      %v972 = vmul.f32 %v966, 0.0001
      %v973 = vmul.f32 %v967, 0.0001
      %v974 = vadd.f32 %v950, %v968
      %v975 = vadd.f32 %v951, %v969
      %v976 = vadd.f32 %v952, %v970
      %v977 = vadd.f32 %v953, %v971
      %v978 = vadd.f32 %v954, %v972
      %v979 = vadd.f32 %v955, %v973
      %980 = vst [vmem:[%s734] sm:$0xff] %v974
      %981 = vst [vmem:[%s734 + $0x8] sm:$0xff] %v975
      %982 = vst [vmem:[%s734 + $0x10] sm:$0xff] %v976
      %983 = vst [vmem:[%s734 + $0x18] sm:$0xff] %v977
      %984 = vst [vmem:[%s734 + $0x20] sm:$0xff] %v978
      %985 = vst [vmem:[%s734 + $0x28] sm:$0xff] %v979
      %s986 = smul.u32 6, %s27
      %p987 = scmp.lt.s32.totalorder %s986, 11
      %s988 = scalar_select %p987, %s986, 11
      %s989 = smul.addr %s988, 8
      %s990 = scalar_lea.vmem %s12, %s989
      %s991 = smul.u32 6, %s27
      %p992 = scmp.lt.s32.totalorder %s991, 11
      %s993 = scalar_select %p992, %s991, 11
      %s994 = smul.addr %s993, 8
      %s995 = scalar_lea.vmem %s13, %s994
      %s996 = smul.u32 6, %s27
      %p997 = scmp.lt.s32.totalorder %s996, 11
      %s998 = scalar_select %p997, %s996, 11
      %s999 = smul.addr %s998, 8
      %s1000 = scalar_lea.vmem %s14, %s999
      %s1001 = smul.u32 6, %s27
      %p1002 = scmp.lt.s32.totalorder %s1001, 11
      %s1003 = scalar_select %p1002, %s1001, 11
      %s1004 = smul.addr %s1003, 8
      %s1005 = scalar_lea.vmem %s15, %s1004
      // Predicated region
      $region69: #{admm_net_forward.7} parent=67 // pred_check
        %p1006 = pneg %p347
      $region70: #{admm_net_forward.7} parent=67 // pred_check_branch
        %1008 = sbr.rel (%p1006) target = $region72
      $region71: #{admm_net_forward.7} parent=67 // pred_region
        %s1009 = smul.u32 6, %s27
      $region72: #{admm_net_forward.7} parent=67 // pred_fallthru
        _
      // Predicated region
      $region73: #{admm_net_forward.7} parent=67 // pred_check
        %p1010 = pneg %p373
      $region74: #{admm_net_forward.7} parent=67 // pred_check_branch
        %1012 = sbr.rel (%p1010) target = $region76
      $region75: #{admm_net_forward.7} parent=67 // pred_region
        %s1013 = smul.u32 6, %s27
      $region76: #{admm_net_forward.7} parent=67 // pred_fallthru
        _
      // Predicated region
      $region77: #{admm_net_forward.7} parent=67 // pred_check
        %p1014 = pneg %p399
      $region78: #{admm_net_forward.7} parent=67 // pred_check_branch
        %1016 = sbr.rel (%p1014) target = $region80
      $region79: #{admm_net_forward.7} parent=67 // pred_region
        %s1017 = smul.u32 6, %s27
      $region80: #{admm_net_forward.7} parent=67 // pred_fallthru
        _
      // Predicated region
      $region81: #{admm_net_forward.7} parent=67 // pred_check
        %p1018 = pneg %p425
      $region82: #{admm_net_forward.7} parent=67 // pred_check_branch
        %1020 = sbr.rel (%p1018) target = $region84
      $region83: #{admm_net_forward.7} parent=67 // pred_region
        %s1021 = smul.u32 6, %s27
      $region84: #{admm_net_forward.7} parent=67 // pred_fallthru
        _
    $region68: #{admm_net_forward.7} parent=5 // pred_fallthru
      _
    %p1022 = scmp.le.s32.totalorder 2, %s22
    // Predicated region
    $region85: #{admm_net_forward.7} parent=5 // pred_check
      %p1023 = pneg %p1022
    $region86: #{admm_net_forward.7} parent=5 // pred_check_branch
      %1025 = sbr.rel (%p1023) target = $region88
    $region87: #{admm_net_forward.7} parent=5 // pred_region
      %s1026 = ssub.s32 %s22, 2
      // Predicated region
      $region89: #{admm_net_forward.7} parent=87 // pred_check
        %p1027 = pneg %p353
      $region90: #{admm_net_forward.7} parent=87 // pred_check_branch
        %1029 = sbr.rel (%p1027) target = $region92
      $region91: #{admm_net_forward.7} parent=87 // pred_region
        %s1030 = smul.u32 6, %s28
        %p1031 = scmp.lt.s32.totalorder %s1030, 11
        %s1032 = scalar_select %p1031, %s1030, 11
        %s1033 = smul.addr %s1032, 8
        %s1034 = scalar_lea.vmem %s12, %s1033
      $region92: #{admm_net_forward.7} parent=87 // pred_fallthru
        _
      // Predicated region
      $region93: #{admm_net_forward.7} parent=87 // pred_check
        %p1035 = pneg %p379
      $region94: #{admm_net_forward.7} parent=87 // pred_check_branch
        %1037 = sbr.rel (%p1035) target = $region96
      $region95: #{admm_net_forward.7} parent=87 // pred_region
        %s1038 = smul.u32 6, %s28
        %p1039 = scmp.lt.s32.totalorder %s1038, 11
        %s1040 = scalar_select %p1039, %s1038, 11
        %s1041 = smul.addr %s1040, 8
        %s1042 = scalar_lea.vmem %s13, %s1041
      $region96: #{admm_net_forward.7} parent=87 // pred_fallthru
        _
      // Predicated region
      $region97: #{admm_net_forward.7} parent=87 // pred_check
        %p1043 = pneg %p405
      $region98: #{admm_net_forward.7} parent=87 // pred_check_branch
        %1045 = sbr.rel (%p1043) target = $region100
      $region99: #{admm_net_forward.7} parent=87 // pred_region
        %s1046 = smul.u32 6, %s28
        %p1047 = scmp.lt.s32.totalorder %s1046, 11
        %s1048 = scalar_select %p1047, %s1046, 11
        %s1049 = smul.addr %s1048, 8
        %s1050 = scalar_lea.vmem %s14, %s1049
      $region100: #{admm_net_forward.7} parent=87 // pred_fallthru
        _
      // Predicated region
      $region101: #{admm_net_forward.7} parent=87 // pred_check
        %p1051 = pneg %p431
      $region102: #{admm_net_forward.7} parent=87 // pred_check_branch
        %1053 = sbr.rel (%p1051) target = $region104
      $region103: #{admm_net_forward.7} parent=87 // pred_region
        %s1054 = smul.u32 6, %s28
        %p1055 = scmp.lt.s32.totalorder %s1054, 11
        %s1056 = scalar_select %p1055, %s1054, 11
        %s1057 = smul.addr %s1056, 8
        %s1058 = scalar_lea.vmem %s15, %s1057
      $region104: #{admm_net_forward.7} parent=87 // pred_fallthru
        _
    $region88: #{admm_net_forward.7} parent=5 // pred_fallthru
      _
  $region6: #{admm_net_forward.7} parent=0 // loop_footer
    %s26 = sadd.s32 1, %s22
  $region7: #{admm_net_forward.7} parent=0 // loop_footer_branch
    %21 = sbr.rel target = $region3
  $region8: #{admm_net_forward.7} parent=0 // loop_exit
    _

// kernel: admm_net_forward.10
$region0: #{admm_net_forward.10}
  #allocation0 [shape = 'u32[]', space=smem, size = 0x4, offset = 0x4, fixed_abs, tag = 'smem constant byte address 0x4 - core index']
  #allocation1 [shape = 'u32[144,128]{1,0:T(1,128)}', space=vmem, size = 0x12000, scoped, tag = 'internal scratch']
  %s0 = inlined_call_operand.vmem [shape: f32[96,128], index: 0, kind: input, shape index: {}]
  %s1 = inlined_call_operand.vmem [shape: f32[96,128], index: 1, kind: input, shape index: {}]
  %s2 = inlined_call_operand.vmem [shape: f32[96,128], index: 2, kind: input, shape index: {}]
  %s3 = inlined_call_operand.vmem [shape: f32[96,128], index: 3, kind: input, shape index: {}]
  %s4 = inlined_call_operand.vmem [shape: f32[96,128], index: 4, kind: input, shape index: {}]
  %s5 = inlined_call_operand.vmem [shape: f32[96,128], index: 5, kind: input, shape index: {}]
  %s6 = inlined_call_operand.vmem [shape: f32[96,128], index: 6, kind: input, shape index: {}]
  %s7 = inlined_call_operand.vmem [shape: f32[48,128], index: 7, kind: input, shape index: {}]
  %s8 = inlined_call_operand.vmem [shape: f32[48,1], index: 8, kind: input, shape index: {}]
  %s9 = inlined_call_operand.vmem [shape: f32[48,1], index: 9, kind: input, shape index: {}]
  %s10 = inlined_call_operand.vmem [shape: f32[1,128], index: 10, kind: input, shape index: {}]
  %s11 = inlined_call_operand.vmem [shape: f32[1,128], index: 11, kind: input, shape index: {}]
  %s12 = inlined_call_operand.hbm [shape: f32[96,128], index: 12, kind: output, shape index: {0}]
  %s13 = inlined_call_operand.hbm [shape: f32[96,128], index: 13, kind: output, shape index: {1}]
  %s14 = inlined_call_operand.hbm [shape: f32[96,128], index: 14, kind: output, shape index: {2}]
  %s15 = inlined_call_operand.hbm [shape: f32[96,128], index: 15, kind: output, shape index: {3}]
  %s16 = inlined_call_operand.vmem [shape: f32[96,128], index: 16, kind: output, shape index: {4}]
  %s17 = inlined_call_operand.vmem [shape: f32[96,128], index: 17, kind: output, shape index: {5}]
  %18 = xla_tuple %s12, %s13, %s14, %s15, %s16, %s17
  %s19 = sld [smem:[#allocation0]]
  $region121: #{admm_net_forward.10} parent=0
    _
  %s21 = ssub.s32 1, %s19
  %s22 = scalar_select 0, %s21, %s19
  $region1: #{admm_net_forward.10} parent=0
    #allocation2 [shape = 'u8[49152]{0}', space=vmem, size = 0xc000, scoped, tag = 'output window, operand 0']
    #allocation3 [shape = 's32[2]{0}', space=sflag, size = 0x8, scoped, tag = 'scoped memory for admm_net_forward.10']
    #allocation4 [shape = 'u8[49152]{0}', space=vmem, size = 0xc000, scoped, tag = 'output window, operand 1']
    #allocation5 [shape = 's32[2]{0}', space=sflag, size = 0x8, scoped, tag = 'scoped memory for admm_net_forward.10']
    #allocation6 [shape = 'u8[49152]{0}', space=vmem, size = 0xc000, scoped, tag = 'output window, operand 2']
    #allocation7 [shape = 'u8[49152]{0}', space=vmem, size = 0xc000, scoped, tag = 'output window, operand 3']
    #allocation8 [shape = 's32[2]{0}', space=sflag, size = 0x8, scoped, tag = 'scoped memory for admm_net_forward.10']
    %23 = vsyncpa [#allocation3], 0
    %s24 = scalar_lea.sflag [#allocation3], 1
    %25 = vsyncpa %s24, 0
    %26 = vsyncpa [#allocation5], 0
    %s27 = scalar_lea.sflag [#allocation5], 1
    %28 = vsyncpa %s27, 0
    %29 = vsyncpa [#allocation8], 0
    %s30 = scalar_lea.sflag [#allocation8], 1
    %31 = vsyncpa %s30, 0
    loop: start=0, step=1, limit=4
    $region2: #{admm_net_forward.10} parent=1 // loop_pre_header
      _
    $region3: #{admm_net_forward.10} parent=1 // loop_header
      %s33 = sphi 0, %s37
      %p34 = scmp.ge.s32.totalorder %s33, 4
      %s43 = sphi 0, %s45
      %s46 = sphi 0, %s43
      %s47 = sphi 0, %s46
      %s63 = sphi 0, %s47
      %s69 = sphi 0, %s71
      %s72 = sphi 0, %s69
      %s73 = sphi 0, %s72
      %s89 = sphi 0, %s73
      %s95 = sphi 0, %s97
      %s98 = sphi 0, %s95
      %s99 = sphi 0, %s98
      %s115 = sphi 0, %s99
      %s121 = sphi 0, %s123
      %s124 = sphi 0, %s121
      %s125 = sphi 0, %s124
      %s141 = sphi 0, %s125
      %s147 = sphi 0, %s149
      %s150 = sphi 0, %s147
      %s151 = sphi 0, %s150
      %s167 = sphi 0, %s151
      %s173 = sphi 0, %s175
      %s176 = sphi 0, %s173
      %s177 = sphi 0, %s176
      %s193 = sphi 0, %s177
      %s199 = sphi 0, %s201
      %s202 = sphi 0, %s199
      %s203 = sphi 0, %s202
      %s219 = sphi 0, %s203
      %s223 = sphi 0, %s223
      %s225 = sphi 0, %s223
      %s226 = sphi 0, %s225
      %s240 = sphi 0, %s226
      %s244 = sphi 0, %s244
      %s246 = sphi 0, %s244
      %s247 = sphi 0, %s246
      %s261 = sphi 0, %s247
      %s265 = sphi 0, %s265
      %s267 = sphi 0, %s265
      %s268 = sphi 0, %s267
      %s282 = sphi 0, %s268
      %s286 = sphi 0, %s286
      %s288 = sphi 0, %s286
      %s289 = sphi 0, %s288
      %s303 = sphi 0, %s289
      %s307 = sphi 0, %s307
      %s309 = sphi 0, %s307
      %s310 = sphi 0, %s309
      %s324 = sphi 0, %s310
      %s330 = sphi 0, %s332
      %s333 = sphi 0, %s330
      %s334 = sphi 0, %s333
      %s350 = sphi 0, %s334
      %s356 = sphi 0, %s358
      %s359 = sphi 0, %s356
      %s360 = sphi 0, %s359
      %s376 = sphi 0, %s360
      %s382 = sphi 0, %s384
      %s385 = sphi 0, %s382
      %s386 = sphi 0, %s385
      %s402 = sphi 0, %s386
      %s408 = sphi 0, %s410
      %s411 = sphi 0, %s408
      %s412 = sphi 0, %s411
      %s428 = sphi 0, %s412
      %s434 = sphi 0, %s436
      %s437 = sphi 0, %s434
      %s438 = sphi 0, %s437
      %s454 = sphi 0, %s438
      %s460 = sphi 0, %s462
      %s463 = sphi 0, %s460
      %s464 = sphi 0, %s463
      %s480 = sphi 0, %s464
    $region4: #{admm_net_forward.10} parent=1 // loop_header_branch
      %36 = sbr.rel (%p34) target = $region8
    $region5: #{admm_net_forward.10} parent=1 // loop_body
      %s38 = ssub.s32 %s33, 1
      %s39 = ssub.s32 %s33, 2
      %s40 = sadd.s32 %s33, 1
      %s41 = ssub.s32 %s33, %s40
      %p42 = scmp.eq.s32.totalorder %s41, 0
      %s44 = sadd.s32 %s43, 1
      %s45 = scalar_select %p42, %s43, %s44
      %p48 = pneg %p42
      %p49 = scmp.eq.s32.totalorder %s33, 1
      %p50 = por %p48, %p49
      %p51 = scmp.ne.s32.totalorder %s43, %s46
      %p52 = scmp.eq.s32.totalorder %s33, 0
      %p53 = por %p51, %p52
      %p54 = scmp.ne.s32.totalorder %s43, %s46
      %p55 = scmp.eq.s32.totalorder %s38, 1
      %p56 = por %p54, %p55
      %p57 = scmp.ne.s32.totalorder %s46, %s47
      %p58 = scmp.eq.s32.totalorder %s38, 0
      %p59 = por %p57, %p58
      %p60 = scmp.ne.s32.totalorder %s46, %s47
      %p61 = scmp.eq.s32.totalorder %s39, 1
      %p62 = por %p60, %p61
      %p64 = scmp.ne.s32.totalorder %s47, %s63
      %p65 = scmp.eq.s32.totalorder %s39, 0
      %p66 = por %p64, %p65
      %s67 = ssub.s32 %s33, %s40
      %p68 = scmp.eq.s32.totalorder %s67, 0
      %s70 = sadd.s32 %s69, 1
      %s71 = scalar_select %p68, %s69, %s70
      %p74 = pneg %p68
      %p75 = scmp.eq.s32.totalorder %s33, 1
      %p76 = por %p74, %p75
      %p77 = scmp.ne.s32.totalorder %s69, %s72
      %p78 = scmp.eq.s32.totalorder %s33, 0
      %p79 = por %p77, %p78
      %p80 = scmp.ne.s32.totalorder %s69, %s72
      %p81 = scmp.eq.s32.totalorder %s38, 1
      %p82 = por %p80, %p81
      %p83 = scmp.ne.s32.totalorder %s72, %s73
      %p84 = scmp.eq.s32.totalorder %s38, 0
      %p85 = por %p83, %p84
      %p86 = scmp.ne.s32.totalorder %s72, %s73
      %p87 = scmp.eq.s32.totalorder %s39, 1
      %p88 = por %p86, %p87
      %p90 = scmp.ne.s32.totalorder %s73, %s89
      %p91 = scmp.eq.s32.totalorder %s39, 0
      %p92 = por %p90, %p91
      %s93 = ssub.s32 %s33, %s40
      %p94 = scmp.eq.s32.totalorder %s93, 0
      %s96 = sadd.s32 %s95, 1
      %s97 = scalar_select %p94, %s95, %s96
      %p100 = pneg %p94
      %p101 = scmp.eq.s32.totalorder %s33, 1
      %p102 = por %p100, %p101
      %p103 = scmp.ne.s32.totalorder %s95, %s98
      %p104 = scmp.eq.s32.totalorder %s33, 0
      %p105 = por %p103, %p104
      %p106 = scmp.ne.s32.totalorder %s95, %s98
      %p107 = scmp.eq.s32.totalorder %s38, 1
      %p108 = por %p106, %p107
      %p109 = scmp.ne.s32.totalorder %s98, %s99
      %p110 = scmp.eq.s32.totalorder %s38, 0
      %p111 = por %p109, %p110
      %p112 = scmp.ne.s32.totalorder %s98, %s99
      %p113 = scmp.eq.s32.totalorder %s39, 1
      %p114 = por %p112, %p113
      %p116 = scmp.ne.s32.totalorder %s99, %s115
      %p117 = scmp.eq.s32.totalorder %s39, 0
      %p118 = por %p116, %p117
      %s119 = ssub.s32 %s33, %s40
      %p120 = scmp.eq.s32.totalorder %s119, 0
      %s122 = sadd.s32 %s121, 1
      %s123 = scalar_select %p120, %s121, %s122
      %p126 = pneg %p120
      %p127 = scmp.eq.s32.totalorder %s33, 1
      %p128 = por %p126, %p127
      %p129 = scmp.ne.s32.totalorder %s121, %s124
      %p130 = scmp.eq.s32.totalorder %s33, 0
      %p131 = por %p129, %p130
      %p132 = scmp.ne.s32.totalorder %s121, %s124
      %p133 = scmp.eq.s32.totalorder %s38, 1
      %p134 = por %p132, %p133
      %p135 = scmp.ne.s32.totalorder %s124, %s125
      %p136 = scmp.eq.s32.totalorder %s38, 0
      %p137 = por %p135, %p136
      %p138 = scmp.ne.s32.totalorder %s124, %s125
      %p139 = scmp.eq.s32.totalorder %s39, 1
      %p140 = por %p138, %p139
      %p142 = scmp.ne.s32.totalorder %s125, %s141
      %p143 = scmp.eq.s32.totalorder %s39, 0
      %p144 = por %p142, %p143
      %s145 = ssub.s32 %s33, %s40
      %p146 = scmp.eq.s32.totalorder %s145, 0
      %s148 = sadd.s32 %s147, 1
      %s149 = scalar_select %p146, %s147, %s148
      %p152 = pneg %p146
      %p153 = scmp.eq.s32.totalorder %s33, 1
      %p154 = por %p152, %p153
      %p155 = scmp.ne.s32.totalorder %s147, %s150
      %p156 = scmp.eq.s32.totalorder %s33, 0
      %p157 = por %p155, %p156
      %p158 = scmp.ne.s32.totalorder %s147, %s150
      %p159 = scmp.eq.s32.totalorder %s38, 1
      %p160 = por %p158, %p159
      %p161 = scmp.ne.s32.totalorder %s150, %s151
      %p162 = scmp.eq.s32.totalorder %s38, 0
      %p163 = por %p161, %p162
      %p164 = scmp.ne.s32.totalorder %s150, %s151
      %p165 = scmp.eq.s32.totalorder %s39, 1
      %p166 = por %p164, %p165
      %p168 = scmp.ne.s32.totalorder %s151, %s167
      %p169 = scmp.eq.s32.totalorder %s39, 0
      %p170 = por %p168, %p169
      %s171 = ssub.s32 %s33, %s40
      %p172 = scmp.eq.s32.totalorder %s171, 0
      %s174 = sadd.s32 %s173, 1
      %s175 = scalar_select %p172, %s173, %s174
      %p178 = pneg %p172
      %p179 = scmp.eq.s32.totalorder %s33, 1
      %p180 = por %p178, %p179
      %p181 = scmp.ne.s32.totalorder %s173, %s176
      %p182 = scmp.eq.s32.totalorder %s33, 0
      %p183 = por %p181, %p182
      %p184 = scmp.ne.s32.totalorder %s173, %s176
      %p185 = scmp.eq.s32.totalorder %s38, 1
      %p186 = por %p184, %p185
      %p187 = scmp.ne.s32.totalorder %s176, %s177
      %p188 = scmp.eq.s32.totalorder %s38, 0
      %p189 = por %p187, %p188
      %p190 = scmp.ne.s32.totalorder %s176, %s177
      %p191 = scmp.eq.s32.totalorder %s39, 1
      %p192 = por %p190, %p191
      %p194 = scmp.ne.s32.totalorder %s177, %s193
      %p195 = scmp.eq.s32.totalorder %s39, 0
      %p196 = por %p194, %p195
      %s197 = ssub.s32 %s33, %s40
      %p198 = scmp.eq.s32.totalorder %s197, 0
      %s200 = sadd.s32 %s199, 1
      %s201 = scalar_select %p198, %s199, %s200
      %p204 = pneg %p198
      %p205 = scmp.eq.s32.totalorder %s33, 1
      %p206 = por %p204, %p205
      %p207 = scmp.ne.s32.totalorder %s199, %s202
      %p208 = scmp.eq.s32.totalorder %s33, 0
      %p209 = por %p207, %p208
      %p210 = scmp.ne.s32.totalorder %s199, %s202
      %p211 = scmp.eq.s32.totalorder %s38, 1
      %p212 = por %p210, %p211
      %p213 = scmp.ne.s32.totalorder %s202, %s203
      %p214 = scmp.eq.s32.totalorder %s38, 0
      %p215 = por %p213, %p214
      %p216 = scmp.ne.s32.totalorder %s202, %s203
      %p217 = scmp.eq.s32.totalorder %s39, 1
      %p218 = por %p216, %p217
      %p220 = scmp.ne.s32.totalorder %s203, %s219
      %p221 = scmp.eq.s32.totalorder %s39, 0
      %p222 = por %p220, %p221
      %s224 = sadd.s32 %s223, 1
      %p227 = scmp.eq.s32.totalorder %s33, 1
      %p228 = scmp.ne.s32.totalorder %s223, %s225
      %p229 = scmp.eq.s32.totalorder %s33, 0
      %p230 = por %p228, %p229
      %p231 = scmp.ne.s32.totalorder %s223, %s225
      %p232 = scmp.eq.s32.totalorder %s38, 1
      %p233 = por %p231, %p232
      %p234 = scmp.ne.s32.totalorder %s225, %s226
      %p235 = scmp.eq.s32.totalorder %s38, 0
      %p236 = por %p234, %p235
      %p237 = scmp.ne.s32.totalorder %s225, %s226
      %p238 = scmp.eq.s32.totalorder %s39, 1
      %p239 = por %p237, %p238
      %p241 = scmp.ne.s32.totalorder %s226, %s240
      %p242 = scmp.eq.s32.totalorder %s39, 0
      %p243 = por %p241, %p242
      %s245 = sadd.s32 %s244, 1
      %p248 = scmp.eq.s32.totalorder %s33, 1
      %p249 = scmp.ne.s32.totalorder %s244, %s246
      %p250 = scmp.eq.s32.totalorder %s33, 0
      %p251 = por %p249, %p250
      %p252 = scmp.ne.s32.totalorder %s244, %s246
      %p253 = scmp.eq.s32.totalorder %s38, 1
      %p254 = por %p252, %p253
      %p255 = scmp.ne.s32.totalorder %s246, %s247
      %p256 = scmp.eq.s32.totalorder %s38, 0
      %p257 = por %p255, %p256
      %p258 = scmp.ne.s32.totalorder %s246, %s247
      %p259 = scmp.eq.s32.totalorder %s39, 1
      %p260 = por %p258, %p259
      %p262 = scmp.ne.s32.totalorder %s247, %s261
      %p263 = scmp.eq.s32.totalorder %s39, 0
      %p264 = por %p262, %p263
      %s266 = sadd.s32 %s265, 1
      %p269 = scmp.eq.s32.totalorder %s33, 1
      %p270 = scmp.ne.s32.totalorder %s265, %s267
      %p271 = scmp.eq.s32.totalorder %s33, 0
      %p272 = por %p270, %p271
      %p273 = scmp.ne.s32.totalorder %s265, %s267
      %p274 = scmp.eq.s32.totalorder %s38, 1
      %p275 = por %p273, %p274
      %p276 = scmp.ne.s32.totalorder %s267, %s268
      %p277 = scmp.eq.s32.totalorder %s38, 0
      %p278 = por %p276, %p277
      %p279 = scmp.ne.s32.totalorder %s267, %s268
      %p280 = scmp.eq.s32.totalorder %s39, 1
      %p281 = por %p279, %p280
      %p283 = scmp.ne.s32.totalorder %s268, %s282
      %p284 = scmp.eq.s32.totalorder %s39, 0
      %p285 = por %p283, %p284
      %s287 = sadd.s32 %s286, 1
      %p290 = scmp.eq.s32.totalorder %s33, 1
      %p291 = scmp.ne.s32.totalorder %s286, %s288
      %p292 = scmp.eq.s32.totalorder %s33, 0
      %p293 = por %p291, %p292
      %p294 = scmp.ne.s32.totalorder %s286, %s288
      %p295 = scmp.eq.s32.totalorder %s38, 1
      %p296 = por %p294, %p295
      %p297 = scmp.ne.s32.totalorder %s288, %s289
      %p298 = scmp.eq.s32.totalorder %s38, 0
      %p299 = por %p297, %p298
      %p300 = scmp.ne.s32.totalorder %s288, %s289
      %p301 = scmp.eq.s32.totalorder %s39, 1
      %p302 = por %p300, %p301
      %p304 = scmp.ne.s32.totalorder %s289, %s303
      %p305 = scmp.eq.s32.totalorder %s39, 0
      %p306 = por %p304, %p305
      %s308 = sadd.s32 %s307, 1
      %p311 = scmp.eq.s32.totalorder %s33, 1
      %p312 = scmp.ne.s32.totalorder %s307, %s309
      %p313 = scmp.eq.s32.totalorder %s33, 0
      %p314 = por %p312, %p313
      %p315 = scmp.ne.s32.totalorder %s307, %s309
      %p316 = scmp.eq.s32.totalorder %s38, 1
      %p317 = por %p315, %p316
      %p318 = scmp.ne.s32.totalorder %s309, %s310
      %p319 = scmp.eq.s32.totalorder %s38, 0
      %p320 = por %p318, %p319
      %p321 = scmp.ne.s32.totalorder %s309, %s310
      %p322 = scmp.eq.s32.totalorder %s39, 1
      %p323 = por %p321, %p322
      %p325 = scmp.ne.s32.totalorder %s310, %s324
      %p326 = scmp.eq.s32.totalorder %s39, 0
      %p327 = por %p325, %p326
      %s328 = ssub.s32 %s33, %s40
      %p329 = scmp.eq.s32.totalorder %s328, 0
      %s331 = sadd.s32 %s330, 1
      %s332 = scalar_select %p329, %s330, %s331
      %p335 = pneg %p329
      %p336 = scmp.eq.s32.totalorder %s33, 1
      %p337 = por %p335, %p336
      %p338 = scmp.ne.s32.totalorder %s330, %s333
      %p339 = scmp.eq.s32.totalorder %s33, 0
      %p340 = por %p338, %p339
      %p341 = scmp.ne.s32.totalorder %s330, %s333
      %p342 = scmp.eq.s32.totalorder %s38, 1
      %p343 = por %p341, %p342
      %p344 = scmp.ne.s32.totalorder %s333, %s334
      %p345 = scmp.eq.s32.totalorder %s38, 0
      %p346 = por %p344, %p345
      %p347 = scmp.ne.s32.totalorder %s333, %s334
      %p348 = scmp.eq.s32.totalorder %s39, 1
      %p349 = por %p347, %p348
      %p351 = scmp.ne.s32.totalorder %s334, %s350
      %p352 = scmp.eq.s32.totalorder %s39, 0
      %p353 = por %p351, %p352
      %s354 = ssub.s32 %s33, %s40
      %p355 = scmp.eq.s32.totalorder %s354, 0
      %s357 = sadd.s32 %s356, 1
      %s358 = scalar_select %p355, %s356, %s357
      %p361 = pneg %p355
      %p362 = scmp.eq.s32.totalorder %s33, 1
      %p363 = por %p361, %p362
      %p364 = scmp.ne.s32.totalorder %s356, %s359
      %p365 = scmp.eq.s32.totalorder %s33, 0
      %p366 = por %p364, %p365
      %p367 = scmp.ne.s32.totalorder %s356, %s359
      %p368 = scmp.eq.s32.totalorder %s38, 1
      %p369 = por %p367, %p368
      %p370 = scmp.ne.s32.totalorder %s359, %s360
      %p371 = scmp.eq.s32.totalorder %s38, 0
      %p372 = por %p370, %p371
      %p373 = scmp.ne.s32.totalorder %s359, %s360
      %p374 = scmp.eq.s32.totalorder %s39, 1
      %p375 = por %p373, %p374
      %p377 = scmp.ne.s32.totalorder %s360, %s376
      %p378 = scmp.eq.s32.totalorder %s39, 0
      %p379 = por %p377, %p378
      %s380 = ssub.s32 %s33, %s40
      %p381 = scmp.eq.s32.totalorder %s380, 0
      %s383 = sadd.s32 %s382, 1
      %s384 = scalar_select %p381, %s382, %s383
      %p387 = pneg %p381
      %p388 = scmp.eq.s32.totalorder %s33, 1
      %p389 = por %p387, %p388
      %p390 = scmp.ne.s32.totalorder %s382, %s385
      %p391 = scmp.eq.s32.totalorder %s33, 0
      %p392 = por %p390, %p391
      %p393 = scmp.ne.s32.totalorder %s382, %s385
      %p394 = scmp.eq.s32.totalorder %s38, 1
      %p395 = por %p393, %p394
      %p396 = scmp.ne.s32.totalorder %s385, %s386
      %p397 = scmp.eq.s32.totalorder %s38, 0
      %p398 = por %p396, %p397
      %p399 = scmp.ne.s32.totalorder %s385, %s386
      %p400 = scmp.eq.s32.totalorder %s39, 1
      %p401 = por %p399, %p400
      %p403 = scmp.ne.s32.totalorder %s386, %s402
      %p404 = scmp.eq.s32.totalorder %s39, 0
      %p405 = por %p403, %p404
      %s406 = ssub.s32 %s33, %s40
      %p407 = scmp.eq.s32.totalorder %s406, 0
      %s409 = sadd.s32 %s408, 1
      %s410 = scalar_select %p407, %s408, %s409
      %p413 = pneg %p407
      %p414 = scmp.eq.s32.totalorder %s33, 1
      %p415 = por %p413, %p414
      %p416 = scmp.ne.s32.totalorder %s408, %s411
      %p417 = scmp.eq.s32.totalorder %s33, 0
      %p418 = por %p416, %p417
      %p419 = scmp.ne.s32.totalorder %s408, %s411
      %p420 = scmp.eq.s32.totalorder %s38, 1
      %p421 = por %p419, %p420
      %p422 = scmp.ne.s32.totalorder %s411, %s412
      %p423 = scmp.eq.s32.totalorder %s38, 0
      %p424 = por %p422, %p423
      %p425 = scmp.ne.s32.totalorder %s411, %s412
      %p426 = scmp.eq.s32.totalorder %s39, 1
      %p427 = por %p425, %p426
      %p429 = scmp.ne.s32.totalorder %s412, %s428
      %p430 = scmp.eq.s32.totalorder %s39, 0
      %p431 = por %p429, %p430
      %s432 = ssub.s32 %s33, %s40
      %p433 = scmp.eq.s32.totalorder %s432, 0
      %s435 = sadd.s32 %s434, 1
      %s436 = scalar_select %p433, %s434, %s435
      %p439 = pneg %p433
      %p440 = scmp.eq.s32.totalorder %s33, 1
      %p441 = por %p439, %p440
      %p442 = scmp.ne.s32.totalorder %s434, %s437
      %p443 = scmp.eq.s32.totalorder %s33, 0
      %p444 = por %p442, %p443
      %p445 = scmp.ne.s32.totalorder %s434, %s437
      %p446 = scmp.eq.s32.totalorder %s38, 1
      %p447 = por %p445, %p446
      %p448 = scmp.ne.s32.totalorder %s437, %s438
      %p449 = scmp.eq.s32.totalorder %s38, 0
      %p450 = por %p448, %p449
      %p451 = scmp.ne.s32.totalorder %s437, %s438
      %p452 = scmp.eq.s32.totalorder %s39, 1
      %p453 = por %p451, %p452
      %p455 = scmp.ne.s32.totalorder %s438, %s454
      %p456 = scmp.eq.s32.totalorder %s39, 0
      %p457 = por %p455, %p456
      %s458 = ssub.s32 %s33, %s40
      %p459 = scmp.eq.s32.totalorder %s458, 0
      %s461 = sadd.s32 %s460, 1
      %s462 = scalar_select %p459, %s460, %s461
      %p465 = pneg %p459
      %p466 = scmp.eq.s32.totalorder %s33, 1
      %p467 = por %p465, %p466
      %p468 = scmp.ne.s32.totalorder %s460, %s463
      %p469 = scmp.eq.s32.totalorder %s33, 0
      %p470 = por %p468, %p469
      %p471 = scmp.ne.s32.totalorder %s460, %s463
      %p472 = scmp.eq.s32.totalorder %s38, 1
      %p473 = por %p471, %p472
      %p474 = scmp.ne.s32.totalorder %s463, %s464
      %p475 = scmp.eq.s32.totalorder %s38, 0
      %p476 = por %p474, %p475
      %p477 = scmp.ne.s32.totalorder %s463, %s464
      %p478 = scmp.eq.s32.totalorder %s39, 1
      %p479 = por %p477, %p478
      %p481 = scmp.ne.s32.totalorder %s464, %s480
      %p482 = scmp.eq.s32.totalorder %s39, 0
      %p483 = por %p481, %p482
      %p484 = scmp.le.s32.totalorder 1, %s33
      %p485 = scmp.lt.s32.totalorder %s33, 3
      %p486 = pnand %p484, %p485
      %p487 = pneg %p486
      // Predicated region
      $region9: #{admm_net_forward.10} parent=5 // pred_check
        _
      $region10: #{admm_net_forward.10} parent=5 // pred_check_branch
        %489 = sbr.rel (%p486) target = $region12
      $region11: #{admm_net_forward.10} parent=5 // pred_region
        %s490 = ssub.s32 %s33, 1
        // Predicated region
        $region13: #{admm_net_forward.10} parent=11 // pred_check
          %p491 = pneg %p236
        $region14: #{admm_net_forward.10} parent=11 // pred_check_branch
          %493 = sbr.rel (%p491) target = $region16
        $region15: #{admm_net_forward.10} parent=11 // pred_region
          _
        $region16: #{admm_net_forward.10} parent=11 // pred_fallthru
          _
        // Predicated region
        $region17: #{admm_net_forward.10} parent=11 // pred_check
          %p494 = pneg %p257
        $region18: #{admm_net_forward.10} parent=11 // pred_check_branch
          %496 = sbr.rel (%p494) target = $region20
        $region19: #{admm_net_forward.10} parent=11 // pred_region
          _
        $region20: #{admm_net_forward.10} parent=11 // pred_fallthru
          _
        // Predicated region
        $region21: #{admm_net_forward.10} parent=11 // pred_check
          %p497 = pneg %p278
        $region22: #{admm_net_forward.10} parent=11 // pred_check_branch
          %499 = sbr.rel (%p497) target = $region24
        $region23: #{admm_net_forward.10} parent=11 // pred_region
          _
        $region24: #{admm_net_forward.10} parent=11 // pred_fallthru
          _
        // Predicated region
        $region25: #{admm_net_forward.10} parent=11 // pred_check
          %p500 = pneg %p299
        $region26: #{admm_net_forward.10} parent=11 // pred_check_branch
          %502 = sbr.rel (%p500) target = $region28
        $region27: #{admm_net_forward.10} parent=11 // pred_region
          _
        $region28: #{admm_net_forward.10} parent=11 // pred_fallthru
          _
        // Predicated region
        $region29: #{admm_net_forward.10} parent=11 // pred_check
          %p503 = pneg %p320
        $region30: #{admm_net_forward.10} parent=11 // pred_check_branch
          %505 = sbr.rel (%p503) target = $region32
        $region31: #{admm_net_forward.10} parent=11 // pred_region
          _
        $region32: #{admm_net_forward.10} parent=11 // pred_fallthru
          _
      $region12: #{admm_net_forward.10} parent=5 // pred_fallthru
        _
      %p506 = scmp.lt.s32.totalorder %s33, 2
      // Predicated region
      $region33: #{admm_net_forward.10} parent=5 // pred_check
        %p507 = pneg %p506
      $region34: #{admm_net_forward.10} parent=5 // pred_check_branch
        %509 = sbr.rel (%p507) target = $region36
      $region35: #{admm_net_forward.10} parent=5 // pred_region
        // Predicated region
        $region37: #{admm_net_forward.10} parent=35 // pred_check
          %p510 = pneg %p53
        $region38: #{admm_net_forward.10} parent=35 // pred_check_branch
          %512 = sbr.rel (%p510) target = $region40
        $region39: #{admm_net_forward.10} parent=35 // pred_region
          %s513 = smul.u32 6, %s33
          %p514 = scmp.lt.s32.totalorder %s513, 11
          %s515 = scalar_select %p514, %s513, 11
          %s516 = smul.addr %s515, 8
          %s517 = scalar_lea.vmem %s0, %s516
          %s518 = smul.u32 6, %s33
        $region40: #{admm_net_forward.10} parent=35 // pred_fallthru
          _
        // Predicated region
        $region41: #{admm_net_forward.10} parent=35 // pred_check
          %p519 = pneg %p79
        $region42: #{admm_net_forward.10} parent=35 // pred_check_branch
          %521 = sbr.rel (%p519) target = $region44
        $region43: #{admm_net_forward.10} parent=35 // pred_region
          %s522 = smul.u32 6, %s33
          %p523 = scmp.lt.s32.totalorder %s522, 11
          %s524 = scalar_select %p523, %s522, 11
          %s525 = smul.addr %s524, 8
          %s526 = scalar_lea.vmem %s1, %s525
          %s527 = smul.u32 6, %s33
        $region44: #{admm_net_forward.10} parent=35 // pred_fallthru
          _
        // Predicated region
        $region45: #{admm_net_forward.10} parent=35 // pred_check
          %p528 = pneg %p105
        $region46: #{admm_net_forward.10} parent=35 // pred_check_branch
          %530 = sbr.rel (%p528) target = $region48
        $region47: #{admm_net_forward.10} parent=35 // pred_region
          %s531 = smul.u32 6, %s33
          %p532 = scmp.lt.s32.totalorder %s531, 11
          %s533 = scalar_select %p532, %s531, 11
          %s534 = smul.addr %s533, 8
          %s535 = scalar_lea.vmem %s2, %s534
          %s536 = smul.u32 6, %s33
        $region48: #{admm_net_forward.10} parent=35 // pred_fallthru
          _
        // Predicated region
        $region49: #{admm_net_forward.10} parent=35 // pred_check
          %p537 = pneg %p131
        $region50: #{admm_net_forward.10} parent=35 // pred_check_branch
          %539 = sbr.rel (%p537) target = $region52
        $region51: #{admm_net_forward.10} parent=35 // pred_region
          %s540 = smul.u32 6, %s33
          %p541 = scmp.lt.s32.totalorder %s540, 11
          %s542 = scalar_select %p541, %s540, 11
          %s543 = smul.addr %s542, 8
          %s544 = scalar_lea.vmem %s3, %s543
          %s545 = smul.u32 6, %s33
        $region52: #{admm_net_forward.10} parent=35 // pred_fallthru
          _
        // Predicated region
        $region53: #{admm_net_forward.10} parent=35 // pred_check
          %p546 = pneg %p157
        $region54: #{admm_net_forward.10} parent=35 // pred_check_branch
          %548 = sbr.rel (%p546) target = $region56
        $region55: #{admm_net_forward.10} parent=35 // pred_region
          %s549 = smul.u32 6, %s33
          %p550 = scmp.lt.s32.totalorder %s549, 11
          %s551 = scalar_select %p550, %s549, 11
          %s552 = smul.addr %s551, 8
          %s553 = scalar_lea.vmem %s4, %s552
          %s554 = smul.u32 6, %s33
        $region56: #{admm_net_forward.10} parent=35 // pred_fallthru
          _
        // Predicated region
        $region57: #{admm_net_forward.10} parent=35 // pred_check
          %p555 = pneg %p183
        $region58: #{admm_net_forward.10} parent=35 // pred_check_branch
          %557 = sbr.rel (%p555) target = $region60
        $region59: #{admm_net_forward.10} parent=35 // pred_region
          %s558 = smul.u32 6, %s33
          %p559 = scmp.lt.s32.totalorder %s558, 11
          %s560 = scalar_select %p559, %s558, 11
          %s561 = smul.addr %s560, 8
          %s562 = scalar_lea.vmem %s5, %s561
          %s563 = smul.u32 6, %s33
        $region60: #{admm_net_forward.10} parent=35 // pred_fallthru
          _
        // Predicated region
        $region61: #{admm_net_forward.10} parent=35 // pred_check
          %p564 = pneg %p209
        $region62: #{admm_net_forward.10} parent=35 // pred_check_branch
          %566 = sbr.rel (%p564) target = $region64
        $region63: #{admm_net_forward.10} parent=35 // pred_region
          %s567 = smul.u32 6, %s33
          %p568 = scmp.lt.s32.totalorder %s567, 11
          %s569 = scalar_select %p568, %s567, 11
          %s570 = smul.addr %s569, 8
          %s571 = scalar_lea.vmem %s6, %s570
          %s572 = smul.u32 6, %s33
        $region64: #{admm_net_forward.10} parent=35 // pred_fallthru
          _
      $region36: #{admm_net_forward.10} parent=5 // pred_fallthru
        _
      %p573 = scmp.le.s32.totalorder 1, %s33
      %p574 = scmp.lt.s32.totalorder %s33, 3
      %p575 = pnand %p573, %p574
      %p576 = pneg %p575
      // Predicated region
      $region65: #{admm_net_forward.10} parent=5 // pred_check
        _
      $region66: #{admm_net_forward.10} parent=5 // pred_check_branch
        %578 = sbr.rel (%p575) target = $region68
      $region67: #{admm_net_forward.10} parent=5 // pred_region
        %s579 = ssub.s32 %s33, 1
        %s580 = smul.u32 6, %s38
        %p581 = scmp.lt.s32.totalorder %s580, 11
        %s582 = scalar_select %p581, %s580, 11
        %s583 = smul.addr %s582, 8
        %s584 = scalar_lea.vmem %s0, %s583
        %p585 = pneg %p59
        %p586 = pneg %p56
        %s587 = smul.u32 6, %s38
        %p588 = scmp.lt.s32.totalorder %s587, 11
        %s589 = scalar_select %p588, %s587, 11
        %s590 = smul.addr %s589, 8
        %s591 = scalar_lea.vmem %s1, %s590
        %p592 = pneg %p85
        %p593 = pneg %p82
        %s594 = smul.u32 6, %s38
        %p595 = scmp.lt.s32.totalorder %s594, 11
        %s596 = scalar_select %p595, %s594, 11
        %s597 = smul.addr %s596, 8
        %s598 = scalar_lea.vmem %s2, %s597
        %p599 = pneg %p111
        %p600 = pneg %p108
        %s601 = smul.u32 6, %s38
        %p602 = scmp.lt.s32.totalorder %s601, 11
        %s603 = scalar_select %p602, %s601, 11
        %s604 = smul.addr %s603, 8
        %s605 = scalar_lea.vmem %s3, %s604
        %p606 = pneg %p137
        %p607 = pneg %p134
        %s608 = smul.u32 6, %s38
        %p609 = scmp.lt.s32.totalorder %s608, 11
        %s610 = scalar_select %p609, %s608, 11
        %s611 = smul.addr %s610, 8
        %s612 = scalar_lea.vmem %s4, %s611
        %p613 = pneg %p163
        %p614 = pneg %p160
        %s615 = smul.u32 6, %s38
        %p616 = scmp.lt.s32.totalorder %s615, 11
        %s617 = scalar_select %p616, %s615, 11
        %s618 = smul.addr %s617, 8
        %s619 = scalar_lea.vmem %s5, %s618
        %p620 = pneg %p189
        %p621 = pneg %p186
        %s622 = smul.u32 6, %s38
        %p623 = scmp.lt.s32.totalorder %s622, 11
        %s624 = scalar_select %p623, %s622, 11
        %s625 = smul.addr %s624, 8
        %s626 = scalar_lea.vmem %s6, %s625
        %p627 = pneg %p215
        %p628 = pneg %p212
        %p629 = pneg %p236
        %p630 = pneg %p233
        %p631 = pneg %p257
        %p632 = pneg %p254
        %p633 = pneg %p278
        %p634 = pneg %p275
        %p635 = pneg %p299
        %p636 = pneg %p296
        %p637 = pneg %p320
        %p638 = pneg %p317
        %p639 = pneg %p346
        %p640 = pneg %p343
        %s641 = sand.u32 %s333, 1
        %s642 = scalar_lea.sflag [#allocation3], %s641
        %s643 = sand.u32 %s333, 1
        %s644 = smul.addr %s643, 48
        %s645 = scalar_lea.vmem [#allocation2], %s644
        %p646 = pneg %p372
        %p647 = pneg %p369
        %s648 = sand.u32 %s38, 1
        %s649 = scalar_lea.sflag [#allocation5], %s648
        %s650 = sand.u32 %s359, 1
        %s651 = smul.addr %s650, 48
        %s652 = scalar_lea.vmem [#allocation4], %s651
        %p653 = pneg %p398
        %p654 = pneg %p395
        %s655 = sand.u32 %s38, 1
        %s656 = scalar_lea.sflag [#allocation5], %s655
        %s657 = sand.u32 %s385, 1
        %s658 = smul.addr %s657, 48
        %s659 = scalar_lea.vmem [#allocation6], %s658
        %p660 = pneg %p424
        %p661 = pneg %p421
        %s662 = sand.u32 %s411, 1
        %s663 = scalar_lea.sflag [#allocation8], %s662
        %s664 = sand.u32 %s411, 1
        %s665 = smul.addr %s664, 48
        %s666 = scalar_lea.vmem [#allocation7], %s665
        %p667 = pneg %p450
        %p668 = pneg %p447
        %s669 = smul.u32 6, %s38
        %p670 = scmp.lt.s32.totalorder %s669, 11
        %s671 = scalar_select %p670, %s669, 11
        %s672 = smul.addr %s671, 8
        %s673 = scalar_lea.vmem %s16, %s672
        %p674 = pneg %p476
        %p675 = pneg %p473
        %s676 = smul.u32 6, %s38
        %p677 = scmp.lt.s32.totalorder %s676, 11
        %s678 = scalar_select %p677, %s676, 11
        %s679 = smul.addr %s678, 8
        %s680 = scalar_lea.vmem %s17, %s679
        %s681 = smul.u32 6, %s38
        %p682 = scmp.lt.s32.totalorder %s681, 11
        %s683 = scalar_select %p682, %s681, 11
        %s684 = smul.addr %s683, 8
        %s685 = scalar_lea.vmem %s0, %s684
        %s686 = smul.u32 6, %s38
        %s687 = smul.u32 6, %s38
        %p688 = scmp.lt.s32.totalorder %s687, 11
        %s689 = scalar_select %p688, %s687, 11
        %s690 = smul.addr %s689, 8
        %s691 = scalar_lea.vmem %s1, %s690
        %s692 = smul.u32 6, %s38
        %s693 = smul.u32 6, %s38
        %p694 = scmp.lt.s32.totalorder %s693, 11
        %s695 = scalar_select %p694, %s693, 11
        %s696 = smul.addr %s695, 8
        %s697 = scalar_lea.vmem %s2, %s696
        %s698 = smul.u32 6, %s38
        %s699 = smul.u32 6, %s38
        %p700 = scmp.lt.s32.totalorder %s699, 11
        %s701 = scalar_select %p700, %s699, 11
        %s702 = smul.addr %s701, 8
        %s703 = scalar_lea.vmem %s3, %s702
        %s704 = smul.u32 6, %s38
        %s705 = smul.u32 6, %s38
        %p706 = scmp.lt.s32.totalorder %s705, 11
        %s707 = scalar_select %p706, %s705, 11
        %s708 = smul.addr %s707, 8
        %s709 = scalar_lea.vmem %s4, %s708
        %s710 = smul.u32 6, %s38
        %s711 = smul.u32 6, %s38
        %p712 = scmp.lt.s32.totalorder %s711, 11
        %s713 = scalar_select %p712, %s711, 11
        %s714 = smul.addr %s713, 8
        %s715 = scalar_lea.vmem %s5, %s714
        %s716 = smul.u32 6, %s38
        %s717 = smul.u32 6, %s38
        %p718 = scmp.lt.s32.totalorder %s717, 11
        %s719 = scalar_select %p718, %s717, 11
        %s720 = smul.addr %s719, 8
        %s721 = scalar_lea.vmem %s6, %s720
        %s722 = smul.u32 6, %s38
        %s723 = smul.u32 6, %s38
        %s724 = smul.u32 6, %s38
        %s725 = smul.u32 6, %s38
        %s726 = smul.u32 6, %s38
        %s727 = smul.u32 6, %s38
        %p728 = scmp.lt.s32.totalorder %s727, 11
        %s729 = scalar_select %p728, %s727, 11
        %s730 = smul.addr %s729, 8
        %s731 = scalar_lea.vmem %s16, %s730
        %s732 = smul.u32 6, %s38
        %s733 = smul.u32 6, %s38
        %p734 = scmp.lt.s32.totalorder %s733, 11
        %s735 = scalar_select %p734, %s733, 11
        %s736 = smul.addr %s735, 8
        %s737 = scalar_lea.vmem %s17, %s736
        %s738 = smul.u32 6, %s38
        %v739 = vld [vmem:[%s685] sm:$0xff]
        %v740 = vld [vmem:[%s685 + $0x8] sm:$0xff]
        %v741 = vld [vmem:[%s685 + $0x10] sm:$0xff]
        %v742 = vld [vmem:[%s685 + $0x18] sm:$0xff]
        %v743 = vld [vmem:[%s685 + $0x20] sm:$0xff]
        %v744 = vld [vmem:[%s685 + $0x28] sm:$0xff]
        %v745 = vld [vmem:[%s691] sm:$0xff]
        %v746 = vld [vmem:[%s691 + $0x8] sm:$0xff]
        %v747 = vld [vmem:[%s691 + $0x10] sm:$0xff]
        %v748 = vld [vmem:[%s691 + $0x18] sm:$0xff]
        %v749 = vld [vmem:[%s691 + $0x20] sm:$0xff]
        %v750 = vld [vmem:[%s691 + $0x28] sm:$0xff]
        %v751 = vld [vmem:[%s697] sm:$0xff]
        %v752 = vld [vmem:[%s697 + $0x8] sm:$0xff]
        %v753 = vld [vmem:[%s697 + $0x10] sm:$0xff]
        %v754 = vld [vmem:[%s697 + $0x18] sm:$0xff]
        %v755 = vld [vmem:[%s697 + $0x20] sm:$0xff]
        %v756 = vld [vmem:[%s697 + $0x28] sm:$0xff]
        %v757 = vld [vmem:[%s703] sm:$0xff]
        %v758 = vld [vmem:[%s703 + $0x8] sm:$0xff]
        %v759 = vld [vmem:[%s703 + $0x10] sm:$0xff]
        %v760 = vld [vmem:[%s703 + $0x18] sm:$0xff]
        %v761 = vld [vmem:[%s703 + $0x20] sm:$0xff]
        %v762 = vld [vmem:[%s703 + $0x28] sm:$0xff]
        %v763 = vld [vmem:[%s709] sm:$0xff]
        %v764 = vld [vmem:[%s709 + $0x8] sm:$0xff]
        %v765 = vld [vmem:[%s709 + $0x10] sm:$0xff]
        %v766 = vld [vmem:[%s709 + $0x18] sm:$0xff]
        %v767 = vld [vmem:[%s709 + $0x20] sm:$0xff]
        %v768 = vld [vmem:[%s709 + $0x28] sm:$0xff]
        %v769 = vld [vmem:[%s715] sm:$0xff]
        %v770 = vld [vmem:[%s715 + $0x8] sm:$0xff]
        %v771 = vld [vmem:[%s715 + $0x10] sm:$0xff]
        %v772 = vld [vmem:[%s715 + $0x18] sm:$0xff]
        %v773 = vld [vmem:[%s715 + $0x20] sm:$0xff]
        %v774 = vld [vmem:[%s715 + $0x28] sm:$0xff]
        %v775 = vld [vmem:[%s721] sm:$0xff]
        %v776 = vld [vmem:[%s721 + $0x8] sm:$0xff]
        %v777 = vld [vmem:[%s721 + $0x10] sm:$0xff]
        %v778 = vld [vmem:[%s721 + $0x18] sm:$0xff]
        %v779 = vld [vmem:[%s721 + $0x20] sm:$0xff]
        %v780 = vld [vmem:[%s721 + $0x28] sm:$0xff]
        %v781 = vld [vmem:[%s7] sm:$0xff]
        %v782 = vld [vmem:[%s7 + $0x8] sm:$0xff]
        %v783 = vld [vmem:[%s7 + $0x10] sm:$0xff]
        %v784 = vld [vmem:[%s7 + $0x18] sm:$0xff]
        %v785 = vld [vmem:[%s7 + $0x20] sm:$0xff]
        %v786 = vld [vmem:[%s7 + $0x28] sm:$0xff]
        %v787 = vld [vmem:[%s8] sm:$0xff]
        %v788 = vld [vmem:[%s8 + $0x8] sm:$0xff]
        %v789 = vld [vmem:[%s8 + $0x10] sm:$0xff]
        %v790 = vld [vmem:[%s8 + $0x18] sm:$0xff]
        %v791 = vld [vmem:[%s8 + $0x20] sm:$0xff]
        %v792 = vld [vmem:[%s8 + $0x28] sm:$0xff]
        %v793 = vld [vmem:[%s9] sm:$0xff]
        %v794 = vld [vmem:[%s9 + $0x8] sm:$0xff]
        %v795 = vld [vmem:[%s9 + $0x10] sm:$0xff]
        %v796 = vld [vmem:[%s9 + $0x18] sm:$0xff]
        %v797 = vld [vmem:[%s9 + $0x20] sm:$0xff]
        %v798 = vld [vmem:[%s9 + $0x28] sm:$0xff]
        %v799 = vld [vmem:[%s10] sm:$0x1]
        %v800 = vld [vmem:[%s11] sm:$0x1]
        %v801 = vrot.slane %v739, 1
        %v802 = vrot.slane %v740, 1
        %v803 = vrot.slane %v741, 1
        %v804 = vrot.slane %v742, 1
        %v805 = vrot.slane %v743, 1
        %v806 = vrot.slane %v744, 1
        %v807 = vlaneseq
        %v808 = vshrl.u32 %v807, 7
        %vm809 = vcmp.lt.s32.totalorder %v808, 7
        %v810 = vsel %vm809, %v805, %v806
        %v811 = vsel %vm809, %v804, %v805
        %v812 = vsel %vm809, %v803, %v804
        %v813 = vsel %vm809, %v802, %v803
        %v814 = vsel %vm809, %v801, %v802
        %v815 = vsel %vm809, %v806, %v801
        %v816 = vsub.f32 %v739, %v814
        %v817 = vsub.f32 %v740, %v813
        %v818 = vsub.f32 %v741, %v812
        %v819 = vsub.f32 %v742, %v811
        %v820 = vsub.f32 %v743, %v810
        %v821 = vsub.f32 %v744, %v815
        %823 = vset.pattern.permute.xlu0 0
        %824 = vperm.xlu0 %823, %v787
        %v825 = vpop.permute.xlu0 %824
        %828 = vset.pattern.permute.xlu0 0
        %829 = vperm.xlu0 %828, %v788
        %v830 = vpop.permute.xlu0 %829
        %833 = vset.pattern.permute.xlu0 0
        %834 = vperm.xlu0 %833, %v789
        %v835 = vpop.permute.xlu0 %834
        %838 = vset.pattern.permute.xlu0 0
        %839 = vperm.xlu0 %838, %v790
        %v840 = vpop.permute.xlu0 %839
        %843 = vset.pattern.permute.xlu0 0
        %844 = vperm.xlu0 %843, %v791
        %v845 = vpop.permute.xlu0 %844
        %848 = vset.pattern.permute.xlu0 0
        %849 = vperm.xlu0 %848, %v792
        %v850 = vpop.permute.xlu0 %849
        %v852 = vmul.f32 %v816, %v825
        %v853 = vmul.f32 %v817, %v830
        %v854 = vmul.f32 %v818, %v835
        %v855 = vmul.f32 %v819, %v840
        %v856 = vmul.f32 %v820, %v845
        %v857 = vmul.f32 %v821, %v850
        %858 = vrot.lane.b32.xlu0 %v739, 127
        %v859 = vpop.permute.xlu0 %858
        %860 = vrot.lane.b32.xlu0 %v740, 127
        %v861 = vpop.permute.xlu0 %860
        %862 = vrot.lane.b32.xlu0 %v741, 127
        %v863 = vpop.permute.xlu0 %862
        %864 = vrot.lane.b32.xlu0 %v742, 127
        %v865 = vpop.permute.xlu0 %864
        %866 = vrot.lane.b32.xlu0 %v743, 127
        %v867 = vpop.permute.xlu0 %866
        %868 = vrot.lane.b32.xlu0 %v744, 127
        %v869 = vpop.permute.xlu0 %868
        %v870 = vsub.f32 %v739, %v859
        %v871 = vsub.f32 %v740, %v861
        %v872 = vsub.f32 %v741, %v863
        %v873 = vsub.f32 %v742, %v865
        %v874 = vsub.f32 %v743, %v867
        %v875 = vsub.f32 %v744, %v869
        %v877 = vlaneseq
        %v878 = vshrl.u32 %v877, 7
        %v879 = vsub.s32 0, %v878
        %v880 = vrot.slane %v799, %v879
        %v882 = vmul.f32 %v870, %v880
        %v883 = vmul.f32 %v871, %v880
        %v884 = vmul.f32 %v872, %v880
        %v885 = vmul.f32 %v873, %v880
        %v886 = vmul.f32 %v874, %v880
        %v887 = vmul.f32 %v875, %v880
        %v888 = vmul.f32 %v745, 10000.0
        %v889 = vmul.f32 %v746, 10000.0
        %v890 = vmul.f32 %v747, 10000.0
        %v891 = vmul.f32 %v748, 10000.0
        %v892 = vmul.f32 %v749, 10000.0
        %v893 = vmul.f32 %v750, 10000.0
        %v894 = vmul.f32 %v751, 10000.0
        %v895 = vmul.f32 %v752, 10000.0
        %v896 = vmul.f32 %v753, 10000.0
        %v897 = vmul.f32 %v754, 10000.0
        %v898 = vmul.f32 %v755, 10000.0
        %v899 = vmul.f32 %v756, 10000.0
        %v900 = vmul.f32 %v757, 10000.0
        %v901 = vmul.f32 %v758, 10000.0
        %v902 = vmul.f32 %v759, 10000.0
        %v903 = vmul.f32 %v760, 10000.0
        %v904 = vmul.f32 %v761, 10000.0
        %v905 = vmul.f32 %v762, 10000.0
        %v906 = vmul.f32 %v763, 10000.0
        %v907 = vmul.f32 %v764, 10000.0
        %v908 = vmul.f32 %v765, 10000.0
        %v909 = vmul.f32 %v766, 10000.0
        %v910 = vmul.f32 %v767, 10000.0
        %v911 = vmul.f32 %v768, 10000.0
        %v912 = vadd.f32 %v852, %v894
        %v913 = vadd.f32 %v853, %v895
        %v914 = vadd.f32 %v854, %v896
        %v915 = vadd.f32 %v855, %v897
        %v916 = vadd.f32 %v856, %v898
        %v917 = vadd.f32 %v857, %v899
        %v918 = vadd.f32 %v882, %v900
        %v919 = vadd.f32 %v883, %v901
        %v920 = vadd.f32 %v884, %v902
        %v921 = vadd.f32 %v885, %v903
        %v922 = vadd.f32 %v886, %v904
        %v923 = vadd.f32 %v887, %v905
        %v924 = vmul.f32 %v912, %v912
        %v925 = vmul.f32 %v913, %v913
        %v926 = vmul.f32 %v914, %v914
        %v927 = vmul.f32 %v915, %v915
        %v928 = vmul.f32 %v916, %v916
        %v929 = vmul.f32 %v917, %v917
        %v930 = vmul.f32 %v918, %v918
        %v931 = vmul.f32 %v919, %v919
        %v932 = vmul.f32 %v920, %v920
        %v933 = vmul.f32 %v921, %v921
        %v934 = vmul.f32 %v922, %v922
        %v935 = vmul.f32 %v923, %v923
        %v936 = vadd.f32 %v924, %v930
        %v937 = vadd.f32 %v925, %v931
        %v938 = vadd.f32 %v926, %v932
        %v939 = vadd.f32 %v927, %v933
        %v940 = vadd.f32 %v928, %v934
        %v941 = vadd.f32 %v929, %v935
        %v942 = vadd.f32 %v936, 1.11e-14
        %v943 = vadd.f32 %v937, 1.11e-14
        %v944 = vadd.f32 %v938, 1.11e-14
        %v945 = vadd.f32 %v939, 1.11e-14
        %v946 = vadd.f32 %v940, 1.11e-14
        %v947 = vadd.f32 %v941, 1.11e-14
        %v948 = vrsqrt.pop %v942
        %v949 = vmul.f32 %v942, %v948
        %vm950 = vcmp.eq.f32.partialorder %v942, inf
        %v951 = vsel %vm950, %v942, %v949
        %vm952 = vcmp.eq.f32.partialorder %v942, 0.0
        %v953 = vand.u32 %v942, 2147483648
        %v954 = vsel %vm952, %v953, %v951
        %v955 = vrsqrt.pop %v943
        %v956 = vmul.f32 %v943, %v955
        %vm957 = vcmp.eq.f32.partialorder %v943, inf
        %v958 = vsel %vm957, %v943, %v956
        %vm959 = vcmp.eq.f32.partialorder %v943, 0.0
        %v960 = vand.u32 %v943, 2147483648
        %v961 = vsel %vm959, %v960, %v958
        %v962 = vrsqrt.pop %v944
        %v963 = vmul.f32 %v944, %v962
        %vm964 = vcmp.eq.f32.partialorder %v944, inf
        %v965 = vsel %vm964, %v944, %v963
        %vm966 = vcmp.eq.f32.partialorder %v944, 0.0
        %v967 = vand.u32 %v944, 2147483648
        %v968 = vsel %vm966, %v967, %v965
        %v969 = vrsqrt.pop %v945
        %v970 = vmul.f32 %v945, %v969
        %vm971 = vcmp.eq.f32.partialorder %v945, inf
        %v972 = vsel %vm971, %v945, %v970
        %vm973 = vcmp.eq.f32.partialorder %v945, 0.0
        %v974 = vand.u32 %v945, 2147483648
        %v975 = vsel %vm973, %v974, %v972
        %v976 = vrsqrt.pop %v946
        %v977 = vmul.f32 %v946, %v976
        %vm978 = vcmp.eq.f32.partialorder %v946, inf
        %v979 = vsel %vm978, %v946, %v977
        %vm980 = vcmp.eq.f32.partialorder %v946, 0.0
        %v981 = vand.u32 %v946, 2147483648
        %v982 = vsel %vm980, %v981, %v979
        %v983 = vrsqrt.pop %v947
        %v984 = vmul.f32 %v947, %v983
        %vm985 = vcmp.eq.f32.partialorder %v947, inf
        %v986 = vsel %vm985, %v947, %v984
        %vm987 = vcmp.eq.f32.partialorder %v947, 0.0
        %v988 = vand.u32 %v947, 2147483648
        %v989 = vsel %vm987, %v988, %v986
        %v990 = vsub.f32 %v954, 0.002
        %v991 = vsub.f32 %v961, 0.002
        %v992 = vsub.f32 %v968, 0.002
        %v993 = vsub.f32 %v975, 0.002
        %v994 = vsub.f32 %v982, 0.002
        %v995 = vsub.f32 %v989, 0.002
        %v996 = vmax.f32 %v990, 0.0
        %v997 = vmax.f32 %v991, 0.0
        %v998 = vmax.f32 %v992, 0.0
        %v999 = vmax.f32 %v993, 0.0
        %v1000 = vmax.f32 %v994, 0.0
        %v1001 = vmax.f32 %v995, 0.0
        %v1002 = vadd.f32 %v996, 0.002
        %v1003 = vadd.f32 %v997, 0.002
        %v1004 = vadd.f32 %v998, 0.002
        %v1005 = vadd.f32 %v999, 0.002
        %v1006 = vadd.f32 %v1000, 0.002
        %v1007 = vadd.f32 %v1001, 0.002
        %v1008 = vrcp.pop %v1002
        %v1009 = vrcp.pop %v1003
        %v1010 = vrcp.pop %v1004
        %v1011 = vrcp.pop %v1005
        %v1012 = vrcp.pop %v1006
        %v1013 = vrcp.pop %v1007
        %v1014 = vmul.f32 %v996, %v1008
        %v1015 = vmul.f32 %v997, %v1009
        %v1016 = vmul.f32 %v998, %v1010
        %v1017 = vmul.f32 %v999, %v1011
        %v1018 = vmul.f32 %v1000, %v1012
        %v1019 = vmul.f32 %v1001, %v1013
        %v1020 = vmul.f32 %v912, %v1014
        %v1021 = vmul.f32 %v913, %v1015
        %v1022 = vmul.f32 %v914, %v1016
        %v1023 = vmul.f32 %v915, %v1017
        %v1024 = vmul.f32 %v916, %v1018
        %v1025 = vmul.f32 %v917, %v1019
        %v1026 = vmul.f32 %v918, %v1014
        %v1027 = vmul.f32 %v919, %v1015
        %v1028 = vmul.f32 %v920, %v1016
        %v1029 = vmul.f32 %v921, %v1017
        %v1030 = vmul.f32 %v922, %v1018
        %v1031 = vmul.f32 %v923, %v1019
        %v1032 = vmul.f32 %v769, 0.0001
        %v1033 = vmul.f32 %v770, 0.0001
        %v1034 = vmul.f32 %v771, 0.0001
        %v1035 = vmul.f32 %v772, 0.0001
        %v1036 = vmul.f32 %v773, 0.0001
        %v1037 = vmul.f32 %v774, 0.0001
        %v1038 = vadd.f32 %v745, %v1032
        %v1039 = vadd.f32 %v746, %v1033
        %v1040 = vadd.f32 %v747, %v1034
        %v1041 = vadd.f32 %v748, %v1035
        %v1042 = vadd.f32 %v749, %v1036
        %v1043 = vadd.f32 %v750, %v1037
        %v1044 = vadd.f32 %v1038, %v775
        %v1045 = vadd.f32 %v1039, %v776
        %v1046 = vadd.f32 %v1040, %v777
        %v1047 = vadd.f32 %v1041, %v778
        %v1048 = vadd.f32 %v1042, %v779
        %v1049 = vadd.f32 %v1043, %v780
        %v1050 = vmul.f32 %v781, %v1044
        %v1051 = vmul.f32 %v782, %v1045
        %v1052 = vmul.f32 %v783, %v1046
        %v1053 = vmul.f32 %v784, %v1047
        %v1054 = vmul.f32 %v785, %v1048
        %v1055 = vmul.f32 %v786, %v1049
        %v1056 = vadd.f32 %v906, %v739
        %v1057 = vadd.f32 %v907, %v740
        %v1058 = vadd.f32 %v908, %v741
        %v1059 = vadd.f32 %v909, %v742
        %v1060 = vadd.f32 %v910, %v743
        %v1061 = vadd.f32 %v911, %v744
        %v1062 = vmax.f32 %v1056, 0.0
        %v1063 = vmax.f32 %v1057, 0.0
        %v1064 = vmax.f32 %v1058, 0.0
        %v1065 = vmax.f32 %v1059, 0.0
        %v1066 = vmax.f32 %v1060, 0.0
        %v1067 = vmax.f32 %v1061, 0.0
        %v1068 = vsub.f32 %v1020, %v894
        %v1069 = vsub.f32 %v1021, %v895
        %v1070 = vsub.f32 %v1022, %v896
        %v1071 = vsub.f32 %v1023, %v897
        %v1072 = vsub.f32 %v1024, %v898
        %v1073 = vsub.f32 %v1025, %v899
        %v1074 = vsub.f32 %v1026, %v900
        %v1075 = vsub.f32 %v1027, %v901
        %v1076 = vsub.f32 %v1028, %v902
        %v1077 = vsub.f32 %v1029, %v903
        %v1078 = vsub.f32 %v1030, %v904
        %v1079 = vsub.f32 %v1031, %v905
        %v1080 = vrot.slane %v1068, 7
        %v1081 = vrot.slane %v1069, 7
        %v1082 = vrot.slane %v1070, 7
        %v1083 = vrot.slane %v1071, 7
        %v1084 = vrot.slane %v1072, 7
        %v1085 = vrot.slane %v1073, 7
        %vm1086 = vcmp.lt.s32.totalorder %v808, 1
        %v1087 = vsel %vm1086, %v1084, %v1085
        %v1088 = vsel %vm1086, %v1083, %v1084
        %v1089 = vsel %vm1086, %v1082, %v1083
        %v1090 = vsel %vm1086, %v1081, %v1082
        %v1091 = vsel %vm1086, %v1080, %v1081
        %v1092 = vsel %vm1086, %v1085, %v1080
        %1094 = vset.pattern.permute.xlu0 0
        %1095 = vperm.xlu0 %1094, %v793
        %v1096 = vpop.permute.xlu0 %1095
        %1099 = vset.pattern.permute.xlu0 0
        %1100 = vperm.xlu0 %1099, %v794
        %v1101 = vpop.permute.xlu0 %1100
        %1104 = vset.pattern.permute.xlu0 0
        %1105 = vperm.xlu0 %1104, %v795
        %v1106 = vpop.permute.xlu0 %1105
        %1109 = vset.pattern.permute.xlu0 0
        %1110 = vperm.xlu0 %1109, %v796
        %v1111 = vpop.permute.xlu0 %1110
        %1114 = vset.pattern.permute.xlu0 0
        %1115 = vperm.xlu0 %1114, %v797
        %v1116 = vpop.permute.xlu0 %1115
        %1119 = vset.pattern.permute.xlu0 0
        %1120 = vperm.xlu0 %1119, %v798
        %v1121 = vpop.permute.xlu0 %1120
        %v1123 = vmul.f32 %v1092, %v1096
        %v1124 = vmul.f32 %v1091, %v1101
        %v1125 = vmul.f32 %v1090, %v1106
        %v1126 = vmul.f32 %v1089, %v1111
        %v1127 = vmul.f32 %v1088, %v1116
        %v1128 = vmul.f32 %v1087, %v1121
        %v1129 = vsub.f32 %v1068, %v1123
        %v1130 = vsub.f32 %v1069, %v1124
        %v1131 = vsub.f32 %v1070, %v1125
        %v1132 = vsub.f32 %v1071, %v1126
        %v1133 = vsub.f32 %v1072, %v1127
        %v1134 = vsub.f32 %v1073, %v1128
        %1135 = vrot.lane.b32.xlu0 %v1074, 1
        %v1136 = vpop.permute.xlu0 %1135
        %1137 = vrot.lane.b32.xlu0 %v1075, 1
        %v1138 = vpop.permute.xlu0 %1137
        %1139 = vrot.lane.b32.xlu0 %v1076, 1
        %v1140 = vpop.permute.xlu0 %1139
        %1141 = vrot.lane.b32.xlu0 %v1077, 1
        %v1142 = vpop.permute.xlu0 %1141
        %1143 = vrot.lane.b32.xlu0 %v1078, 1
        %v1144 = vpop.permute.xlu0 %1143
        %1145 = vrot.lane.b32.xlu0 %v1079, 1
        %v1146 = vpop.permute.xlu0 %1145
        %v1148 = vlaneseq
        %v1149 = vshrl.u32 %v1148, 7
        %v1150 = vsub.s32 0, %v1149
        %v1151 = vrot.slane %v800, %v1150
        %v1153 = vmul.f32 %v1136, %v1151
        %v1154 = vmul.f32 %v1138, %v1151
        %v1155 = vmul.f32 %v1140, %v1151
        %v1156 = vmul.f32 %v1142, %v1151
        %v1157 = vmul.f32 %v1144, %v1151
        %v1158 = vmul.f32 %v1146, %v1151
        %v1159 = vsub.f32 %v1074, %v1153
        %v1160 = vsub.f32 %v1075, %v1154
        %v1161 = vsub.f32 %v1076, %v1155
        %v1162 = vsub.f32 %v1077, %v1156
        %v1163 = vsub.f32 %v1078, %v1157
        %v1164 = vsub.f32 %v1079, %v1158
        %v1165 = vadd.f32 %v1129, %v1159
        %v1166 = vadd.f32 %v1130, %v1160
        %v1167 = vadd.f32 %v1131, %v1161
        %v1168 = vadd.f32 %v1132, %v1162
        %v1169 = vadd.f32 %v1133, %v1163
        %v1170 = vadd.f32 %v1134, %v1164
        %v1171 = vsub.f32 %v1062, %v906
        %v1172 = vsub.f32 %v1063, %v907
        %v1173 = vsub.f32 %v1064, %v908
        %v1174 = vsub.f32 %v1065, %v909
        %v1175 = vsub.f32 %v1066, %v910
        %v1176 = vsub.f32 %v1067, %v911
        %v1177 = vmul.f32 %v1171, 0.0001
        %v1178 = vmul.f32 %v1172, 0.0001
        %v1179 = vmul.f32 %v1173, 0.0001
        %v1180 = vmul.f32 %v1174, 0.0001
        %v1181 = vmul.f32 %v1175, 0.0001
        %v1182 = vmul.f32 %v1176, 0.0001
        %v1183 = vmul.f32 %v1165, 0.0001
        %v1184 = vmul.f32 %v1166, 0.0001
        %v1185 = vmul.f32 %v1167, 0.0001
        %v1186 = vmul.f32 %v1168, 0.0001
        %v1187 = vmul.f32 %v1169, 0.0001
        %v1188 = vmul.f32 %v1170, 0.0001
        %v1189 = vadd.f32 %v1177, %v1183
        %v1190 = vadd.f32 %v1178, %v1184
        %v1191 = vadd.f32 %v1179, %v1185
        %v1192 = vadd.f32 %v1180, %v1186
        %v1193 = vadd.f32 %v1181, %v1187
        %v1194 = vadd.f32 %v1182, %v1188
        %1195 = vst [vmem:[%s645] sm:$0xff] %v1020
        %1196 = vst [vmem:[%s645 + $0x8] sm:$0xff] %v1021
        %1197 = vst [vmem:[%s645 + $0x10] sm:$0xff] %v1022
        %1198 = vst [vmem:[%s645 + $0x18] sm:$0xff] %v1023
        %1199 = vst [vmem:[%s645 + $0x20] sm:$0xff] %v1024
        %1200 = vst [vmem:[%s645 + $0x28] sm:$0xff] %v1025
        %1201 = vst [vmem:[%s652] sm:$0xff] %v1026
        %1202 = vst [vmem:[%s652 + $0x8] sm:$0xff] %v1027
        %1203 = vst [vmem:[%s652 + $0x10] sm:$0xff] %v1028
        %1204 = vst [vmem:[%s652 + $0x18] sm:$0xff] %v1029
        %1205 = vst [vmem:[%s652 + $0x20] sm:$0xff] %v1030
        %1206 = vst [vmem:[%s652 + $0x28] sm:$0xff] %v1031
        %1207 = vst [vmem:[%s659] sm:$0xff] %v1050
        %1208 = vst [vmem:[%s659 + $0x8] sm:$0xff] %v1051
        %1209 = vst [vmem:[%s659 + $0x10] sm:$0xff] %v1052
        %1210 = vst [vmem:[%s659 + $0x18] sm:$0xff] %v1053
        %1211 = vst [vmem:[%s659 + $0x20] sm:$0xff] %v1054
        %1212 = vst [vmem:[%s659 + $0x28] sm:$0xff] %v1055
        %1213 = vst [vmem:[%s666] sm:$0xff] %v1062
        %1214 = vst [vmem:[%s666 + $0x8] sm:$0xff] %v1063
        %1215 = vst [vmem:[%s666 + $0x10] sm:$0xff] %v1064
        %1216 = vst [vmem:[%s666 + $0x18] sm:$0xff] %v1065
        %1217 = vst [vmem:[%s666 + $0x20] sm:$0xff] %v1066
        %1218 = vst [vmem:[%s666 + $0x28] sm:$0xff] %v1067
        %1219 = vst [vmem:[%s731] sm:$0xff] %v1189
        %1220 = vst [vmem:[%s731 + $0x8] sm:$0xff] %v1190
        %1221 = vst [vmem:[%s731 + $0x10] sm:$0xff] %v1191
        %1222 = vst [vmem:[%s731 + $0x18] sm:$0xff] %v1192
        %1223 = vst [vmem:[%s731 + $0x20] sm:$0xff] %v1193
        %1224 = vst [vmem:[%s731 + $0x28] sm:$0xff] %v1194
        %v1225 = vsub.f32 %v1050, %v888
        %v1226 = vsub.f32 %v1051, %v889
        %v1227 = vsub.f32 %v1052, %v890
        %v1228 = vsub.f32 %v1053, %v891
        %v1229 = vsub.f32 %v1054, %v892
        %v1230 = vsub.f32 %v1055, %v893
        %1231 = vst [vmem:[%s737] sm:$0xff] %v1225
        %1232 = vst [vmem:[%s737 + $0x8] sm:$0xff] %v1226
        %1233 = vst [vmem:[%s737 + $0x10] sm:$0xff] %v1227
        %1234 = vst [vmem:[%s737 + $0x18] sm:$0xff] %v1228
        %1235 = vst [vmem:[%s737 + $0x20] sm:$0xff] %v1229
        %1236 = vst [vmem:[%s737 + $0x28] sm:$0xff] %v1230
        %s1237 = sand.u32 %s333, 1
        %s1238 = scalar_lea.sflag [#allocation3], %s1237
        %s1239 = sand.u32 %s333, 1
        %s1240 = smul.addr %s1239, 48
        %s1241 = scalar_lea.vmem [#allocation2], %s1240
        %s1242 = sand.u32 %s38, 1
        %s1243 = scalar_lea.sflag [#allocation5], %s1242
        %s1244 = sand.u32 %s359, 1
        %s1245 = smul.addr %s1244, 48
        %s1246 = scalar_lea.vmem [#allocation4], %s1245
        %s1247 = sand.u32 %s38, 1
        %s1248 = scalar_lea.sflag [#allocation5], %s1247
        %s1249 = sand.u32 %s385, 1
        %s1250 = smul.addr %s1249, 48
        %s1251 = scalar_lea.vmem [#allocation6], %s1250
        %s1252 = sand.u32 %s411, 1
        %s1253 = scalar_lea.sflag [#allocation8], %s1252
        %s1254 = sand.u32 %s411, 1
        %s1255 = smul.addr %s1254, 48
        %s1256 = scalar_lea.vmem [#allocation7], %s1255
        %s1257 = smul.u32 6, %s38
        %p1258 = scmp.lt.s32.totalorder %s1257, 11
        %s1259 = scalar_select %p1258, %s1257, 11
        %s1260 = smul.addr %s1259, 8
        %s1261 = scalar_lea.vmem %s16, %s1260
        %s1262 = smul.u32 6, %s38
        %p1263 = scmp.lt.s32.totalorder %s1262, 11
        %s1264 = scalar_select %p1263, %s1262, 11
        %s1265 = smul.addr %s1264, 8
        %s1266 = scalar_lea.vmem %s17, %s1265
        // Predicated region
        $region69: #{admm_net_forward.10} parent=67 // pred_check
          %p1267 = pneg %p343
        $region70: #{admm_net_forward.10} parent=67 // pred_check_branch
          %1269 = sbr.rel (%p1267) target = $region72
        $region71: #{admm_net_forward.10} parent=67 // pred_region
          %s1270 = smul.u32 6, %s38
          %s1272 = ssub.s32 768, 768
          %1273 = vsyncadd %s1238, %s1272
          %s1274 = smul.addr %s1270, 128
          %s1275 = scalar_lea.hbm %s12, %s1274
          %s1276 = sshll.u32 %s1241, 4
          %s1277 = int_to_ptr.vmem [resolvable:$true] %s1276
          %1282 = dma.vmem_to_hbm [thread:$0]  %s1277, 768, %s1275, %s1238, 128, 128, 8
        $region72: #{admm_net_forward.10} parent=67 // pred_fallthru
          _
        // Predicated region
        $region73: #{admm_net_forward.10} parent=67 // pred_check
          %p1283 = pneg %p369
        $region74: #{admm_net_forward.10} parent=67 // pred_check_branch
          %1285 = sbr.rel (%p1283) target = $region76
        $region75: #{admm_net_forward.10} parent=67 // pred_region
          %s1286 = smul.u32 6, %s38
          %s1288 = ssub.s32 768, 768
          %1289 = vsyncadd %s1243, %s1288
          %s1290 = smul.addr %s1286, 128
          %s1291 = scalar_lea.hbm %s13, %s1290
          %s1292 = sshll.u32 %s1246, 4
          %s1293 = int_to_ptr.vmem [resolvable:$true] %s1292
          %1298 = dma.vmem_to_hbm [thread:$0]  %s1293, 768, %s1291, %s1243, 128, 128, 8
        $region76: #{admm_net_forward.10} parent=67 // pred_fallthru
          _
        // Predicated region
        $region77: #{admm_net_forward.10} parent=67 // pred_check
          %p1299 = pneg %p395
        $region78: #{admm_net_forward.10} parent=67 // pred_check_branch
          %1301 = sbr.rel (%p1299) target = $region80
        $region79: #{admm_net_forward.10} parent=67 // pred_region
          %s1302 = smul.u32 6, %s38
          %s1304 = ssub.s32 768, 768
          %1305 = vsyncadd %s1248, %s1304
          %s1306 = smul.addr %s1302, 128
          %s1307 = scalar_lea.hbm %s14, %s1306
          %s1308 = sshll.u32 %s1251, 4
          %s1309 = int_to_ptr.vmem [resolvable:$true] %s1308
          %1314 = dma.vmem_to_hbm [thread:$0]  %s1309, 768, %s1307, %s1248, 128, 128, 8
        $region80: #{admm_net_forward.10} parent=67 // pred_fallthru
          _
        // Predicated region
        $region81: #{admm_net_forward.10} parent=67 // pred_check
          %p1315 = pneg %p421
        $region82: #{admm_net_forward.10} parent=67 // pred_check_branch
          %1317 = sbr.rel (%p1315) target = $region84
        $region83: #{admm_net_forward.10} parent=67 // pred_region
          %s1318 = smul.u32 6, %s38
          %s1320 = ssub.s32 768, 768
          %1321 = vsyncadd %s1253, %s1320
          %s1322 = smul.addr %s1318, 128
          %s1323 = scalar_lea.hbm %s15, %s1322
          %s1324 = sshll.u32 %s1256, 4
          %s1325 = int_to_ptr.vmem [resolvable:$true] %s1324
          %1330 = dma.vmem_to_hbm [thread:$0]  %s1325, 768, %s1323, %s1253, 128, 128, 8
        $region84: #{admm_net_forward.10} parent=67 // pred_fallthru
          _
        // Predicated region
        $region85: #{admm_net_forward.10} parent=67 // pred_check
          %p1331 = pneg %p447
        $region86: #{admm_net_forward.10} parent=67 // pred_check_branch
          %1333 = sbr.rel (%p1331) target = $region88
        $region87: #{admm_net_forward.10} parent=67 // pred_region
          %s1334 = smul.u32 6, %s38
        $region88: #{admm_net_forward.10} parent=67 // pred_fallthru
          _
        // Predicated region
        $region89: #{admm_net_forward.10} parent=67 // pred_check
          %p1335 = pneg %p473
        $region90: #{admm_net_forward.10} parent=67 // pred_check_branch
          %1337 = sbr.rel (%p1335) target = $region92
        $region91: #{admm_net_forward.10} parent=67 // pred_region
          %s1338 = smul.u32 6, %s38
        $region92: #{admm_net_forward.10} parent=67 // pred_fallthru
          _
      $region68: #{admm_net_forward.10} parent=5 // pred_fallthru
        _
      %p1339 = scmp.le.s32.totalorder 2, %s33
      // Predicated region
      $region93: #{admm_net_forward.10} parent=5 // pred_check
        %p1340 = pneg %p1339
      $region94: #{admm_net_forward.10} parent=5 // pred_check_branch
        %1342 = sbr.rel (%p1340) target = $region96
      $region95: #{admm_net_forward.10} parent=5 // pred_region
        %s1343 = ssub.s32 %s33, 2
        // Predicated region
        $region97: #{admm_net_forward.10} parent=95 // pred_check
          %p1344 = pneg %p349
        $region98: #{admm_net_forward.10} parent=95 // pred_check_branch
          %1346 = sbr.rel (%p1344) target = $region100
        $region99: #{admm_net_forward.10} parent=95 // pred_region
          %s1347 = sand.u32 %s334, 1
          %s1348 = scalar_lea.sflag [#allocation3], %s1347
          %s1349 = sand.u32 %s334, 1
          %s1350 = smul.addr %s1349, 48
          %s1351 = scalar_lea.vmem [#allocation2], %s1350
          %1352 = dma.done %s1348, 768
        $region100: #{admm_net_forward.10} parent=95 // pred_fallthru
          _
        // Predicated region
        $region101: #{admm_net_forward.10} parent=95 // pred_check
          %p1353 = pneg %p375
        $region102: #{admm_net_forward.10} parent=95 // pred_check_branch
          %1355 = sbr.rel (%p1353) target = $region104
        $region103: #{admm_net_forward.10} parent=95 // pred_region
          %s1356 = sand.u32 %s39, 1
          %s1357 = scalar_lea.sflag [#allocation5], %s1356
          %s1358 = sand.u32 %s360, 1
          %s1359 = smul.addr %s1358, 48
          %s1360 = scalar_lea.vmem [#allocation4], %s1359
          %1361 = dma.done %s1357, 768
        $region104: #{admm_net_forward.10} parent=95 // pred_fallthru
          _
        // Predicated region
        $region105: #{admm_net_forward.10} parent=95 // pred_check
          %p1362 = pneg %p401
        $region106: #{admm_net_forward.10} parent=95 // pred_check_branch
          %1364 = sbr.rel (%p1362) target = $region108
        $region107: #{admm_net_forward.10} parent=95 // pred_region
          %s1365 = sand.u32 %s39, 1
          %s1366 = scalar_lea.sflag [#allocation5], %s1365
          %s1367 = sand.u32 %s386, 1
          %s1368 = smul.addr %s1367, 48
          %s1369 = scalar_lea.vmem [#allocation6], %s1368
          %1370 = dma.done %s1366, 768
        $region108: #{admm_net_forward.10} parent=95 // pred_fallthru
          _
        // Predicated region
        $region109: #{admm_net_forward.10} parent=95 // pred_check
          %p1371 = pneg %p427
        $region110: #{admm_net_forward.10} parent=95 // pred_check_branch
          %1373 = sbr.rel (%p1371) target = $region112
        $region111: #{admm_net_forward.10} parent=95 // pred_region
          %s1374 = sand.u32 %s412, 1
          %s1375 = scalar_lea.sflag [#allocation8], %s1374
          %s1376 = sand.u32 %s412, 1
          %s1377 = smul.addr %s1376, 48
          %s1378 = scalar_lea.vmem [#allocation7], %s1377
          %1379 = dma.done %s1375, 768
        $region112: #{admm_net_forward.10} parent=95 // pred_fallthru
          _
        // Predicated region
        $region113: #{admm_net_forward.10} parent=95 // pred_check
          %p1380 = pneg %p453
        $region114: #{admm_net_forward.10} parent=95 // pred_check_branch
          %1382 = sbr.rel (%p1380) target = $region116
        $region115: #{admm_net_forward.10} parent=95 // pred_region
          %s1383 = smul.u32 6, %s39
          %p1384 = scmp.lt.s32.totalorder %s1383, 11
          %s1385 = scalar_select %p1384, %s1383, 11
          %s1386 = smul.addr %s1385, 8
          %s1387 = scalar_lea.vmem %s16, %s1386
        $region116: #{admm_net_forward.10} parent=95 // pred_fallthru
          _
        // Predicated region
        $region117: #{admm_net_forward.10} parent=95 // pred_check
          %p1388 = pneg %p479
        $region118: #{admm_net_forward.10} parent=95 // pred_check_branch
          %1390 = sbr.rel (%p1388) target = $region120
        $region119: #{admm_net_forward.10} parent=95 // pred_region
          %s1391 = smul.u32 6, %s39
          %p1392 = scmp.lt.s32.totalorder %s1391, 11
          %s1393 = scalar_select %p1392, %s1391, 11
          %s1394 = smul.addr %s1393, 8
          %s1395 = scalar_lea.vmem %s17, %s1394
        $region120: #{admm_net_forward.10} parent=95 // pred_fallthru
          _
      $region96: #{admm_net_forward.10} parent=5 // pred_fallthru
        _
    $region6: #{admm_net_forward.10} parent=1 // loop_footer
      %s37 = sadd.s32 1, %s33
    $region7: #{admm_net_forward.10} parent=1 // loop_footer_branch
      %32 = sbr.rel target = $region3
    $region8: #{admm_net_forward.10} parent=1 // loop_exit
      _
    %1396 = vsyncpa [#allocation3], 1
    %s1397 = scalar_lea.sflag [#allocation3], 1
    %1398 = vsyncpa %s1397, 1
    %1399 = vsyncpa [#allocation5], 1
    %s1400 = scalar_lea.sflag [#allocation5], 1
    %1401 = vsyncpa %s1400, 1
    %1402 = vsyncpa [#allocation8], 1
    %s1403 = scalar_lea.sflag [#allocation8], 1
    %1404 = vsyncpa %s1403, 1

// kernel: admm_net_forward.11
$region0: #{admm_net_forward.11}
  #allocation0 [shape = 'u32[]', space=smem, size = 0x4, offset = 0x4, fixed_abs, tag = 'smem constant byte address 0x4 - core index']
  #allocation1 [shape = 'u32[144,128]{1,0:T(1,128)}', space=vmem, size = 0x12000, scoped, tag = 'internal scratch']
  %s0 = inlined_call_operand.vmem [shape: f32[2,12,128], index: 0, kind: input, shape index: {}]
  %s1 = inlined_call_operand.vmem [shape: f32[2,12,128], index: 1, kind: output, shape index: {}]
  %s2 = sld [smem:[#allocation0]]
  $region37: #{admm_net_forward.11} parent=0
    _
  %s4 = ssub.s32 1, %s2
  %s5 = scalar_select 0, %s4, %s2
  loop: start=0, step=1, limit=4
  $region2: #{admm_net_forward.11} parent=0 // loop_pre_header
    _
  $region3: #{admm_net_forward.11} parent=0 // loop_header
    %s7 = sphi 0, %s11
    %p8 = scmp.ge.s32.totalorder %s7, 4
    %s17 = sphi 0, %s19
    %s20 = sphi 0, %s17
    %s21 = sphi 0, %s20
    %s37 = sphi 0, %s21
    %s43 = sphi 0, %s45
    %s46 = sphi 0, %s43
    %s47 = sphi 0, %s46
    %s63 = sphi 0, %s47
  $region4: #{admm_net_forward.11} parent=0 // loop_header_branch
    %10 = sbr.rel (%p8) target = $region8
  $region5: #{admm_net_forward.11} parent=0 // loop_body
    %s12 = ssub.s32 %s7, 1
    %s13 = ssub.s32 %s7, 2
    %s14 = sadd.s32 %s7, 1
    %s15 = ssub.s32 %s7, %s14
    %p16 = scmp.eq.s32.totalorder %s15, 0
    %s18 = sadd.s32 %s17, 1
    %s19 = scalar_select %p16, %s17, %s18
    %p22 = pneg %p16
    %p23 = scmp.eq.s32.totalorder %s7, 1
    %p24 = por %p22, %p23
    %p25 = scmp.ne.s32.totalorder %s17, %s20
    %p26 = scmp.eq.s32.totalorder %s7, 0
    %p27 = por %p25, %p26
    %p28 = scmp.ne.s32.totalorder %s17, %s20
    %p29 = scmp.eq.s32.totalorder %s12, 1
    %p30 = por %p28, %p29
    %p31 = scmp.ne.s32.totalorder %s20, %s21
    %p32 = scmp.eq.s32.totalorder %s12, 0
    %p33 = por %p31, %p32
    %p34 = scmp.ne.s32.totalorder %s20, %s21
    %p35 = scmp.eq.s32.totalorder %s13, 1
    %p36 = por %p34, %p35
    %p38 = scmp.ne.s32.totalorder %s21, %s37
    %p39 = scmp.eq.s32.totalorder %s13, 0
    %p40 = por %p38, %p39
    %s41 = ssub.s32 %s7, %s14
    %p42 = scmp.eq.s32.totalorder %s41, 0
    %s44 = sadd.s32 %s43, 1
    %s45 = scalar_select %p42, %s43, %s44
    %p48 = pneg %p42
    %p49 = scmp.eq.s32.totalorder %s7, 1
    %p50 = por %p48, %p49
    %p51 = scmp.ne.s32.totalorder %s43, %s46
    %p52 = scmp.eq.s32.totalorder %s7, 0
    %p53 = por %p51, %p52
    %p54 = scmp.ne.s32.totalorder %s43, %s46
    %p55 = scmp.eq.s32.totalorder %s12, 1
    %p56 = por %p54, %p55
    %p57 = scmp.ne.s32.totalorder %s46, %s47
    %p58 = scmp.eq.s32.totalorder %s12, 0
    %p59 = por %p57, %p58
    %p60 = scmp.ne.s32.totalorder %s46, %s47
    %p61 = scmp.eq.s32.totalorder %s13, 1
    %p62 = por %p60, %p61
    %p64 = scmp.ne.s32.totalorder %s47, %s63
    %p65 = scmp.eq.s32.totalorder %s13, 0
    %p66 = por %p64, %p65
    %p67 = scmp.le.s32.totalorder 1, %s7
    %p68 = scmp.lt.s32.totalorder %s7, 3
    %p69 = pnand %p67, %p68
    %p70 = pneg %p69
    // Predicated region
    $region9: #{admm_net_forward.11} parent=5 // pred_check
      _
    $region10: #{admm_net_forward.11} parent=5 // pred_check_branch
      %72 = sbr.rel (%p69) target = $region12
    $region11: #{admm_net_forward.11} parent=5 // pred_region
      %s73 = ssub.s32 %s7, 1
    $region12: #{admm_net_forward.11} parent=5 // pred_fallthru
      _
    %p74 = scmp.lt.s32.totalorder %s7, 2
    // Predicated region
    $region13: #{admm_net_forward.11} parent=5 // pred_check
      %p75 = pneg %p74
    $region14: #{admm_net_forward.11} parent=5 // pred_check_branch
      %77 = sbr.rel (%p75) target = $region16
    $region15: #{admm_net_forward.11} parent=5 // pred_region
      // Predicated region
      $region17: #{admm_net_forward.11} parent=15 // pred_check
        %p78 = pneg %p27
      $region18: #{admm_net_forward.11} parent=15 // pred_check_branch
        %80 = sbr.rel (%p78) target = $region20
      $region19: #{admm_net_forward.11} parent=15 // pred_region
        %p81 = scmp.lt.s32.totalorder %s7, 1
        %s82 = scalar_select %p81, %s7, 1
        %s83 = smul.addr %s82, 2
        %s84 = smul.addr %s83, 8
        %s85 = scalar_lea.vmem %s0, %s84
      $region20: #{admm_net_forward.11} parent=15 // pred_fallthru
        _
    $region16: #{admm_net_forward.11} parent=5 // pred_fallthru
      _
    %p86 = scmp.le.s32.totalorder 1, %s7
    %p87 = scmp.lt.s32.totalorder %s7, 3
    %p88 = pnand %p86, %p87
    %p89 = pneg %p88
    // Predicated region
    $region21: #{admm_net_forward.11} parent=5 // pred_check
      _
    $region22: #{admm_net_forward.11} parent=5 // pred_check_branch
      %91 = sbr.rel (%p88) target = $region24
    $region23: #{admm_net_forward.11} parent=5 // pred_region
      %s92 = ssub.s32 %s7, 1
      %p93 = scmp.lt.s32.totalorder %s12, 1
      %s94 = scalar_select %p93, %s12, 1
      %s95 = smul.addr %s94, 2
      %s96 = smul.addr %s95, 8
      %s97 = scalar_lea.vmem %s0, %s96
      %p98 = pneg %p33
      %p99 = pneg %p30
      %p100 = pneg %p59
      %p101 = pneg %p56
      %p102 = scmp.lt.s32.totalorder %s12, 1
      %s103 = scalar_select %p102, %s12, 1
      %s104 = smul.addr %s103, 2
      %s105 = smul.addr %s104, 8
      %s106 = scalar_lea.vmem %s1, %s105
      %p107 = scmp.lt.s32.totalorder %s12, 1
      %s108 = scalar_select %p107, %s12, 1
      %s109 = smul.addr %s108, 2
      %s110 = smul.addr %s109, 8
      %s111 = scalar_lea.vmem %s0, %s110
      %p112 = scmp.lt.s32.totalorder %s12, 1
      %s113 = scalar_select %p112, %s12, 1
      %s114 = smul.addr %s113, 2
      %s115 = smul.addr %s114, 8
      %s116 = scalar_lea.vmem %s1, %s115
      %v117 = vld [vmem:[%s111] sm:$0xff]
      %v118 = vld [vmem:[%s111 + $0x8] sm:$0xf]
      %vm119 = vcmask 1043456
      %v120 = vsel %vm119, %v118, -inf
      %v121 = vmax.f32 %v117, %v120
      %122 = vmax.xlane.f32.xlu0 %v121
      %v123 = vpop.xlane.xlu0 %122
      %v124 = vrot.slane %v123, 4
      %v125 = vmax.f32 %v123, %v124
      %v126 = vrot.slane %v125, 2
      %v127 = vmax.f32 %v125, %v126
      %v128 = vrot.slane %v127, 1
      %v129 = vmax.f32 %v127, %v128
      %s130 = vtos %v129
      %s131 = smax.f32 %s130, 1e-30
      %v132 = vstv %s131
      %v133 = vrcp.pop %v132
      %s134 = vtos %v133
      %v135 = vstv %s134
      %v136 = vmul.f32 %v117, %v135
      %v137 = vmul.f32 %v118, %v135
      %138 = vst [vmem:[%s116] sm:$0xff] %v136
      %139 = vst [vmem:[%s116 + $0x8] sm:$0xf] %v137
      %p140 = scmp.lt.s32.totalorder %s12, 1
      %s141 = scalar_select %p140, %s12, 1
      %s142 = smul.addr %s141, 2
      %s143 = smul.addr %s142, 8
      %s144 = scalar_lea.vmem %s1, %s143
      // Predicated region
      $region25: #{admm_net_forward.11} parent=23 // pred_check
        %p145 = pneg %p56
      $region26: #{admm_net_forward.11} parent=23 // pred_check_branch
        %147 = sbr.rel (%p145) target = $region28
      $region27: #{admm_net_forward.11} parent=23 // pred_region
        _
      $region28: #{admm_net_forward.11} parent=23 // pred_fallthru
        _
    $region24: #{admm_net_forward.11} parent=5 // pred_fallthru
      _
    %p148 = scmp.le.s32.totalorder 2, %s7
    // Predicated region
    $region29: #{admm_net_forward.11} parent=5 // pred_check
      %p149 = pneg %p148
    $region30: #{admm_net_forward.11} parent=5 // pred_check_branch
      %151 = sbr.rel (%p149) target = $region32
    $region31: #{admm_net_forward.11} parent=5 // pred_region
      %s152 = ssub.s32 %s7, 2
      // Predicated region
      $region33: #{admm_net_forward.11} parent=31 // pred_check
        %p153 = pneg %p62
      $region34: #{admm_net_forward.11} parent=31 // pred_check_branch
        %155 = sbr.rel (%p153) target = $region36
      $region35: #{admm_net_forward.11} parent=31 // pred_region
        %p156 = scmp.lt.s32.totalorder %s13, 1
        %s157 = scalar_select %p156, %s13, 1
        %s158 = smul.addr %s157, 2
        %s159 = smul.addr %s158, 8
        %s160 = scalar_lea.vmem %s1, %s159
      $region36: #{admm_net_forward.11} parent=31 // pred_fallthru
        _
    $region32: #{admm_net_forward.11} parent=5 // pred_fallthru
      _
  $region6: #{admm_net_forward.11} parent=0 // loop_footer
    %s11 = sadd.s32 1, %s7
  $region7: #{admm_net_forward.11} parent=0 // loop_footer_branch
    %6 = sbr.rel target = $region3
  $region8: #{admm_net_forward.11} parent=0 // loop_exit
    _

</llo_original>
